<compile_context>
chip_gen: v5e
topology: v5e:2x2
jax: 0.10.0
libtpu: 0.0.40
codegen_flags: <defaults>
</compile_context>

<pallas_src>
import functools
import math

import jax
import jax.numpy as jnp
from jax import lax
from jax.experimental import pallas as pl
from jax.experimental.pallas import tpu as pltpu


def _round_up(x, m):
    return ((x + m - 1) // m) * m


_VMEM_LIMIT = 32 * 1024 * 1024  # safe on v5e/v6e (128 MiB) and v7x (64 MiB)


# ----------------------------------------------------------------------------
# Pallas kernels
# ----------------------------------------------------------------------------

def _center_branch_kernel(xcat_ref, wcat_ref, bcat_ref, wc0_ref, bc0_ref,
                          wc1_ref, bc1_ref, xcen_ref, avg_ref,
                          *, norm_aff, inv_hw):
    """Per batch b, pixel-major (HW, 3C) input:
         f_cat   = relu(x_cat @ Wcat + bcat)                 (HW, Cout)
         f_cen   = (relu(x_cat @ Wc0 + bc0)) @ Wc1 + bc1     (HW, Cc)
         p       = softmax(f_cen, axis=spatial)
         x_cenT  = norm_aff * p^T @ f_cat                    (Cc, Cout) lane-dense
         avg     = mean_spatial(f_cat)                       (1, Cout)
    """
    xc = xcat_ref[0]                                              # (HW, 3C) bf16

    fcat = jnp.dot(xc, wcat_ref[...], preferred_element_type=jnp.float32)
    fcat = jnp.maximum(fcat + bcat_ref[...], 0.0)                 # (HW, Cout) f32

    t = jnp.dot(xc, wc0_ref[...], preferred_element_type=jnp.float32)
    t = jnp.maximum(t + bc0_ref[...], 0.0)                        # (HW, Cc) f32
    fcen = jnp.dot(t.astype(jnp.bfloat16), wc1_ref[...],
                   preferred_element_type=jnp.float32) + bc1_ref[...]

    # Softmax over the spatial axis (dim=2 in the (N, Cc, HW) torch view).
    m = jnp.max(fcen, axis=0, keepdims=True)
    e = jnp.exp(fcen - m)
    p = e / jnp.sum(e, axis=0, keepdims=True)                     # (HW, Cc)

    # (Cc, Cout) = p^T @ f_cat : contract the spatial axis (0, 0).
    xct = lax.dot_general(p.astype(jnp.bfloat16), fcat.astype(jnp.bfloat16),
                          dimension_numbers=(((0,), (0,)), ((), ())),
                          preferred_element_type=jnp.float32)
    xcen_ref[0] = (norm_aff * xct).astype(jnp.bfloat16)
    avg_ref[0] = jnp.sum(fcat, axis=0, keepdims=True) * inv_hw


def _affinity_up_kernel(gcat_ref, avg_ref, xcen_ref,
                        w0_ref, b0_ref, wa_ref, ba_ref, wb_ref, bb_ref,
                        wu1_ref, wu2_ref, bu_ref, out_ref):
    """Per (batch b, pixel tile j), pixel-major:
         gconv = relu(guide_cat @ W0 + b0)                    conv_affinity0
         gva   = gconv + f_cat_avg[b]                         + value_avg
         faff  = relu(relu(gva @ Wa + ba) @ Wb + bb)          conv_affinity1
         x_up  = faff @ x_center^T      (norm_aff folded)     bmm
         out   = relu(x_up @ Wu1 + gconv @ Wu2 + bu)          conv_up (concat folded)
    """
    g = gcat_ref[0]                                               # (T, 3C) bf16

    gconv = jnp.dot(g, w0_ref[...], preferred_element_type=jnp.float32)
    gconv = jnp.maximum(gconv + b0_ref[...], 0.0)                 # (T, Cout) f32

    gva = (gconv + avg_ref[0]).astype(jnp.bfloat16)
    t = jnp.dot(gva, wa_ref[...], preferred_element_type=jnp.float32)
    t = jnp.maximum(t + ba_ref[...], 0.0)                         # (T, Cc)
    faff = jnp.dot(t.astype(jnp.bfloat16), wb_ref[...],
                   preferred_element_type=jnp.float32)
    faff = jnp.maximum(faff + bb_ref[...], 0.0)                   # (T, Cc)

    xup = jnp.dot(faff.astype(jnp.bfloat16), xcen_ref[0],
                  preferred_element_type=jnp.float32)             # (T, Cout)

    up = (jnp.dot(xup.astype(jnp.bfloat16), wu1_ref[...],
                  preferred_element_type=jnp.float32)
          + jnp.dot(gconv.astype(jnp.bfloat16), wu2_ref[...],
                    preferred_element_type=jnp.float32))
    out_ref[0] = jnp.maximum(up + bu_ref[...], 0.0)               # (T, Cout) f32


# ----------------------------------------------------------------------------
# Pallas wrappers
# ----------------------------------------------------------------------------

def center_branch(x_cat_pm, p, norm_aff):
    """x_cat_pm: (N, HW, 3C) bf16 -> x_center^T (N, Cc, Cout) bf16,
    f_cat_avg (N, 1, Cout) f32."""
    n, hw, cin3 = x_cat_pm.shape
    cout = p["cat_w"].shape[1]
    cc = p["cen1_w"].shape[1]
    kern = functools.partial(_center_branch_kernel,
                             norm_aff=norm_aff, inv_hw=1.0 / float(hw))
    return pl.pallas_call(
        kern,
        out_shape=(jax.ShapeDtypeStruct((n, cc, cout), jnp.bfloat16),
                   jax.ShapeDtypeStruct((n, 1, cout), jnp.float32)),
        grid=(n,),
        in_specs=[
            pl.BlockSpec((1, hw, cin3), lambda b: (b, 0, 0)),
            pl.BlockSpec((cin3, cout), lambda b: (0, 0)),
            pl.BlockSpec((1, cout), lambda b: (0, 0)),
            pl.BlockSpec((cin3, cc), lambda b: (0, 0)),
            pl.BlockSpec((1, cc), lambda b: (0, 0)),
            pl.BlockSpec((cc, cc), lambda b: (0, 0)),
            pl.BlockSpec((1, cc), lambda b: (0, 0)),
        ],
        out_specs=(pl.BlockSpec((1, cc, cout), lambda b: (b, 0, 0)),
                   pl.BlockSpec((1, 1, cout), lambda b: (b, 0, 0))),
        compiler_params=pltpu.CompilerParams(
            dimension_semantics=("parallel",),
            vmem_limit_bytes=_VMEM_LIMIT),
    )(x_cat_pm, p["cat_w"], p["cat_b"], p["cen0_w"], p["cen0_b"],
      p["cen1_w"], p["cen1_b"])


def affinity_up(guide_cat_pm, f_cat_avg, x_center_t, p, max_tile=512):
    """guide_cat_pm: (N, HW2, 3C) bf16; f_cat_avg: (N, 1, Cout) f32;
    x_center_t: (N, Cc, Cout) bf16 -> x_up_conv (N, HW2, Cout) f32."""
    n, hw2, cin3 = guide_cat_pm.shape
    cout = p["aff0_w"].shape[1]
    cc = p["aff1a_w"].shape[1]
    tile = max_tile if hw2 > max_tile else max(8, _round_up(hw2, 8))
    hw2p = _round_up(hw2, tile)
    gc = guide_cat_pm
    if hw2p != hw2:
        gc = jnp.pad(gc, ((0, 0), (0, hw2p - hw2), (0, 0)))
    out = pl.pallas_call(
        _affinity_up_kernel,
        out_shape=jax.ShapeDtypeStruct((n, hw2p, cout), jnp.float32),
        grid=(n, hw2p // tile),
        in_specs=[
            pl.BlockSpec((1, tile, cin3), lambda b, j: (b, j, 0)),
            pl.BlockSpec((1, 1, cout), lambda b, j: (b, 0, 0)),
            pl.BlockSpec((1, cc, cout), lambda b, j: (b, 0, 0)),
            pl.BlockSpec((cin3, cout), lambda b, j: (0, 0)),
            pl.BlockSpec((1, cout), lambda b, j: (0, 0)),
            pl.BlockSpec((cout, cc), lambda b, j: (0, 0)),
            pl.BlockSpec((1, cc), lambda b, j: (0, 0)),
            pl.BlockSpec((cc, cc), lambda b, j: (0, 0)),
            pl.BlockSpec((1, cc), lambda b, j: (0, 0)),
            pl.BlockSpec((cout, cout), lambda b, j: (0, 0)),
            pl.BlockSpec((cout, cout), lambda b, j: (0, 0)),
            pl.BlockSpec((1, cout), lambda b, j: (0, 0)),
        ],
        out_specs=pl.BlockSpec((1, tile, cout), lambda b, j: (b, j, 0)),
        compiler_params=pltpu.CompilerParams(
            dimension_semantics=("parallel", "parallel"),
            vmem_limit_bytes=_VMEM_LIMIT),
    )(gc, f_cat_avg, x_center_t,
      p["aff0_w"], p["aff0_b"], p["aff1a_w"], p["aff1a_b"],
      p["aff1b_w"], p["aff1b_b"], p["up_w1"], p["up_w2"], p["up_b"])
    return out[:, :hw2]


# ----------------------------------------------------------------------------
# JAX glue: bilinear resize (align_corners=True), NHWC layout
# ----------------------------------------------------------------------------

def bilinear_resize_ac_nhwc(x, oh, ow):
    n, h, w, c = x.shape
    if h == oh and w == ow:
        return x
    ys = jnp.linspace(0.0, h - 1.0, oh)
    xs = jnp.linspace(0.0, w - 1.0, ow)
    y0 = jnp.clip(jnp.floor(ys).astype(jnp.int32), 0, max(h - 2, 0))
    x0 = jnp.clip(jnp.floor(xs).astype(jnp.int32), 0, max(w - 2, 0))
    y1 = jnp.minimum(y0 + 1, h - 1)
    x1 = jnp.minimum(x0 + 1, w - 1)
    wy = (ys - y0.astype(jnp.float32)).reshape(1, oh, 1, 1)
    wx = (xs - x0.astype(jnp.float32)).reshape(1, 1, ow, 1)
    r0 = x[:, y0, :, :]
    r1 = x[:, y1, :, :]
    a = r0[:, :, x0, :]
    b = r0[:, :, x1, :]
    cc_ = r1[:, :, x0, :]
    d = r1[:, :, x1, :]
    top = a * (1.0 - wx) + b * wx
    bot = cc_ * (1.0 - wx) + d * wx
    return top * (1.0 - wy) + bot * wy


# ----------------------------------------------------------------------------
# HGDModule forward
# ----------------------------------------------------------------------------

def hgd_forward(params, x, guide1, guide2):
    n, _, h, w = x.shape
    h2, w2 = guide2.shape[2:]

    # One-time NCHW -> NHWC transposes (module entry).
    x_nhwc = jnp.transpose(x, (0, 2, 3, 1))
    g1_nhwc = jnp.transpose(guide1, (0, 2, 3, 1))
    g2_nhwc = jnp.transpose(guide2, (0, 2, 3, 1))

    x_up0 = bilinear_resize_ac_nhwc(x_nhwc, h2, w2)
    x_up1 = bilinear_resize_ac_nhwc(g1_nhwc, h2, w2)
    guide1_down = bilinear_resize_ac_nhwc(g1_nhwc, h, w)
    guide2_down = bilinear_resize_ac_nhwc(g2_nhwc, h, w)

    x_cat_pm = jnp.concatenate([guide2_down, guide1_down, x_nhwc], axis=-1)
    x_cat_pm = x_cat_pm.reshape(n, h * w, -1).astype(jnp.bfloat16)
    guide_cat_pm = jnp.concatenate([g2_nhwc, x_up1, x_up0], axis=-1)
    guide_cat_pm = guide_cat_pm.reshape(n, h2 * w2, -1).astype(jnp.bfloat16)

    cc = params["cen1_w"].shape[1]
    norm_aff = float(cc) ** (-0.5)

    # Fused kernel 1: conv_cat + conv_center + softmax + x_center + avgpool.
    x_center_t, f_cat_avg = center_branch(x_cat_pm, params, norm_aff)

    # Fused kernel 2: conv_affinity0/1 + value_avg + x_up bmm + conv_up.
    up_pm = affinity_up(guide_cat_pm, f_cat_avg, x_center_t, params)

    oc = params["cat_w"].shape[1]
    x_up_conv = jnp.transpose(up_pm.reshape(n, h2, w2, oc), (0, 3, 1, 2))
    return (x_up_conv,)


# Pure-JAX f32 reference (same folded weights) for a sanity check.
def hgd_forward_ref(params, x, guide1, guide2):
    n, _, h, w = x.shape
    h2, w2 = guide2.shape[2:]
    to_nhwc = lambda a: jnp.transpose(a, (0, 2, 3, 1))
    xn, g1n, g2n = to_nhwc(x), to_nhwc(guide1), to_nhwc(guide2)
    x_up0 = bilinear_resize_ac_nhwc(xn, h2, w2)
    x_up1 = bilinear_resize_ac_nhwc(g1n, h2, w2)
    g1d = bilinear_resize_ac_nhwc(g1n, h, w)
    g2d = bilinear_resize_ac_nhwc(g2n, h, w)
    f32 = lambda k: params[k].astype(jnp.float32)

    xcat = jnp.concatenate([g2d, g1d, xn], -1).reshape(n, h * w, -1)
    fcat = jax.nn.relu(xcat @ f32("cat_w") + params["cat_b"])
    t = jax.nn.relu(xcat @ f32("cen0_w") + params["cen0_b"])
    fcen = t @ f32("cen1_w") + params["cen1_b"]
    p_sm = jax.nn.softmax(fcen, axis=1)                      # over spatial
    xcen = jnp.einsum("nsc,nso->nco", p_sm, fcat)            # (n, Cc, Cout)
    norm_aff = params["cen1_w"].shape[1] ** (-0.5)
    favg = jnp.mean(fcat, axis=1, keepdims=True)

    gcat = jnp.concatenate([g2n, x_up1, x_up0], -1).reshape(n, h2 * w2, -1)
    gconv = jax.nn.relu(gcat @ f32("aff0_w") + params["aff0_b"])
    gva = gconv + favg
    t2 = jax.nn.relu(gva @ f32("aff1a_w") + params["aff1a_b"])
    faff = jax.nn.relu(t2 @ f32("aff1b_w") + params["aff1b_b"])
    xup = norm_aff * jnp.einsum("nsc,nco->nso", faff, xcen)
    up = jax.nn.relu(xup @ f32("up_w1") + gconv @ f32("up_w2") + params["up_b"])
    return jnp.transpose(up.reshape(n, h2, w2, -1), (0, 3, 1, 2))


# ----------------------------------------------------------------------------
# Deterministic, kernel-ready parameters (BN folded, weights bf16, (Cin,Cout))
# ----------------------------------------------------------------------------

def init_params(key, in_channels, center_channels, out_channels):
    keys = iter(jax.random.split(key, 32))

    def conv_bn(cin, cout):
        wt = jax.random.normal(next(keys), (cout, cin), jnp.float32) / math.sqrt(cin)
        gamma = 1.0 + 0.1 * jax.random.normal(next(keys), (cout,), jnp.float32)
        beta = 0.05 * jax.random.normal(next(keys), (cout,), jnp.float32)
        mean = jnp.zeros((cout,), jnp.float32)
        var = jnp.ones((cout,), jnp.float32)
        scale = gamma / jnp.sqrt(var + 1e-5)
        shift = beta - mean * scale
        w_folded = (wt * scale[:, None]).T.astype(jnp.bfloat16)   # (Cin, Cout)
        return w_folded, shift.reshape(1, cout).astype(jnp.float32)

    p = {}
    p["cat_w"], p["cat_b"] = conv_bn(in_channels * 3, out_channels)
    p["cen0_w"], p["cen0_b"] = conv_bn(in_channels * 3, center_channels)
    p["cen1_w"], p["cen1_b"] = conv_bn(center_channels, center_channels)
    p["aff0_w"], p["aff0_b"] = conv_bn(in_channels * 3, out_channels)
    p["aff1a_w"], p["aff1a_b"] = conv_bn(out_channels, center_channels)
    p["aff1b_w"], p["aff1b_b"] = conv_bn(center_channels, center_channels)
    up_w, p["up_b"] = conv_bn(2 * out_channels, out_channels)     # (2*oc, oc)
    p["up_w1"] = up_w[:out_channels]                              # x_up half
    p["up_w2"] = up_w[out_channels:]                              # guide_cat_conv half
    return p


# ----------------------------------------------------------------------------
# Main
# ----------------------------------------------------------------------------

if __name__ == "__main__":
    in_channels = 64
    center_channels = 32
    out_channels = 128
    n = 2

    key = jax.random.PRNGKey(0)
    kx, k1, k2 = jax.random.split(key, 3)
    x = jax.random.normal(kx, (n, in_channels, 8, 8), jnp.float32)
    guide1 = jax.random.normal(k1, (n, in_channels, 16, 16), jnp.float32)
    guide2 = jax.random.normal(k2, (n, in_channels, 32, 32), jnp.float32)

    params = init_params(jax.random.PRNGKey(42), in_channels, center_channels,
                         out_channels)

    fwd = jax.jit(hgd_forward)
    (x_up_conv,) = fwd(params, x, guide1, guide2)
    jax.block_until_ready(x_up_conv)

    assert x_up_conv.shape == (n, out_channels, 32, 32), x_up_conv.shape
    assert bool(jnp.all(jnp.isfinite(x_up_conv)))

    # Correctness check against a pure-JAX f32 reference (bf16 MXU tolerance).
    ref = hgd_forward_ref(params, x, guide1, guide2)
    rel = float(jnp.linalg.norm(x_up_conv - ref) / (jnp.linalg.norm(ref) + 1e-6))
    assert rel < 0.1, rel

    print("KERNEL_OK")
</pallas_src>

<mosaic_0001>
module attributes {stable_mosaic.version = 11 : i64} {
  func.func @_center_branch_kernel(%arg0: i32, %arg1: memref<1x64x192xbf16, #tpu.memory_space<vmem>>, %arg2: memref<192x128xbf16, #tpu.memory_space<vmem>>, %arg3: memref<1x128xf32, #tpu.memory_space<vmem>>, %arg4: memref<192x32xbf16, #tpu.memory_space<vmem>>, %arg5: memref<1x32xf32, #tpu.memory_space<vmem>>, %arg6: memref<32x32xbf16, #tpu.memory_space<vmem>>, %arg7: memref<1x32xf32, #tpu.memory_space<vmem>>, %arg8: memref<1x32x128xbf16, #tpu.memory_space<vmem>>, %arg9: memref<1x1x128xf32, #tpu.memory_space<vmem>>) attributes {dimension_semantics = [#tpu.dimension_semantics<parallel>], iteration_bounds = array<i64: 2>, scalar_prefetch = 0 : i64, scratch_operands = 0 : i64, tpu.core_type = #tpu.core_type<tc>, window_params = [{transform_indices = @transform_0, window_bounds = array<i64: 1, 64, 192>}, {pipeline_mode = #tpu.pipeline_mode<synchronous>, transform_indices = @transform_1, window_bounds = array<i64: 192, 128>}, {pipeline_mode = #tpu.pipeline_mode<synchronous>, transform_indices = @transform_2, window_bounds = array<i64: 1, 128>}, {pipeline_mode = #tpu.pipeline_mode<synchronous>, transform_indices = @transform_3, window_bounds = array<i64: 192, 32>}, {pipeline_mode = #tpu.pipeline_mode<synchronous>, transform_indices = @transform_4, window_bounds = array<i64: 1, 32>}, {pipeline_mode = #tpu.pipeline_mode<synchronous>, transform_indices = @transform_5, window_bounds = array<i64: 32, 32>}, {pipeline_mode = #tpu.pipeline_mode<synchronous>, transform_indices = @transform_6, window_bounds = array<i64: 1, 32>}, {transform_indices = @transform_7, window_bounds = array<i64: 1, 32, 128>}, {transform_indices = @transform_8, window_bounds = array<i64: 1, 1, 128>}]} {
    %c0 = arith.constant 0 : index
    %c0_0 = arith.constant 0 : index
    %c0_1 = arith.constant 0 : index
    %0 = vector.load %arg1[%c0, %c0_0, %c0_1] : memref<1x64x192xbf16, #tpu.memory_space<vmem>>, vector<1x64x192xbf16>
    %1 = vector.shape_cast %0 : vector<1x64x192xbf16> to vector<64x192xbf16>
    %c0_2 = arith.constant 0 : index
    %c0_3 = arith.constant 0 : index
    %2 = vector.load %arg2[%c0_2, %c0_3] : memref<192x128xbf16, #tpu.memory_space<vmem>>, vector<192x128xbf16>
    %cst = arith.constant dense<0.000000e+00> : vector<64x128xf32>
    %3 = tpu.matmul %1, %2, %cst {dimension_numbers = #tpu.dot_dimension_numbers<[1], [0], [0], [1], [0, 0, 1, 1], [], []>} : vector<64x192xbf16>, vector<192x128xbf16>, vector<64x128xf32> -> vector<64x128xf32>
    %c0_4 = arith.constant 0 : index
    %c0_5 = arith.constant 0 : index
    %4 = vector.load %arg3[%c0_4, %c0_5] : memref<1x128xf32, #tpu.memory_space<vmem>>, vector<1x128xf32>
    %5 = vector.broadcast %4 : vector<1x128xf32> to vector<64x128xf32>
    %6 = arith.addf %3, %5 : vector<64x128xf32>
    %cst_6 = arith.constant 0.000000e+00 : f32
    %7 = vector.broadcast %cst_6 : f32 to vector<64x128xf32>
    %8 = arith.maximumf %6, %7 : vector<64x128xf32>
    %c0_7 = arith.constant 0 : index
    %c0_8 = arith.constant 0 : index
    %9 = vector.load %arg4[%c0_7, %c0_8] : memref<192x32xbf16, #tpu.memory_space<vmem>>, vector<192x32xbf16>
    %cst_9 = arith.constant dense<0.000000e+00> : vector<64x32xf32>
    %10 = tpu.matmul %1, %9, %cst_9 {dimension_numbers = #tpu.dot_dimension_numbers<[1], [0], [0], [1], [0, 0, 1, 1], [], []>} : vector<64x192xbf16>, vector<192x32xbf16>, vector<64x32xf32> -> vector<64x32xf32>
    %c0_10 = arith.constant 0 : index
    %c0_11 = arith.constant 0 : index
    %11 = vector.load %arg5[%c0_10, %c0_11] : memref<1x32xf32, #tpu.memory_space<vmem>>, vector<1x32xf32>
    %12 = vector.broadcast %11 : vector<1x32xf32> to vector<64x32xf32>
    %13 = arith.addf %10, %12 : vector<64x32xf32>
    %cst_12 = arith.constant 0.000000e+00 : f32
    %14 = vector.broadcast %cst_12 : f32 to vector<64x32xf32>
    %15 = arith.maximumf %13, %14 : vector<64x32xf32>
    %16 = arith.truncf %15 : vector<64x32xf32> to vector<64x32xbf16>
    %c0_13 = arith.constant 0 : index
    %c0_14 = arith.constant 0 : index
    %17 = vector.load %arg6[%c0_13, %c0_14] : memref<32x32xbf16, #tpu.memory_space<vmem>>, vector<32x32xbf16>
    %cst_15 = arith.constant dense<0.000000e+00> : vector<64x32xf32>
    %18 = tpu.matmul %16, %17, %cst_15 {dimension_numbers = #tpu.dot_dimension_numbers<[1], [0], [0], [1], [0, 0, 1, 1], [], []>} : vector<64x32xbf16>, vector<32x32xbf16>, vector<64x32xf32> -> vector<64x32xf32>
    %c0_16 = arith.constant 0 : index
    %c0_17 = arith.constant 0 : index
    %19 = vector.load %arg7[%c0_16, %c0_17] : memref<1x32xf32, #tpu.memory_space<vmem>>, vector<1x32xf32>
    %20 = vector.broadcast %19 : vector<1x32xf32> to vector<64x32xf32>
    %21 = arith.addf %18, %20 : vector<64x32xf32>
    %cst_18 = arith.constant dense<0xFF800000> : vector<32xf32>
    %22 = vector.multi_reduction <maximumf>, %21, %cst_18 [0] : vector<64x32xf32> to vector<32xf32>
    %23 = vector.shape_cast %22 : vector<32xf32> to vector<1x32xf32>
    %24 = vector.broadcast %23 : vector<1x32xf32> to vector<64x32xf32>
    %25 = arith.subf %21, %24 : vector<64x32xf32>
    %26 = math.exp %25 : vector<64x32xf32>
    %cst_19 = arith.constant dense<0.000000e+00> : vector<32xf32>
    %27 = vector.multi_reduction <add>, %26, %cst_19 [0] : vector<64x32xf32> to vector<32xf32>
    %28 = vector.shape_cast %27 : vector<32xf32> to vector<1x32xf32>
    %29 = vector.broadcast %28 : vector<1x32xf32> to vector<64x32xf32>
    %30 = arith.divf %26, %29 : vector<64x32xf32>
    %31 = arith.truncf %30 : vector<64x32xf32> to vector<64x32xbf16>
    %32 = arith.truncf %8 : vector<64x128xf32> to vector<64x128xbf16>
    %cst_20 = arith.constant dense<0.000000e+00> : vector<32x128xf32>
    %33 = tpu.matmul %31, %32, %cst_20 {dimension_numbers = #tpu.dot_dimension_numbers<[0], [0], [1], [1], [0, 1, 1, 1], [], []>} : vector<64x32xbf16>, vector<64x128xbf16>, vector<32x128xf32> -> vector<32x128xf32>
    %cst_21 = arith.constant 0.176776692 : f32
    %34 = vector.broadcast %cst_21 : f32 to vector<32x128xf32>
    %35 = arith.mulf %34, %33 : vector<32x128xf32>
    %36 = arith.truncf %35 : vector<32x128xf32> to vector<32x128xbf16>
    %c0_22 = arith.constant 0 : index
    %c0_23 = arith.constant 0 : index
    %c0_24 = arith.constant 0 : index
    %37 = vector.load %arg8[%c0_22, %c0_23, %c0_24] : memref<1x32x128xbf16, #tpu.memory_space<vmem>>, vector<1x32x128xbf16>
    %38 = vector.shape_cast %37 : vector<1x32x128xbf16> to vector<32x128xbf16>
    %39 = vector.shape_cast %36 : vector<32x128xbf16> to vector<1x32x128xbf16>
    tpu.vector_store %arg8[%c0_22, %c0_23, %c0_24], %39 {strides = array<i32>} : memref<1x32x128xbf16, #tpu.memory_space<vmem>>, vector<1x32x128xbf16>,
    %cst_25 = arith.constant dense<0.000000e+00> : vector<128xf32>
    %40 = vector.multi_reduction <add>, %8, %cst_25 [0] : vector<64x128xf32> to vector<128xf32>
    %41 = vector.shape_cast %40 : vector<128xf32> to vector<1x128xf32>
    %cst_26 = arith.constant 1.562500e-02 : f32
    %42 = vector.broadcast %cst_26 : f32 to vector<1x128xf32>
    %43 = arith.mulf %41, %42 : vector<1x128xf32>
    %c0_27 = arith.constant 0 : index
    %c0_28 = arith.constant 0 : index
    %c0_29 = arith.constant 0 : index
    %44 = vector.load %arg9[%c0_27, %c0_28, %c0_29] : memref<1x1x128xf32, #tpu.memory_space<vmem>>, vector<1x1x128xf32>
    %45 = vector.shape_cast %44 : vector<1x1x128xf32> to vector<1x128xf32>
    %46 = vector.shape_cast %43 : vector<1x128xf32> to vector<1x1x128xf32>
    tpu.vector_store %arg9[%c0_27, %c0_28, %c0_29], %46 {strides = array<i32>} : memref<1x1x128xf32, #tpu.memory_space<vmem>>, vector<1x1x128xf32>,
    return
  }
  func.func @transform_0(%arg0: i32) -> (i32, i32, i32) {
    %c0_i32 = arith.constant 0 : i32
    %c0_i32_0 = arith.constant 0 : i32
    %c0_i32_1 = arith.constant 0 : i32
    return %arg0, %c0_i32, %c0_i32_0 : i32, i32, i32
  }
  func.func @transform_1(%arg0: i32) -> (i32, i32) {
    %c0_i32 = arith.constant 0 : i32
    %c0_i32_0 = arith.constant 0 : i32
    %c0_i32_1 = arith.constant 0 : i32
    return %c0_i32, %c0_i32_0 : i32, i32
  }
  func.func @transform_2(%arg0: i32) -> (i32, i32) {
    %c0_i32 = arith.constant 0 : i32
    %c0_i32_0 = arith.constant 0 : i32
    %c0_i32_1 = arith.constant 0 : i32
    return %c0_i32, %c0_i32_0 : i32, i32
  }
  func.func @transform_3(%arg0: i32) -> (i32, i32) {
    %c0_i32 = arith.constant 0 : i32
    %c0_i32_0 = arith.constant 0 : i32
    %c0_i32_1 = arith.constant 0 : i32
    return %c0_i32, %c0_i32_0 : i32, i32
  }
  func.func @transform_4(%arg0: i32) -> (i32, i32) {
    %c0_i32 = arith.constant 0 : i32
    %c0_i32_0 = arith.constant 0 : i32
    %c0_i32_1 = arith.constant 0 : i32
    return %c0_i32, %c0_i32_0 : i32, i32
  }
  func.func @transform_5(%arg0: i32) -> (i32, i32) {
    %c0_i32 = arith.constant 0 : i32
    %c0_i32_0 = arith.constant 0 : i32
    %c0_i32_1 = arith.constant 0 : i32
    return %c0_i32, %c0_i32_0 : i32, i32
  }
  func.func @transform_6(%arg0: i32) -> (i32, i32) {
    %c0_i32 = arith.constant 0 : i32
    %c0_i32_0 = arith.constant 0 : i32
    %c0_i32_1 = arith.constant 0 : i32
    return %c0_i32, %c0_i32_0 : i32, i32
  }
  func.func @transform_7(%arg0: i32) -> (i32, i32, i32) {
    %c0_i32 = arith.constant 0 : i32
    %c0_i32_0 = arith.constant 0 : i32
    %c0_i32_1 = arith.constant 0 : i32
    return %arg0, %c0_i32, %c0_i32_0 : i32, i32, i32
  }
  func.func @transform_8(%arg0: i32) -> (i32, i32, i32) {
    %c0_i32 = arith.constant 0 : i32
    %c0_i32_0 = arith.constant 0 : i32
    %c0_i32_1 = arith.constant 0 : i32
    return %arg0, %c0_i32, %c0_i32_0 : i32, i32, i32
  }
}

module attributes {stable_mosaic.version = 11 : i64} {
  func.func @_affinity_up_kernel(%arg0: i32, %arg1: i32, %arg2: memref<1x512x192xbf16, #tpu.memory_space<vmem>>, %arg3: memref<1x1x128xf32, #tpu.memory_space<vmem>>, %arg4: memref<1x32x128xbf16, #tpu.memory_space<vmem>>, %arg5: memref<192x128xbf16, #tpu.memory_space<vmem>>, %arg6: memref<1x128xf32, #tpu.memory_space<vmem>>, %arg7: memref<128x32xbf16, #tpu.memory_space<vmem>>, %arg8: memref<1x32xf32, #tpu.memory_space<vmem>>, %arg9: memref<32x32xbf16, #tpu.memory_space<vmem>>, %arg10: memref<1x32xf32, #tpu.memory_space<vmem>>, %arg11: memref<128x128xbf16, #tpu.memory_space<vmem>>, %arg12: memref<128x128xbf16, #tpu.memory_space<vmem>>, %arg13: memref<1x128xf32, #tpu.memory_space<vmem>>, %arg14: memref<1x512x128xf32, #tpu.memory_space<vmem>>) attributes {dimension_semantics = [#tpu.dimension_semantics<parallel>, #tpu.dimension_semantics<parallel>], iteration_bounds = array<i64: 2, 2>, scalar_prefetch = 0 : i64, scratch_operands = 0 : i64, tpu.core_type = #tpu.core_type<tc>, window_params = [{transform_indices = @transform_0, window_bounds = array<i64: 1, 512, 192>}, {transform_indices = @transform_1, window_bounds = array<i64: 1, 1, 128>}, {transform_indices = @transform_2, window_bounds = array<i64: 1, 32, 128>}, {pipeline_mode = #tpu.pipeline_mode<synchronous>, transform_indices = @transform_3, window_bounds = array<i64: 192, 128>}, {pipeline_mode = #tpu.pipeline_mode<synchronous>, transform_indices = @transform_4, window_bounds = array<i64: 1, 128>}, {pipeline_mode = #tpu.pipeline_mode<synchronous>, transform_indices = @transform_5, window_bounds = array<i64: 128, 32>}, {pipeline_mode = #tpu.pipeline_mode<synchronous>, transform_indices = @transform_6, window_bounds = array<i64: 1, 32>}, {pipeline_mode = #tpu.pipeline_mode<synchronous>, transform_indices = @transform_7, window_bounds = array<i64: 32, 32>}, {pipeline_mode = #tpu.pipeline_mode<synchronous>, transform_indices = @transform_8, window_bounds = array<i64: 1, 32>}, {pipeline_mode = #tpu.pipeline_mode<synchronous>, transform_indices = @transform_9, window_bounds = array<i64: 128, 128>}, {pipeline_mode = #tpu.pipeline_mode<synchronous>, transform_indices = @transform_10, window_bounds = array<i64: 128, 128>}, {pipeline_mode = #tpu.pipeline_mode<synchronous>, transform_indices = @transform_11, window_bounds = array<i64: 1, 128>}, {transform_indices = @transform_12, window_bounds = array<i64: 1, 512, 128>}]} {
    %c0 = arith.constant 0 : index
    %c0_0 = arith.constant 0 : index
    %c0_1 = arith.constant 0 : index
    %0 = vector.load %arg2[%c0, %c0_0, %c0_1] : memref<1x512x192xbf16, #tpu.memory_space<vmem>>, vector<1x512x192xbf16>
    %1 = vector.shape_cast %0 : vector<1x512x192xbf16> to vector<512x192xbf16>
    %c0_2 = arith.constant 0 : index
    %c0_3 = arith.constant 0 : index
    %2 = vector.load %arg5[%c0_2, %c0_3] : memref<192x128xbf16, #tpu.memory_space<vmem>>, vector<192x128xbf16>
    %cst = arith.constant dense<0.000000e+00> : vector<512x128xf32>
    %3 = tpu.matmul %1, %2, %cst {dimension_numbers = #tpu.dot_dimension_numbers<[1], [0], [0], [1], [0, 0, 1, 1], [], []>} : vector<512x192xbf16>, vector<192x128xbf16>, vector<512x128xf32> -> vector<512x128xf32>
    %c0_4 = arith.constant 0 : index
    %c0_5 = arith.constant 0 : index
    %4 = vector.load %arg6[%c0_4, %c0_5] : memref<1x128xf32, #tpu.memory_space<vmem>>, vector<1x128xf32>
    %5 = vector.broadcast %4 : vector<1x128xf32> to vector<512x128xf32>
    %6 = arith.addf %3, %5 : vector<512x128xf32>
    %cst_6 = arith.constant 0.000000e+00 : f32
    %7 = vector.broadcast %cst_6 : f32 to vector<512x128xf32>
    %8 = arith.maximumf %6, %7 : vector<512x128xf32>
    %c0_7 = arith.constant 0 : index
    %c0_8 = arith.constant 0 : index
    %c0_9 = arith.constant 0 : index
    %9 = vector.load %arg3[%c0_7, %c0_8, %c0_9] : memref<1x1x128xf32, #tpu.memory_space<vmem>>, vector<1x1x128xf32>
    %10 = vector.shape_cast %9 : vector<1x1x128xf32> to vector<1x128xf32>
    %11 = vector.broadcast %10 : vector<1x128xf32> to vector<512x128xf32>
    %12 = arith.addf %8, %11 : vector<512x128xf32>
    %13 = arith.truncf %12 : vector<512x128xf32> to vector<512x128xbf16>
    %c0_10 = arith.constant 0 : index
    %c0_11 = arith.constant 0 : index
    %14 = vector.load %arg7[%c0_10, %c0_11] : memref<128x32xbf16, #tpu.memory_space<vmem>>, vector<128x32xbf16>
    %cst_12 = arith.constant dense<0.000000e+00> : vector<512x32xf32>
    %15 = tpu.matmul %13, %14, %cst_12 {dimension_numbers = #tpu.dot_dimension_numbers<[1], [0], [0], [1], [0, 0, 1, 1], [], []>} : vector<512x128xbf16>, vector<128x32xbf16>, vector<512x32xf32> -> vector<512x32xf32>
    %c0_13 = arith.constant 0 : index
    %c0_14 = arith.constant 0 : index
    %16 = vector.load %arg8[%c0_13, %c0_14] : memref<1x32xf32, #tpu.memory_space<vmem>>, vector<1x32xf32>
    %17 = vector.broadcast %16 : vector<1x32xf32> to vector<512x32xf32>
    %18 = arith.addf %15, %17 : vector<512x32xf32>
    %cst_15 = arith.constant 0.000000e+00 : f32
    %19 = vector.broadcast %cst_15 : f32 to vector<512x32xf32>
    %20 = arith.maximumf %18, %19 : vector<512x32xf32>
    %21 = arith.truncf %20 : vector<512x32xf32> to vector<512x32xbf16>
    %c0_16 = arith.constant 0 : index
    %c0_17 = arith.constant 0 : index
    %22 = vector.load %arg9[%c0_16, %c0_17] : memref<32x32xbf16, #tpu.memory_space<vmem>>, vector<32x32xbf16>
    %cst_18 = arith.constant dense<0.000000e+00> : vector<512x32xf32>
    %23 = tpu.matmul %21, %22, %cst_18 {dimension_numbers = #tpu.dot_dimension_numbers<[1], [0], [0], [1], [0, 0, 1, 1], [], []>} : vector<512x32xbf16>, vector<32x32xbf16>, vector<512x32xf32> -> vector<512x32xf32>
    %c0_19 = arith.constant 0 : index
    %c0_20 = arith.constant 0 : index
    %24 = vector.load %arg10[%c0_19, %c0_20] : memref<1x32xf32, #tpu.memory_space<vmem>>, vector<1x32xf32>
    %25 = vector.broadcast %24 : vector<1x32xf32> to vector<512x32xf32>
    %26 = arith.addf %23, %25 : vector<512x32xf32>
    %cst_21 = arith.constant 0.000000e+00 : f32
    %27 = vector.broadcast %cst_21 : f32 to vector<512x32xf32>
    %28 = arith.maximumf %26, %27 : vector<512x32xf32>
    %29 = arith.truncf %28 : vector<512x32xf32> to vector<512x32xbf16>
    %c0_22 = arith.constant 0 : index
    %c0_23 = arith.constant 0 : index
    %c0_24 = arith.constant 0 : index
    %30 = vector.load %arg4[%c0_22, %c0_23, %c0_24] : memref<1x32x128xbf16, #tpu.memory_space<vmem>>, vector<1x32x128xbf16>
    %31 = vector.shape_cast %30 : vector<1x32x128xbf16> to vector<32x128xbf16>
    %cst_25 = arith.constant dense<0.000000e+00> : vector<512x128xf32>
    %32 = tpu.matmul %29, %31, %cst_25 {dimension_numbers = #tpu.dot_dimension_numbers<[1], [0], [0], [1], [0, 0, 1, 1], [], []>} : vector<512x32xbf16>, vector<32x128xbf16>, vector<512x128xf32> -> vector<512x128xf32>
    %33 = arith.truncf %32 : vector<512x128xf32> to vector<512x128xbf16>
    %c0_26 = arith.constant 0 : index
    %c0_27 = arith.constant 0 : index
    %34 = vector.load %arg11[%c0_26, %c0_27] : memref<128x128xbf16, #tpu.memory_space<vmem>>, vector<128x128xbf16>
    %cst_28 = arith.constant dense<0.000000e+00> : vector<512x128xf32>
    %35 = tpu.matmul %33, %34, %cst_28 {dimension_numbers = #tpu.dot_dimension_numbers<[1], [0], [0], [1], [0, 0, 1, 1], [], []>} : vector<512x128xbf16>, vector<128x128xbf16>, vector<512x128xf32> -> vector<512x128xf32>
    %36 = arith.truncf %8 : vector<512x128xf32> to vector<512x128xbf16>
    %c0_29 = arith.constant 0 : index
    %c0_30 = arith.constant 0 : index
    %37 = vector.load %arg12[%c0_29, %c0_30] : memref<128x128xbf16, #tpu.memory_space<vmem>>, vector<128x128xbf16>
    %cst_31 = arith.constant dense<0.000000e+00> : vector<512x128xf32>
    %38 = tpu.matmul %36, %37, %cst_31 {dimension_numbers = #tpu.dot_dimension_numbers<[1], [0], [0], [1], [0, 0, 1, 1], [], []>} : vector<512x128xbf16>, vector<128x128xbf16>, vector<512x128xf32> -> vector<512x128xf32>
    %39 = arith.addf %35, %38 : vector<512x128xf32>
    %c0_32 = arith.constant 0 : index
    %c0_33 = arith.constant 0 : index
    %40 = vector.load %arg13[%c0_32, %c0_33] : memref<1x128xf32, #tpu.memory_space<vmem>>, vector<1x128xf32>
    %41 = vector.broadcast %40 : vector<1x128xf32> to vector<512x128xf32>
    %42 = arith.addf %39, %41 : vector<512x128xf32>
    %cst_34 = arith.constant 0.000000e+00 : f32
    %43 = vector.broadcast %cst_34 : f32 to vector<512x128xf32>
    %44 = arith.maximumf %42, %43 : vector<512x128xf32>
    %c0_35 = arith.constant 0 : index
    %c0_36 = arith.constant 0 : index
    %c0_37 = arith.constant 0 : index
    %45 = vector.load %arg14[%c0_35, %c0_36, %c0_37] : memref<1x512x128xf32, #tpu.memory_space<vmem>>, vector<1x512x128xf32>
    %46 = vector.shape_cast %45 : vector<1x512x128xf32> to vector<512x128xf32>
    %47 = vector.shape_cast %44 : vector<512x128xf32> to vector<1x512x128xf32>
    tpu.vector_store %arg14[%c0_35, %c0_36, %c0_37], %47 {strides = array<i32>} : memref<1x512x128xf32, #tpu.memory_space<vmem>>, vector<1x512x128xf32>,
    return
  }
  func.func @transform_0(%arg0: i32, %arg1: i32) -> (i32, i32, i32) {
    %c0_i32 = arith.constant 0 : i32
    %c0_i32_0 = arith.constant 0 : i32
    return %arg0, %arg1, %c0_i32 : i32, i32, i32
  }
  func.func @transform_1(%arg0: i32, %arg1: i32) -> (i32, i32, i32) {
    %c0_i32 = arith.constant 0 : i32
    %c0_i32_0 = arith.constant 0 : i32
    %c0_i32_1 = arith.constant 0 : i32
    return %arg0, %c0_i32, %c0_i32_0 : i32, i32, i32
  }
  func.func @transform_2(%arg0: i32, %arg1: i32) -> (i32, i32, i32) {
    %c0_i32 = arith.constant 0 : i32
    %c0_i32_0 = arith.constant 0 : i32
    %c0_i32_1 = arith.constant 0 : i32
    return %arg0, %c0_i32, %c0_i32_0 : i32, i32, i32
  }
  func.func @transform_3(%arg0: i32, %arg1: i32) -> (i32, i32) {
    %c0_i32 = arith.constant 0 : i32
    %c0_i32_0 = arith.constant 0 : i32
    %c0_i32_1 = arith.constant 0 : i32
    return %c0_i32, %c0_i32_0 : i32, i32
  }
  func.func @transform_4(%arg0: i32, %arg1: i32) -> (i32, i32) {
    %c0_i32 = arith.constant 0 : i32
    %c0_i32_0 = arith.constant 0 : i32
    %c0_i32_1 = arith.constant 0 : i32
    return %c0_i32, %c0_i32_0 : i32, i32
  }
  func.func @transform_5(%arg0: i32, %arg1: i32) -> (i32, i32) {
    %c0_i32 = arith.constant 0 : i32
    %c0_i32_0 = arith.constant 0 : i32
    %c0_i32_1 = arith.constant 0 : i32
    return %c0_i32, %c0_i32_0 : i32, i32
  }
  func.func @transform_6(%arg0: i32, %arg1: i32) -> (i32, i32) {
    %c0_i32 = arith.constant 0 : i32
    %c0_i32_0 = arith.constant 0 : i32
    %c0_i32_1 = arith.constant 0 : i32
    return %c0_i32, %c0_i32_0 : i32, i32
  }
  func.func @transform_7(%arg0: i32, %arg1: i32) -> (i32, i32) {
    %c0_i32 = arith.constant 0 : i32
    %c0_i32_0 = arith.constant 0 : i32
    %c0_i32_1 = arith.constant 0 : i32
    return %c0_i32, %c0_i32_0 : i32, i32
  }
  func.func @transform_8(%arg0: i32, %arg1: i32) -> (i32, i32) {
    %c0_i32 = arith.constant 0 : i32
    %c0_i32_0 = arith.constant 0 : i32
    %c0_i32_1 = arith.constant 0 : i32
    return %c0_i32, %c0_i32_0 : i32, i32
  }
  func.func @transform_9(%arg0: i32, %arg1: i32) -> (i32, i32) {
    %c0_i32 = arith.constant 0 : i32
    %c0_i32_0 = arith.constant 0 : i32
    %c0_i32_1 = arith.constant 0 : i32
    return %c0_i32, %c0_i32_0 : i32, i32
  }
  func.func @transform_10(%arg0: i32, %arg1: i32) -> (i32, i32) {
    %c0_i32 = arith.constant 0 : i32
    %c0_i32_0 = arith.constant 0 : i32
    %c0_i32_1 = arith.constant 0 : i32
    return %c0_i32, %c0_i32_0 : i32, i32
  }
  func.func @transform_11(%arg0: i32, %arg1: i32) -> (i32, i32) {
    %c0_i32 = arith.constant 0 : i32
    %c0_i32_0 = arith.constant 0 : i32
    %c0_i32_1 = arith.constant 0 : i32
    return %c0_i32, %c0_i32_0 : i32, i32
  }
  func.func @transform_12(%arg0: i32, %arg1: i32) -> (i32, i32, i32) {
    %c0_i32 = arith.constant 0 : i32
    %c0_i32_0 = arith.constant 0 : i32
    return %arg0, %arg1, %c0_i32 : i32, i32, i32
  }
}

</mosaic_0001>

<llo_original>
// kernel: hgd_forward.2
$region0: #{hgd_forward.2}
  #allocation0 [shape = 'u32[]', space=smem, size = 0x4, offset = 0x4, fixed_abs, tag = 'smem constant byte address 0x4 - core index']
  #allocation1 [shape = 'u32[72,128]{1,0:T(1,128)}', space=vmem, size = 0x9000, scoped, tag = 'internal scratch']
  %s0 = inlined_call_operand.vmem [shape: bf16[2,64,192], index: 0, kind: input, shape index: {}]
  %s1 = inlined_call_operand.vmem [shape: bf16[192,128], index: 1, kind: input, shape index: {}]
  %s2 = inlined_call_operand.vmem [shape: f32[1,128], index: 2, kind: input, shape index: {}]
  %s3 = inlined_call_operand.vmem [shape: bf16[192,32], index: 3, kind: input, shape index: {}]
  %s4 = inlined_call_operand.vmem [shape: f32[1,32], index: 4, kind: input, shape index: {}]
  %s5 = inlined_call_operand.vmem [shape: bf16[32,32], index: 5, kind: input, shape index: {}]
  %s6 = inlined_call_operand.vmem [shape: f32[1,32], index: 6, kind: input, shape index: {}]
  %s7 = inlined_call_operand.vmem [shape: bf16[2,32,128], index: 7, kind: output, shape index: {0}]
  %s8 = inlined_call_operand.vmem [shape: f32[2,1,128], index: 8, kind: output, shape index: {1}]
  %9 = xla_tuple %s7, %s8
  %s10 = sld [smem:[#allocation0]]
  $region69: #{hgd_forward.2} parent=0
    _
  %s12 = ssub.s32 1, %s10
  %s13 = scalar_select 0, %s12, %s10
  loop: start=0, step=1, limit=4
  $region2: #{hgd_forward.2} parent=0 // loop_pre_header
    _
  $region3: #{hgd_forward.2} parent=0 // loop_header
    %s15 = sphi 0, %s19
    %p16 = scmp.ge.s32.totalorder %s15, 4
    %s25 = sphi 0, %s27
    %s28 = sphi 0, %s25
    %s29 = sphi 0, %s28
    %s45 = sphi 0, %s29
    %s49 = sphi 0, %s49
    %s51 = sphi 0, %s49
    %s52 = sphi 0, %s51
    %s66 = sphi 0, %s52
    %s70 = sphi 0, %s70
    %s72 = sphi 0, %s70
    %s73 = sphi 0, %s72
    %s87 = sphi 0, %s73
    %s91 = sphi 0, %s91
    %s93 = sphi 0, %s91
    %s94 = sphi 0, %s93
    %s108 = sphi 0, %s94
    %s112 = sphi 0, %s112
    %s114 = sphi 0, %s112
    %s115 = sphi 0, %s114
    %s129 = sphi 0, %s115
    %s133 = sphi 0, %s133
    %s135 = sphi 0, %s133
    %s136 = sphi 0, %s135
    %s150 = sphi 0, %s136
    %s154 = sphi 0, %s154
    %s156 = sphi 0, %s154
    %s157 = sphi 0, %s156
    %s171 = sphi 0, %s157
    %s177 = sphi 0, %s179
    %s180 = sphi 0, %s177
    %s181 = sphi 0, %s180
    %s197 = sphi 0, %s181
    %s203 = sphi 0, %s205
    %s206 = sphi 0, %s203
    %s207 = sphi 0, %s206
    %s223 = sphi 0, %s207
  $region4: #{hgd_forward.2} parent=0 // loop_header_branch
    %18 = sbr.rel (%p16) target = $region8
  $region5: #{hgd_forward.2} parent=0 // loop_body
    %s20 = ssub.s32 %s15, 1
    %s21 = ssub.s32 %s15, 2
    %s22 = sadd.s32 %s15, 1
    %s23 = ssub.s32 %s15, %s22
    %p24 = scmp.eq.s32.totalorder %s23, 0
    %s26 = sadd.s32 %s25, 1
    %s27 = scalar_select %p24, %s25, %s26
    %p30 = pneg %p24
    %p31 = scmp.eq.s32.totalorder %s15, 1
    %p32 = por %p30, %p31
    %p33 = scmp.ne.s32.totalorder %s25, %s28
    %p34 = scmp.eq.s32.totalorder %s15, 0
    %p35 = por %p33, %p34
    %p36 = scmp.ne.s32.totalorder %s25, %s28
    %p37 = scmp.eq.s32.totalorder %s20, 1
    %p38 = por %p36, %p37
    %p39 = scmp.ne.s32.totalorder %s28, %s29
    %p40 = scmp.eq.s32.totalorder %s20, 0
    %p41 = por %p39, %p40
    %p42 = scmp.ne.s32.totalorder %s28, %s29
    %p43 = scmp.eq.s32.totalorder %s21, 1
    %p44 = por %p42, %p43
    %p46 = scmp.ne.s32.totalorder %s29, %s45
    %p47 = scmp.eq.s32.totalorder %s21, 0
    %p48 = por %p46, %p47
    %s50 = sadd.s32 %s49, 1
    %p53 = scmp.eq.s32.totalorder %s15, 1
    %p54 = scmp.ne.s32.totalorder %s49, %s51
    %p55 = scmp.eq.s32.totalorder %s15, 0
    %p56 = por %p54, %p55
    %p57 = scmp.ne.s32.totalorder %s49, %s51
    %p58 = scmp.eq.s32.totalorder %s20, 1
    %p59 = por %p57, %p58
    %p60 = scmp.ne.s32.totalorder %s51, %s52
    %p61 = scmp.eq.s32.totalorder %s20, 0
    %p62 = por %p60, %p61
    %p63 = scmp.ne.s32.totalorder %s51, %s52
    %p64 = scmp.eq.s32.totalorder %s21, 1
    %p65 = por %p63, %p64
    %p67 = scmp.ne.s32.totalorder %s52, %s66
    %p68 = scmp.eq.s32.totalorder %s21, 0
    %p69 = por %p67, %p68
    %s71 = sadd.s32 %s70, 1
    %p74 = scmp.eq.s32.totalorder %s15, 1
    %p75 = scmp.ne.s32.totalorder %s70, %s72
    %p76 = scmp.eq.s32.totalorder %s15, 0
    %p77 = por %p75, %p76
    %p78 = scmp.ne.s32.totalorder %s70, %s72
    %p79 = scmp.eq.s32.totalorder %s20, 1
    %p80 = por %p78, %p79
    %p81 = scmp.ne.s32.totalorder %s72, %s73
    %p82 = scmp.eq.s32.totalorder %s20, 0
    %p83 = por %p81, %p82
    %p84 = scmp.ne.s32.totalorder %s72, %s73
    %p85 = scmp.eq.s32.totalorder %s21, 1
    %p86 = por %p84, %p85
    %p88 = scmp.ne.s32.totalorder %s73, %s87
    %p89 = scmp.eq.s32.totalorder %s21, 0
    %p90 = por %p88, %p89
    %s92 = sadd.s32 %s91, 1
    %p95 = scmp.eq.s32.totalorder %s15, 1
    %p96 = scmp.ne.s32.totalorder %s91, %s93
    %p97 = scmp.eq.s32.totalorder %s15, 0
    %p98 = por %p96, %p97
    %p99 = scmp.ne.s32.totalorder %s91, %s93
    %p100 = scmp.eq.s32.totalorder %s20, 1
    %p101 = por %p99, %p100
    %p102 = scmp.ne.s32.totalorder %s93, %s94
    %p103 = scmp.eq.s32.totalorder %s20, 0
    %p104 = por %p102, %p103
    %p105 = scmp.ne.s32.totalorder %s93, %s94
    %p106 = scmp.eq.s32.totalorder %s21, 1
    %p107 = por %p105, %p106
    %p109 = scmp.ne.s32.totalorder %s94, %s108
    %p110 = scmp.eq.s32.totalorder %s21, 0
    %p111 = por %p109, %p110
    %s113 = sadd.s32 %s112, 1
    %p116 = scmp.eq.s32.totalorder %s15, 1
    %p117 = scmp.ne.s32.totalorder %s112, %s114
    %p118 = scmp.eq.s32.totalorder %s15, 0
    %p119 = por %p117, %p118
    %p120 = scmp.ne.s32.totalorder %s112, %s114
    %p121 = scmp.eq.s32.totalorder %s20, 1
    %p122 = por %p120, %p121
    %p123 = scmp.ne.s32.totalorder %s114, %s115
    %p124 = scmp.eq.s32.totalorder %s20, 0
    %p125 = por %p123, %p124
    %p126 = scmp.ne.s32.totalorder %s114, %s115
    %p127 = scmp.eq.s32.totalorder %s21, 1
    %p128 = por %p126, %p127
    %p130 = scmp.ne.s32.totalorder %s115, %s129
    %p131 = scmp.eq.s32.totalorder %s21, 0
    %p132 = por %p130, %p131
    %s134 = sadd.s32 %s133, 1
    %p137 = scmp.eq.s32.totalorder %s15, 1
    %p138 = scmp.ne.s32.totalorder %s133, %s135
    %p139 = scmp.eq.s32.totalorder %s15, 0
    %p140 = por %p138, %p139
    %p141 = scmp.ne.s32.totalorder %s133, %s135
    %p142 = scmp.eq.s32.totalorder %s20, 1
    %p143 = por %p141, %p142
    %p144 = scmp.ne.s32.totalorder %s135, %s136
    %p145 = scmp.eq.s32.totalorder %s20, 0
    %p146 = por %p144, %p145
    %p147 = scmp.ne.s32.totalorder %s135, %s136
    %p148 = scmp.eq.s32.totalorder %s21, 1
    %p149 = por %p147, %p148
    %p151 = scmp.ne.s32.totalorder %s136, %s150
    %p152 = scmp.eq.s32.totalorder %s21, 0
    %p153 = por %p151, %p152
    %s155 = sadd.s32 %s154, 1
    %p158 = scmp.eq.s32.totalorder %s15, 1
    %p159 = scmp.ne.s32.totalorder %s154, %s156
    %p160 = scmp.eq.s32.totalorder %s15, 0
    %p161 = por %p159, %p160
    %p162 = scmp.ne.s32.totalorder %s154, %s156
    %p163 = scmp.eq.s32.totalorder %s20, 1
    %p164 = por %p162, %p163
    %p165 = scmp.ne.s32.totalorder %s156, %s157
    %p166 = scmp.eq.s32.totalorder %s20, 0
    %p167 = por %p165, %p166
    %p168 = scmp.ne.s32.totalorder %s156, %s157
    %p169 = scmp.eq.s32.totalorder %s21, 1
    %p170 = por %p168, %p169
    %p172 = scmp.ne.s32.totalorder %s157, %s171
    %p173 = scmp.eq.s32.totalorder %s21, 0
    %p174 = por %p172, %p173
    %s175 = ssub.s32 %s15, %s22
    %p176 = scmp.eq.s32.totalorder %s175, 0
    %s178 = sadd.s32 %s177, 1
    %s179 = scalar_select %p176, %s177, %s178
    %p182 = pneg %p176
    %p183 = scmp.eq.s32.totalorder %s15, 1
    %p184 = por %p182, %p183
    %p185 = scmp.ne.s32.totalorder %s177, %s180
    %p186 = scmp.eq.s32.totalorder %s15, 0
    %p187 = por %p185, %p186
    %p188 = scmp.ne.s32.totalorder %s177, %s180
    %p189 = scmp.eq.s32.totalorder %s20, 1
    %p190 = por %p188, %p189
    %p191 = scmp.ne.s32.totalorder %s180, %s181
    %p192 = scmp.eq.s32.totalorder %s20, 0
    %p193 = por %p191, %p192
    %p194 = scmp.ne.s32.totalorder %s180, %s181
    %p195 = scmp.eq.s32.totalorder %s21, 1
    %p196 = por %p194, %p195
    %p198 = scmp.ne.s32.totalorder %s181, %s197
    %p199 = scmp.eq.s32.totalorder %s21, 0
    %p200 = por %p198, %p199
    %s201 = ssub.s32 %s15, %s22
    %p202 = scmp.eq.s32.totalorder %s201, 0
    %s204 = sadd.s32 %s203, 1
    %s205 = scalar_select %p202, %s203, %s204
    %p208 = pneg %p202
    %p209 = scmp.eq.s32.totalorder %s15, 1
    %p210 = por %p208, %p209
    %p211 = scmp.ne.s32.totalorder %s203, %s206
    %p212 = scmp.eq.s32.totalorder %s15, 0
    %p213 = por %p211, %p212
    %p214 = scmp.ne.s32.totalorder %s203, %s206
    %p215 = scmp.eq.s32.totalorder %s20, 1
    %p216 = por %p214, %p215
    %p217 = scmp.ne.s32.totalorder %s206, %s207
    %p218 = scmp.eq.s32.totalorder %s20, 0
    %p219 = por %p217, %p218
    %p220 = scmp.ne.s32.totalorder %s206, %s207
    %p221 = scmp.eq.s32.totalorder %s21, 1
    %p222 = por %p220, %p221
    %p224 = scmp.ne.s32.totalorder %s207, %s223
    %p225 = scmp.eq.s32.totalorder %s21, 0
    %p226 = por %p224, %p225
    %p227 = scmp.le.s32.totalorder 1, %s15
    %p228 = scmp.lt.s32.totalorder %s15, 3
    %p229 = pnand %p227, %p228
    %p230 = pneg %p229
    // Predicated region
    $region9: #{hgd_forward.2} parent=5 // pred_check
      _
    $region10: #{hgd_forward.2} parent=5 // pred_check_branch
      %232 = sbr.rel (%p229) target = $region12
    $region11: #{hgd_forward.2} parent=5 // pred_region
      %s233 = ssub.s32 %s15, 1
      // Predicated region
      $region13: #{hgd_forward.2} parent=11 // pred_check
        %p234 = pneg %p62
      $region14: #{hgd_forward.2} parent=11 // pred_check_branch
        %236 = sbr.rel (%p234) target = $region16
      $region15: #{hgd_forward.2} parent=11 // pred_region
        _
      $region16: #{hgd_forward.2} parent=11 // pred_fallthru
        _
      // Predicated region
      $region17: #{hgd_forward.2} parent=11 // pred_check
        %p237 = pneg %p83
      $region18: #{hgd_forward.2} parent=11 // pred_check_branch
        %239 = sbr.rel (%p237) target = $region20
      $region19: #{hgd_forward.2} parent=11 // pred_region
        _
      $region20: #{hgd_forward.2} parent=11 // pred_fallthru
        _
      // Predicated region
      $region21: #{hgd_forward.2} parent=11 // pred_check
        %p240 = pneg %p104
      $region22: #{hgd_forward.2} parent=11 // pred_check_branch
        %242 = sbr.rel (%p240) target = $region24
      $region23: #{hgd_forward.2} parent=11 // pred_region
        _
      $region24: #{hgd_forward.2} parent=11 // pred_fallthru
        _
      // Predicated region
      $region25: #{hgd_forward.2} parent=11 // pred_check
        %p243 = pneg %p125
      $region26: #{hgd_forward.2} parent=11 // pred_check_branch
        %245 = sbr.rel (%p243) target = $region28
      $region27: #{hgd_forward.2} parent=11 // pred_region
        _
      $region28: #{hgd_forward.2} parent=11 // pred_fallthru
        _
      // Predicated region
      $region29: #{hgd_forward.2} parent=11 // pred_check
        %p246 = pneg %p146
      $region30: #{hgd_forward.2} parent=11 // pred_check_branch
        %248 = sbr.rel (%p246) target = $region32
      $region31: #{hgd_forward.2} parent=11 // pred_region
        _
      $region32: #{hgd_forward.2} parent=11 // pred_fallthru
        _
      // Predicated region
      $region33: #{hgd_forward.2} parent=11 // pred_check
        %p249 = pneg %p167
      $region34: #{hgd_forward.2} parent=11 // pred_check_branch
        %251 = sbr.rel (%p249) target = $region36
      $region35: #{hgd_forward.2} parent=11 // pred_region
        _
      $region36: #{hgd_forward.2} parent=11 // pred_fallthru
        _
    $region12: #{hgd_forward.2} parent=5 // pred_fallthru
      _
    %p252 = scmp.lt.s32.totalorder %s15, 2
    // Predicated region
    $region37: #{hgd_forward.2} parent=5 // pred_check
      %p253 = pneg %p252
    $region38: #{hgd_forward.2} parent=5 // pred_check_branch
      %255 = sbr.rel (%p253) target = $region40
    $region39: #{hgd_forward.2} parent=5 // pred_region
      // Predicated region
      $region41: #{hgd_forward.2} parent=39 // pred_check
        %p256 = pneg %p35
      $region42: #{hgd_forward.2} parent=39 // pred_check_branch
        %258 = sbr.rel (%p256) target = $region44
      $region43: #{hgd_forward.2} parent=39 // pred_region
        %p259 = scmp.lt.s32.totalorder %s15, 1
        %s260 = scalar_select %p259, %s15, 1
        %s261 = smul.addr %s260, 16
        %s262 = smul.addr %s261, 4
        %s263 = scalar_lea.vmem %s0, %s262
      $region44: #{hgd_forward.2} parent=39 // pred_fallthru
        _
    $region40: #{hgd_forward.2} parent=5 // pred_fallthru
      _
    %p264 = scmp.le.s32.totalorder 1, %s15
    %p265 = scmp.lt.s32.totalorder %s15, 3
    %p266 = pnand %p264, %p265
    %p267 = pneg %p266
    // Predicated region
    $region45: #{hgd_forward.2} parent=5 // pred_check
      _
    $region46: #{hgd_forward.2} parent=5 // pred_check_branch
      %269 = sbr.rel (%p266) target = $region48
    $region47: #{hgd_forward.2} parent=5 // pred_region
      %s270 = ssub.s32 %s15, 1
      %p271 = scmp.lt.s32.totalorder %s20, 1
      %s272 = scalar_select %p271, %s20, 1
      %s273 = smul.addr %s272, 16
      %s274 = smul.addr %s273, 4
      %s275 = scalar_lea.vmem %s0, %s274
      %p276 = pneg %p41
      %p277 = pneg %p38
      %p278 = pneg %p62
      %p279 = pneg %p59
      %p280 = pneg %p83
      %p281 = pneg %p80
      %p282 = pneg %p104
      %p283 = pneg %p101
      %p284 = pneg %p125
      %p285 = pneg %p122
      %p286 = pneg %p146
      %p287 = pneg %p143
      %p288 = pneg %p167
      %p289 = pneg %p164
      %p290 = pneg %p193
      %p291 = pneg %p190
      %p292 = scmp.lt.s32.totalorder %s20, 1
      %s293 = scalar_select %p292, %s20, 1
      %s294 = smul.addr %s293, 4
      %s295 = smul.addr %s294, 4
      %s296 = scalar_lea.vmem %s7, %s295
      %p297 = pneg %p219
      %p298 = pneg %p216
      %p299 = scmp.lt.s32.totalorder %s20, 1
      %s300 = scalar_select %p299, %s20, 1
      %s301 = scalar_lea.vmem %s8, %s300
      %p302 = scmp.lt.s32.totalorder %s20, 1
      %s303 = scalar_select %p302, %s20, 1
      %s304 = smul.addr %s303, 16
      %s305 = smul.addr %s304, 4
      %s306 = scalar_lea.vmem %s0, %s305
      %p307 = scmp.lt.s32.totalorder %s20, 1
      %s308 = scalar_select %p307, %s20, 1
      %s309 = smul.addr %s308, 4
      %s310 = smul.addr %s309, 4
      %s311 = scalar_lea.vmem %s7, %s310
      %p312 = scmp.lt.s32.totalorder %s20, 1
      %s313 = scalar_select %p312, %s20, 1
      %s314 = scalar_lea.vmem %s8, %s313
      %v316 = vld [vmem:[%s306] sm:$0xff]
      %v317 = vld [vmem:[%s306 + $0x8] sm:$0xff]
      %v318 = vld [vmem:[%s306 + $0x10] sm:$0xff]
      %v319 = vld [vmem:[%s306 + $0x18] sm:$0xff]
      %v320 = vld [vmem:[%s306 + $0x20] sm:$0xff]
      %v321 = vld [vmem:[%s306 + $0x28] sm:$0xff]
      %v322 = vld [vmem:[%s306 + $0x30] sm:$0xff]
      %v323 = vld [vmem:[%s306 + $0x38] sm:$0xff]
      %v324 = vld [vmem:[%s1] sm:$0xf]
      %v325 = vld [vmem:[%s1 + $0x4] sm:$0xf]
      %v326 = vld [vmem:[%s1 + $0x8] sm:$0xf]
      %v327 = vld [vmem:[%s1 + $0xc] sm:$0xf]
      %v328 = vld [vmem:[%s1 + $0x10] sm:$0xf]
      %v329 = vld [vmem:[%s1 + $0x14] sm:$0xf]
      %v330 = vld [vmem:[%s1 + $0x18] sm:$0xf]
      %v331 = vld [vmem:[%s1 + $0x1c] sm:$0xf]
      %v332 = vld [vmem:[%s1 + $0x20] sm:$0xf]
      %v333 = vld [vmem:[%s1 + $0x24] sm:$0xf]
      %v334 = vld [vmem:[%s1 + $0x28] sm:$0xf]
      %v335 = vld [vmem:[%s1 + $0x2c] sm:$0xf]
      %v336 = vld [vmem:[%s1 + $0x30] sm:$0xf]
      %v337 = vld [vmem:[%s1 + $0x34] sm:$0xf]
      %v338 = vld [vmem:[%s1 + $0x38] sm:$0xf]
      %v339 = vld [vmem:[%s1 + $0x3c] sm:$0xf]
      %v340 = vld [vmem:[%s1 + $0x40] sm:$0xf]
      %v341 = vld [vmem:[%s1 + $0x44] sm:$0xf]
      %v342 = vld [vmem:[%s1 + $0x48] sm:$0xf]
      %v343 = vld [vmem:[%s1 + $0x4c] sm:$0xf]
      %v344 = vld [vmem:[%s1 + $0x50] sm:$0xf]
      %v345 = vld [vmem:[%s1 + $0x54] sm:$0xf]
      %v346 = vld [vmem:[%s1 + $0x58] sm:$0xf]
      %v347 = vld [vmem:[%s1 + $0x5c] sm:$0xf]
      %v348 = vld [vmem:[%s2] sm:$0x1]
      %v350 = vperm.slane %v348, 0
      %v360 = vunpack.c.l.b16 %v316
      %v361 = vunpack.c.h.b16 %v316
      %v362 = vunpack.c.l.b16 %v317
      %v363 = vunpack.c.h.b16 %v317
      %v364 = vunpack.c.l.b16 %v318
      %v365 = vunpack.c.h.b16 %v318
      %v366 = vunpack.c.l.b16 %v319
      %v367 = vunpack.c.h.b16 %v319
      %v368 = vunpack.c.l.b16 %v320
      %v369 = vunpack.c.h.b16 %v320
      %v370 = vunpack.c.l.b16 %v321
      %v371 = vunpack.c.h.b16 %v321
      %v372 = vunpack.c.l.b16 %v322
      %v373 = vunpack.c.h.b16 %v322
      %v374 = vunpack.c.l.b16 %v323
      %v375 = vunpack.c.h.b16 %v323
      %v376 = vpack.c.b16 %v362, %v360
      %v377 = vpack.c.b16 %v363, %v361
      %v378 = vpack.c.b16 %v366, %v364
      %v379 = vpack.c.b16 %v367, %v365
      %v380 = vpack.c.b16 %v370, %v368
      %v381 = vpack.c.b16 %v371, %v369
      %v382 = vpack.c.b16 %v374, %v372
      %v383 = vpack.c.b16 %v375, %v373
      %v412 = vunpack.c.l.b16 %v324
      %v413 = vunpack.c.l.b16 %v325
      %v414 = vunpack.c.l.b16 %v326
      %v415 = vunpack.c.l.b16 %v327
      %v416 = vunpack.c.l.b16 %v328
      %v417 = vunpack.c.l.b16 %v329
      %v418 = vunpack.c.l.b16 %v330
      %v419 = vunpack.c.l.b16 %v331
      %v420 = vunpack.c.l.b16 %v332
      %v421 = vunpack.c.l.b16 %v333
      %v422 = vunpack.c.l.b16 %v334
      %v423 = vunpack.c.l.b16 %v335
      %v424 = vunpack.c.l.b16 %v336
      %v425 = vunpack.c.l.b16 %v337
      %v426 = vunpack.c.l.b16 %v338
      %v427 = vunpack.c.l.b16 %v339
      %v428 = vunpack.c.l.b16 %v340
      %v429 = vunpack.c.l.b16 %v341
      %v430 = vunpack.c.l.b16 %v342
      %v431 = vunpack.c.l.b16 %v343
      %v432 = vunpack.c.l.b16 %v344
      %v433 = vunpack.c.l.b16 %v345
      %v434 = vunpack.c.l.b16 %v346
      %v435 = vunpack.c.l.b16 %v347
      %v436 = vpack.c.b16 %v413, %v412
      %v437 = vpack.c.b16 %v415, %v414
      %v438 = vpack.c.b16 %v417, %v416
      %v439 = vpack.c.b16 %v419, %v418
      %v440 = vpack.c.b16 %v421, %v420
      %v441 = vpack.c.b16 %v423, %v422
      %v442 = vpack.c.b16 %v425, %v424
      %v443 = vpack.c.b16 %v427, %v426
      %v444 = vpack.c.b16 %v429, %v428
      %v445 = vpack.c.b16 %v431, %v430
      %v446 = vpack.c.b16 %v433, %v432
      %v447 = vpack.c.b16 %v435, %v434
      %vm460 = vcmask 523264
      %v462 = vsel %vm460, %v377, 0
      %v465 = vsel %vm460, %v379, 0
      %v468 = vsel %vm460, %v381, 0
      %v471 = vsel %vm460, %v383, 0
      %473 = vmatpush.bf16.msra.mxu0 %v443
      %474 = vmatpush.bf16.msra.mxu0 %v442
      %475 = vmatpush.bf16.msra.mxu0 %v441
      %476 = vmatpush.bf16.msra.mxu0 %v440
      %477 = vmatpush.bf16.msra.mxu0 %v439
      %478 = vmatpush.bf16.msra.mxu0 %v438
      %479 = vmatpush.bf16.msra.mxu0 %v437
      %480 = vmatpush.bf16.msra.mxu0 %v436
      %481 = vmatmul.bf16.gmra.mxu0 %v376
      %v482 = vpop.f32.mrf.mxu0
      %v483 = vadd.f32 %v350, %v482
      %v484 = vpop.f32.mrf.mxu0
      %v485 = vadd.f32 %v350, %v484
      %486 = vmatmul.bf16.gmra.mxu0 %v378
      %v487 = vpop.f32.mrf.mxu0
      %v488 = vadd.f32 %v350, %v487
      %v489 = vpop.f32.mrf.mxu0
      %v490 = vadd.f32 %v350, %v489
      %491 = vmatmul.bf16.gmra.mxu0 %v380
      %v492 = vpop.f32.mrf.mxu0
      %v493 = vadd.f32 %v350, %v492
      %v494 = vpop.f32.mrf.mxu0
      %v495 = vadd.f32 %v350, %v494
      %496 = vmatmul.bf16.gmra.mxu0 %v382
      %v497 = vpop.f32.mrf.mxu0
      %v498 = vadd.f32 %v350, %v497
      %v499 = vpop.f32.mrf.mxu0
      %v500 = vadd.f32 %v350, %v499
      %501 = vdwg.mxu0
      %502 = vmatpush.bf16.msra.mxu0 0
      %503 = vmatpush.bf16.msra.mxu0 0
      %504 = vmatpush.bf16.msra.mxu0 0
      %505 = vmatpush.bf16.msra.mxu0 0
      %506 = vmatpush.bf16.msra.mxu0 %v447
      %507 = vmatpush.bf16.msra.mxu0 %v446
      %508 = vmatpush.bf16.msra.mxu0 %v445
      %509 = vmatpush.bf16.msra.mxu0 %v444
      %510 = vmatmul.bf16.gmra.mxu0 %v462
      %v511 = vpop.f32.mrf.mxu0
      %v512 = vadd.f32 %v483, %v511
      %v513 = vpop.f32.mrf.mxu0
      %v514 = vadd.f32 %v485, %v513
      %515 = vmatmul.bf16.gmra.mxu0 %v465
      %v516 = vpop.f32.mrf.mxu0
      %v517 = vadd.f32 %v488, %v516
      %v518 = vpop.f32.mrf.mxu0
      %v519 = vadd.f32 %v490, %v518
      %520 = vmatmul.bf16.gmra.mxu0 %v468
      %v521 = vpop.f32.mrf.mxu0
      %v522 = vadd.f32 %v493, %v521
      %v523 = vpop.f32.mrf.mxu0
      %v524 = vadd.f32 %v495, %v523
      %525 = vmatmul.bf16.gmra.mxu0 %v471
      %v526 = vpop.f32.mrf.mxu0
      %v527 = vadd.f32 %v498, %v526
      %v528 = vpop.f32.mrf.mxu0
      %v529 = vadd.f32 %v500, %v528
      %530 = vdwg.mxu0
      %v531 = vmax.f32 %v512, 0.0
      %v532 = vmax.f32 %v514, 0.0
      %v533 = vmax.f32 %v517, 0.0
      %v534 = vmax.f32 %v519, 0.0
      %v535 = vmax.f32 %v522, 0.0
      %v536 = vmax.f32 %v524, 0.0
      %v537 = vmax.f32 %v527, 0.0
      %v538 = vmax.f32 %v529, 0.0
      %v539 = vld [vmem:[%s3] sm:$0xf]
      %v540 = vld [vmem:[%s3 + $0x4] sm:$0xf]
      %v541 = vld [vmem:[%s3 + $0x8] sm:$0xf]
      %v542 = vld [vmem:[%s3 + $0xc] sm:$0xf]
      %v543 = vld [vmem:[%s3 + $0x10] sm:$0xf]
      %v544 = vld [vmem:[%s3 + $0x14] sm:$0xf]
      %v545 = vld [vmem:[%s3 + $0x18] sm:$0xf]
      %v546 = vld [vmem:[%s3 + $0x1c] sm:$0xf]
      %v547 = vld [vmem:[%s3 + $0x20] sm:$0xf]
      %v548 = vld [vmem:[%s3 + $0x24] sm:$0xf]
      %v549 = vld [vmem:[%s3 + $0x28] sm:$0xf]
      %v550 = vld [vmem:[%s3 + $0x2c] sm:$0xf]
      %v551 = vld [vmem:[%s3 + $0x30] sm:$0xf]
      %v552 = vld [vmem:[%s3 + $0x34] sm:$0xf]
      %v553 = vld [vmem:[%s3 + $0x38] sm:$0xf]
      %v554 = vld [vmem:[%s3 + $0x3c] sm:$0xf]
      %v555 = vld [vmem:[%s3 + $0x40] sm:$0xf]
      %v556 = vld [vmem:[%s3 + $0x44] sm:$0xf]
      %v557 = vld [vmem:[%s3 + $0x48] sm:$0xf]
      %v558 = vld [vmem:[%s3 + $0x4c] sm:$0xf]
      %v559 = vld [vmem:[%s3 + $0x50] sm:$0xf]
      %v560 = vld [vmem:[%s3 + $0x54] sm:$0xf]
      %v561 = vld [vmem:[%s3 + $0x58] sm:$0xf]
      %v562 = vld [vmem:[%s3 + $0x5c] sm:$0xf]
      %v563 = vld [vmem:[%s4] sm:$0x1]
      %v565 = vperm.slane %v563, 0
      %v591 = vunpack.c.l.b16 %v539
      %v592 = vunpack.c.l.b16 %v540
      %v593 = vunpack.c.l.b16 %v541
      %v594 = vunpack.c.l.b16 %v542
      %v595 = vunpack.c.l.b16 %v543
      %v596 = vunpack.c.l.b16 %v544
      %v597 = vunpack.c.l.b16 %v545
      %v598 = vunpack.c.l.b16 %v546
      %v599 = vunpack.c.l.b16 %v547
      %v600 = vunpack.c.l.b16 %v548
      %v601 = vunpack.c.l.b16 %v549
      %v602 = vunpack.c.l.b16 %v550
      %v603 = vunpack.c.l.b16 %v551
      %v604 = vunpack.c.l.b16 %v552
      %v605 = vunpack.c.l.b16 %v553
      %v606 = vunpack.c.l.b16 %v554
      %v607 = vunpack.c.l.b16 %v555
      %v608 = vunpack.c.l.b16 %v556
      %v609 = vunpack.c.l.b16 %v557
      %v610 = vunpack.c.l.b16 %v558
      %v611 = vunpack.c.l.b16 %v559
      %v612 = vunpack.c.l.b16 %v560
      %v613 = vunpack.c.l.b16 %v561
      %v614 = vunpack.c.l.b16 %v562
      %v615 = vpack.c.b16 %v592, %v591
      %v616 = vpack.c.b16 %v594, %v593
      %v617 = vpack.c.b16 %v596, %v595
      %v618 = vpack.c.b16 %v598, %v597
      %v619 = vpack.c.b16 %v600, %v599
      %v620 = vpack.c.b16 %v602, %v601
      %v621 = vpack.c.b16 %v604, %v603
      %v622 = vpack.c.b16 %v606, %v605
      %v623 = vpack.c.b16 %v608, %v607
      %v624 = vpack.c.b16 %v610, %v609
      %v625 = vpack.c.b16 %v612, %v611
      %v626 = vpack.c.b16 %v614, %v613
      %639 = vmatpush.bf16.msra.mxu0 %v622
      %640 = vmatpush.bf16.msra.mxu0 %v621
      %641 = vmatpush.bf16.msra.mxu0 %v620
      %642 = vmatpush.bf16.msra.mxu0 %v619
      %643 = vmatpush.bf16.msra.mxu0 %v618
      %644 = vmatpush.bf16.msra.mxu0 %v617
      %645 = vmatpush.bf16.msra.mxu0 %v616
      %646 = vmatpush.bf16.msra.mxu0 %v615
      %647 = vmatmul.bf16.gmra.mxu0 %v376
      %v648 = vpop.f32.mrf.mxu0
      %v649 = vadd.f32 %v565, %v648
      %v650 = vpop.f32.mrf.mxu0
      %v651 = vadd.f32 %v565, %v650
      %652 = vmatmul.bf16.gmra.mxu0 %v378
      %v653 = vpop.f32.mrf.mxu0
      %v654 = vadd.f32 %v565, %v653
      %v655 = vpop.f32.mrf.mxu0
      %v656 = vadd.f32 %v565, %v655
      %657 = vmatmul.bf16.gmra.mxu0 %v380
      %v658 = vpop.f32.mrf.mxu0
      %v659 = vadd.f32 %v565, %v658
      %v660 = vpop.f32.mrf.mxu0
      %v661 = vadd.f32 %v565, %v660
      %662 = vmatmul.bf16.gmra.mxu0 %v382
      %v663 = vpop.f32.mrf.mxu0
      %v664 = vadd.f32 %v565, %v663
      %v665 = vpop.f32.mrf.mxu0
      %v666 = vadd.f32 %v565, %v665
      %667 = vdwg.mxu0
      %668 = vmatpush.bf16.msra.mxu0 0
      %669 = vmatpush.bf16.msra.mxu0 0
      %670 = vmatpush.bf16.msra.mxu0 0
      %671 = vmatpush.bf16.msra.mxu0 0
      %672 = vmatpush.bf16.msra.mxu0 %v626
      %673 = vmatpush.bf16.msra.mxu0 %v625
      %674 = vmatpush.bf16.msra.mxu0 %v624
      %675 = vmatpush.bf16.msra.mxu0 %v623
      %676 = vmatmul.bf16.gmra.mxu0 %v462
      %v677 = vpop.f32.mrf.mxu0
      %v678 = vadd.f32 %v649, %v677
      %v679 = vpop.f32.mrf.mxu0
      %v680 = vadd.f32 %v651, %v679
      %681 = vmatmul.bf16.gmra.mxu0 %v465
      %v682 = vpop.f32.mrf.mxu0
      %v683 = vadd.f32 %v654, %v682
      %v684 = vpop.f32.mrf.mxu0
      %v685 = vadd.f32 %v656, %v684
      %686 = vmatmul.bf16.gmra.mxu0 %v468
      %v687 = vpop.f32.mrf.mxu0
      %v688 = vadd.f32 %v659, %v687
      %v689 = vpop.f32.mrf.mxu0
      %v690 = vadd.f32 %v661, %v689
      %691 = vmatmul.bf16.gmra.mxu0 %v471
      %v692 = vpop.f32.mrf.mxu0
      %v693 = vadd.f32 %v664, %v692
      %v694 = vpop.f32.mrf.mxu0
      %v695 = vadd.f32 %v666, %v694
      %696 = vdwg.mxu0
      %v697 = vmax.f32 %v678, 0.0
      %v698 = vmax.f32 %v680, 0.0
      %v699 = vmax.f32 %v683, 0.0
      %v700 = vmax.f32 %v685, 0.0
      %v701 = vmax.f32 %v688, 0.0
      %v702 = vmax.f32 %v690, 0.0
      %v703 = vmax.f32 %v693, 0.0
      %v704 = vmax.f32 %v695, 0.0
      %v705 = vpack.c.bf16 %v698, %v697
      %v706 = vpack.c.bf16 %v700, %v699
      %v707 = vpack.c.bf16 %v702, %v701
      %v708 = vpack.c.bf16 %v704, %v703
      %v709 = vld [vmem:[%s5] sm:$0xf]
      %v710 = vld [vmem:[%s5 + $0x4] sm:$0xf]
      %v711 = vld [vmem:[%s5 + $0x8] sm:$0xf]
      %v712 = vld [vmem:[%s5 + $0xc] sm:$0xf]
      %v713 = vld [vmem:[%s6] sm:$0x1]
      %v715 = vperm.slane %v713, 0
      %v721 = vunpack.c.l.b16 %v709
      %v722 = vunpack.c.l.b16 %v710
      %v723 = vunpack.c.l.b16 %v711
      %v724 = vunpack.c.l.b16 %v712
      %v725 = vpack.c.b16 %v722, %v721
      %v726 = vpack.c.b16 %v724, %v723
      %vm729 = vcmask 261120
      %v731 = vsel %vm729, %v705, 0
      %v734 = vsel %vm729, %v706, 0
      %v737 = vsel %vm729, %v707, 0
      %v740 = vsel %vm729, %v708, 0
      %742 = vmatpush.bf16.msra.mxu0 0
      %743 = vmatpush.bf16.msra.mxu0 0
      %744 = vmatpush.bf16.msra.mxu0 0
      %745 = vmatpush.bf16.msra.mxu0 0
      %746 = vmatpush.bf16.msra.mxu0 0
      %747 = vmatpush.bf16.msra.mxu0 0
      %748 = vmatpush.bf16.msra.mxu0 %v726
      %749 = vmatpush.bf16.msra.mxu0 %v725
      %750 = vmatmul.bf16.gmra.mxu0 %v731
      %v751 = vpop.f32.mrf.mxu0
      %v752 = vadd.f32 %v715, %v751
      %v753 = vpop.f32.mrf.mxu0
      %v754 = vadd.f32 %v715, %v753
      %755 = vmatmul.bf16.gmra.mxu0 %v734
      %v756 = vpop.f32.mrf.mxu0
      %v757 = vadd.f32 %v715, %v756
      %v758 = vpop.f32.mrf.mxu0
      %v759 = vadd.f32 %v715, %v758
      %760 = vmatmul.bf16.gmra.mxu0 %v737
      %v761 = vpop.f32.mrf.mxu0
      %v762 = vadd.f32 %v715, %v761
      %v763 = vpop.f32.mrf.mxu0
      %v764 = vadd.f32 %v715, %v763
      %765 = vmatmul.bf16.gmra.mxu0 %v740
      %v766 = vpop.f32.mrf.mxu0
      %v767 = vadd.f32 %v715, %v766
      %v768 = vpop.f32.mrf.mxu0
      %v769 = vadd.f32 %v715, %v768
      %770 = vdwg.mxu0
      %v771 = vsel %vm729, %v752, -inf
      %v772 = vsel %vm729, %v754, -inf
      %v773 = vsel %vm729, %v757, -inf
      %v774 = vsel %vm729, %v759, -inf
      %v775 = vsel %vm729, %v762, -inf
      %v776 = vmax.f32 %v771, %v775
      %v777 = vsel %vm729, %v764, -inf
      %v778 = vmax.f32 %v772, %v777
      %v779 = vsel %vm729, %v767, -inf
      %v780 = vmax.f32 %v773, %v779
      %v781 = vsel %vm729, %v769, -inf
      %v782 = vmax.f32 %v774, %v781
      %v783 = vmax.f32 %v776, %v778
      %v784 = vmax.f32 %v780, %v782
      %v785 = vmax.f32 %v783, %v784
      %v786 = vrot.slane %v785, 4
      %v787 = vmax.f32 %v785, %v786
      %v788 = vrot.slane %v787, 2
      %v789 = vmax.f32 %v787, %v788
      %v790 = vrot.slane %v789, 1
      %v791 = vmax.f32 %v789, %v790
      %v792 = vsub.f32 %v752, %v791
      %v793 = vsub.f32 %v754, %v791
      %v794 = vsub.f32 %v757, %v791
      %v795 = vsub.f32 %v759, %v791
      %v796 = vsub.f32 %v762, %v791
      %v797 = vsub.f32 %v764, %v791
      %v798 = vsub.f32 %v767, %v791
      %v799 = vsub.f32 %v769, %v791
      %v800 = vmul.f32 %v792, 1.442695
      %v801 = vpow.pop %v800
      %v802 = vmul.f32 %v793, 1.442695
      %v803 = vpow.pop %v802
      %v804 = vmul.f32 %v794, 1.442695
      %v805 = vpow.pop %v804
      %v806 = vmul.f32 %v795, 1.442695
      %v807 = vpow.pop %v806
      %v808 = vmul.f32 %v796, 1.442695
      %v809 = vpow.pop %v808
      %v810 = vmul.f32 %v797, 1.442695
      %v811 = vpow.pop %v810
      %v812 = vmul.f32 %v798, 1.442695
      %v813 = vpow.pop %v812
      %v814 = vmul.f32 %v799, 1.442695
      %v815 = vpow.pop %v814
      %v816 = vsel %vm729, %v801, 0.0
      %v817 = vsel %vm729, %v803, 0.0
      %v818 = vadd.f32 %v816, %v817
      %v819 = vsel %vm729, %v805, 0.0
      %v820 = vadd.f32 %v818, %v819
      %v821 = vsel %vm729, %v807, 0.0
      %v822 = vadd.f32 %v820, %v821
      %v823 = vsel %vm729, %v809, 0.0
      %v824 = vadd.f32 %v822, %v823
      %v825 = vsel %vm729, %v811, 0.0
      %v826 = vadd.f32 %v824, %v825
      %v827 = vsel %vm729, %v813, 0.0
      %v828 = vadd.f32 %v826, %v827
      %v829 = vsel %vm729, %v815, 0.0
      %v830 = vadd.f32 %v828, %v829
      %v831 = vrot.slane %v830, 4
      %v832 = vadd.f32 %v830, %v831
      %v833 = vrot.slane %v832, 2
      %v834 = vadd.f32 %v832, %v833
      %v835 = vrot.slane %v834, 1
      %v836 = vadd.f32 %v834, %v835
      %v837 = vrcp.pop %v836
      %v838 = vmul.f32 %v836, %v837
      %v839 = vsub.f32 1.0, %v838
      %v840 = vmul.f32 %v837, %v839
      %v841 = vadd.f32 %v837, %v840
      %vm842 = vweird.f32 %v836
      %vm843 = vweird.f32 %v837
      %vm844 = vmor %vm842, %vm843
      %v845 = vsel %vm844, %v837, %v841
      %v846 = vand.u32 2147483647, %v836
      %vm847 = vcmp.eq.f32.partialorder %v846, 8.507059e+37
      %v848 = vand.u32 %v836, 2147483648
      %v849 = vor.u32 1.1754944e-38, %v848
      %v850 = vsel %vm847, %v849, %v845
      %v851 = vmul.f32 %v801, %v850
      %v852 = vmul.f32 %v803, %v850
      %v853 = vmul.f32 %v805, %v850
      %v854 = vmul.f32 %v807, %v850
      %v855 = vmul.f32 %v809, %v850
      %v856 = vmul.f32 %v811, %v850
      %v857 = vmul.f32 %v813, %v850
      %v858 = vmul.f32 %v815, %v850
      %v859 = vpack.c.bf16 %v852, %v851
      %v860 = vpack.c.bf16 %v854, %v853
      %v861 = vpack.c.bf16 %v856, %v855
      %v862 = vpack.c.bf16 %v858, %v857
      %v863 = vpack.c.bf16 %v532, %v531
      %v864 = vpack.c.bf16 %v534, %v533
      %v865 = vpack.c.bf16 %v536, %v535
      %v866 = vpack.c.bf16 %v538, %v537
      %867 = vxpose.xlu0.c.b16.start [1/8] %v859, 128
      %868 = vxpose.xlu0.c.b16.cont [2/8] %v860, 128
      %869 = vxpose.xlu0.c.b16.cont [3/8] %v861, 128
      %870 = vxpose.xlu0.c.b16.cont [4/8] %v862, 128
      %871 = vxpose.xlu0.c.b16.cont [5/8] 0, 128
      %872 = vxpose.xlu0.c.b16.cont [6/8] 0, 128
      %873 = vxpose.xlu0.c.b16.cont [7/8] 0, 128
      %874 = vxpose.xlu0.c.b16.end [8/8] 0, 128
      %v875 = vpop.trf.xlu0
      %v876 = vpop.trf.xlu0
      %v877 = vpop.trf.xlu0
      %v878 = vpop.trf.xlu0
      %v879 = vpop.trf.xlu0
      %v880 = vpop.trf.xlu0
      %v881 = vpop.trf.xlu0
      %v882 = vpop.trf.xlu0
      %v884 = vsel %vm460, %v875, 0
      %v887 = vsel %vm460, %v876, 0
      %889 = vmatpush.bf16.msra.mxu0 0
      %890 = vmatpush.bf16.msra.mxu0 0
      %891 = vmatpush.bf16.msra.mxu0 0
      %892 = vmatpush.bf16.msra.mxu0 0
      %893 = vmatpush.bf16.msra.mxu0 %v866
      %894 = vmatpush.bf16.msra.mxu0 %v865
      %895 = vmatpush.bf16.msra.mxu0 %v864
      %896 = vmatpush.bf16.msra.mxu0 %v863
      %897 = vmatmul.bf16.gmra.mxu0 %v884
      %v898 = vpop.f32.mrf.mxu0
      %v899 = vadd.f32 0.0, %v898
      %v900 = vpop.f32.mrf.mxu0
      %v901 = vadd.f32 0.0, %v900
      %902 = vmatmul.bf16.gmra.mxu0 %v887
      %v903 = vpop.f32.mrf.mxu0
      %v904 = vadd.f32 0.0, %v903
      %v905 = vpop.f32.mrf.mxu0
      %v906 = vadd.f32 0.0, %v905
      %907 = vdwg.mxu0
      %v908 = vmul.f32 %v899, 0.17677669
      %v909 = vmul.f32 %v901, 0.17677669
      %v910 = vmul.f32 %v904, 0.17677669
      %v911 = vmul.f32 %v906, 0.17677669
      %v912 = vpack.c.bf16 %v908, %v908
      %v913 = vpack.c.bf16 %v909, %v909
      %v914 = vpack.c.bf16 %v910, %v910
      %v915 = vpack.c.bf16 %v911, %v911
      %916 = vst [vmem:[%s311] sm:$0xf] %v912
      %917 = vst [vmem:[%s311 + $0x4] sm:$0xf] %v913
      %918 = vst [vmem:[%s311 + $0x8] sm:$0xf] %v914
      %919 = vst [vmem:[%s311 + $0xc] sm:$0xf] %v915
      %v920 = vadd.f32 %v531, %v532
      %v921 = vadd.f32 %v920, %v533
      %v922 = vadd.f32 %v921, %v534
      %v923 = vadd.f32 %v922, %v535
      %v924 = vadd.f32 %v923, %v536
      %v925 = vadd.f32 %v924, %v537
      %v926 = vadd.f32 %v925, %v538
      %v927 = vrot.slane %v926, 4
      %v928 = vadd.f32 %v926, %v927
      %v929 = vrot.slane %v928, 2
      %v930 = vadd.f32 %v928, %v929
      %v931 = vrot.slane %v930, 1
      %v932 = vadd.f32 %v930, %v931
      %v933 = vmul.f32 %v932, 0.015625
      %934 = vst [vmem:[%s314] sm:$0x1] %v933
      %p935 = scmp.lt.s32.totalorder %s20, 1
      %s936 = scalar_select %p935, %s20, 1
      %s937 = smul.addr %s936, 4
      %s938 = smul.addr %s937, 4
      %s939 = scalar_lea.vmem %s7, %s938
      %p940 = scmp.lt.s32.totalorder %s20, 1
      %s941 = scalar_select %p940, %s20, 1
      %s942 = scalar_lea.vmem %s8, %s941
      // Predicated region
      $region49: #{hgd_forward.2} parent=47 // pred_check
        %p943 = pneg %p190
      $region50: #{hgd_forward.2} parent=47 // pred_check_branch
        %945 = sbr.rel (%p943) target = $region52
      $region51: #{hgd_forward.2} parent=47 // pred_region
        _
      $region52: #{hgd_forward.2} parent=47 // pred_fallthru
        _
      // Predicated region
      $region53: #{hgd_forward.2} parent=47 // pred_check
        %p946 = pneg %p216
      $region54: #{hgd_forward.2} parent=47 // pred_check_branch
        %948 = sbr.rel (%p946) target = $region56
      $region55: #{hgd_forward.2} parent=47 // pred_region
        _
      $region56: #{hgd_forward.2} parent=47 // pred_fallthru
        _
    $region48: #{hgd_forward.2} parent=5 // pred_fallthru
      _
    %p949 = scmp.le.s32.totalorder 2, %s15
    // Predicated region
    $region57: #{hgd_forward.2} parent=5 // pred_check
      %p950 = pneg %p949
    $region58: #{hgd_forward.2} parent=5 // pred_check_branch
      %952 = sbr.rel (%p950) target = $region60
    $region59: #{hgd_forward.2} parent=5 // pred_region
      %s953 = ssub.s32 %s15, 2
      // Predicated region
      $region61: #{hgd_forward.2} parent=59 // pred_check
        %p954 = pneg %p196
      $region62: #{hgd_forward.2} parent=59 // pred_check_branch
        %956 = sbr.rel (%p954) target = $region64
      $region63: #{hgd_forward.2} parent=59 // pred_region
        %p957 = scmp.lt.s32.totalorder %s21, 1
        %s958 = scalar_select %p957, %s21, 1
        %s959 = smul.addr %s958, 4
        %s960 = smul.addr %s959, 4
        %s961 = scalar_lea.vmem %s7, %s960
      $region64: #{hgd_forward.2} parent=59 // pred_fallthru
        _
      // Predicated region
      $region65: #{hgd_forward.2} parent=59 // pred_check
        %p962 = pneg %p222
      $region66: #{hgd_forward.2} parent=59 // pred_check_branch
        %964 = sbr.rel (%p962) target = $region68
      $region67: #{hgd_forward.2} parent=59 // pred_region
        %p965 = scmp.lt.s32.totalorder %s21, 1
        %s966 = scalar_select %p965, %s21, 1
        %s967 = scalar_lea.vmem %s8, %s966
      $region68: #{hgd_forward.2} parent=59 // pred_fallthru
        _
    $region60: #{hgd_forward.2} parent=5 // pred_fallthru
      _
  $region6: #{hgd_forward.2} parent=0 // loop_footer
    %s19 = sadd.s32 1, %s15
  $region7: #{hgd_forward.2} parent=0 // loop_footer_branch
    %14 = sbr.rel target = $region3
  $region8: #{hgd_forward.2} parent=0 // loop_exit
    _

// kernel: hgd_forward.3
$region0: #{hgd_forward.3}
  #allocation0 [shape = 'u32[]', space=smem, size = 0x4, offset = 0x4, fixed_abs, tag = 'smem constant byte address 0x4 - core index']
  #allocation1 [shape = 'u32[72,128]{1,0:T(1,128)}', space=vmem, size = 0x9000, scoped, tag = 'internal scratch']
  %s0 = inlined_call_operand.vmem [shape: bf16[2,1024,192], index: 0, kind: input, shape index: {}]
  %s1 = inlined_call_operand.vmem [shape: f32[2,1,128], index: 1, kind: input, shape index: {}]
  %s2 = inlined_call_operand.vmem [shape: bf16[2,32,128], index: 2, kind: input, shape index: {}]
  %s3 = inlined_call_operand.vmem [shape: bf16[192,128], index: 3, kind: input, shape index: {}]
  %s4 = inlined_call_operand.vmem [shape: f32[1,128], index: 4, kind: input, shape index: {}]
  %s5 = inlined_call_operand.vmem [shape: bf16[128,32], index: 5, kind: input, shape index: {}]
  %s6 = inlined_call_operand.vmem [shape: f32[1,32], index: 6, kind: input, shape index: {}]
  %s7 = inlined_call_operand.vmem [shape: bf16[32,32], index: 7, kind: input, shape index: {}]
  %s8 = inlined_call_operand.vmem [shape: f32[1,32], index: 8, kind: input, shape index: {}]
  %s9 = inlined_call_operand.vmem [shape: bf16[128,128], index: 9, kind: input, shape index: {}]
  %s10 = inlined_call_operand.vmem [shape: bf16[128,128], index: 10, kind: input, shape index: {}]
  %s11 = inlined_call_operand.vmem [shape: f32[1,128], index: 11, kind: input, shape index: {}]
  %s12 = inlined_call_operand.hbm [shape: f32[2,1024,128], index: 12, kind: output, shape index: {}]
  %s13 = sld [smem:[#allocation0]]
  $region81: #{hgd_forward.3} parent=0
    _
  %s15 = ssub.s32 1, %s13
  %s16 = scalar_select 0, %s15, %s13
  $region1: #{hgd_forward.3} parent=0
    #allocation2 [shape = 'u8[524288]{0}', space=vmem, size = 0x80000, scoped, tag = 'output window, operand 0']
    #allocation3 [shape = 's32[2]{0}', space=sflag, size = 0x8, scoped, tag = 'scoped memory for hgd_forward.3']
    %17 = vsyncpa [#allocation3], 0
    %s18 = scalar_lea.sflag [#allocation3], 1
    %19 = vsyncpa %s18, 0
    loop: start=0, step=1, limit=6
    $region2: #{hgd_forward.3} parent=1 // loop_pre_header
      _
    $region3: #{hgd_forward.3} parent=1 // loop_header
      %s21 = sphi 0, %s25
      %p22 = scmp.ge.s32.totalorder %s21, 6
      %s28 = sphi 0, %s40
      %s29 = sphi 0, %s36
      %s30 = sphi 0, %s28
      %s31 = sphi 0, %s29
      %s32 = sphi 0, %s30
      %s33 = sphi 0, %s31
      %s45 = sphi 0, %s47
      %s48 = sphi 0, %s45
      %s49 = sphi 0, %s48
      %s65 = sphi 0, %s49
      %s71 = sphi 0, %s73
      %s74 = sphi 0, %s71
      %s75 = sphi 0, %s74
      %s91 = sphi 0, %s75
      %s97 = sphi 0, %s99
      %s100 = sphi 0, %s97
      %s101 = sphi 0, %s100
      %s117 = sphi 0, %s101
      %s121 = sphi 0, %s121
      %s123 = sphi 0, %s121
      %s124 = sphi 0, %s123
      %s138 = sphi 0, %s124
      %s142 = sphi 0, %s142
      %s144 = sphi 0, %s142
      %s145 = sphi 0, %s144
      %s159 = sphi 0, %s145
      %s163 = sphi 0, %s163
      %s165 = sphi 0, %s163
      %s166 = sphi 0, %s165
      %s180 = sphi 0, %s166
      %s184 = sphi 0, %s184
      %s186 = sphi 0, %s184
      %s187 = sphi 0, %s186
      %s201 = sphi 0, %s187
      %s205 = sphi 0, %s205
      %s207 = sphi 0, %s205
      %s208 = sphi 0, %s207
      %s222 = sphi 0, %s208
      %s226 = sphi 0, %s226
      %s228 = sphi 0, %s226
      %s229 = sphi 0, %s228
      %s243 = sphi 0, %s229
      %s247 = sphi 0, %s247
      %s249 = sphi 0, %s247
      %s250 = sphi 0, %s249
      %s264 = sphi 0, %s250
      %s268 = sphi 0, %s268
      %s270 = sphi 0, %s268
      %s271 = sphi 0, %s270
      %s285 = sphi 0, %s271
      %s289 = sphi 0, %s289
      %s291 = sphi 0, %s289
      %s292 = sphi 0, %s291
      %s306 = sphi 0, %s292
      %s314 = sphi 0, %s316
      %s317 = sphi 0, %s314
      %s318 = sphi 0, %s317
      %s334 = sphi 0, %s318
    $region4: #{hgd_forward.3} parent=1 // loop_header_branch
      %24 = sbr.rel (%p22) target = $region8
    $region5: #{hgd_forward.3} parent=1 // loop_body
      %s26 = ssub.s32 %s21, 1
      %s27 = ssub.s32 %s21, 2
      %s34 = sadd.s32 1, %s29
      %p35 = scmp.ge.s32.totalorder %s34, 2
      %s36 = scalar_select %p35, 0, %s34
      %s37 = sadd.s32 1, %s28
      %s38 = scalar_select %p35, %s37, %s28
      %p39 = scmp.ge.s32.totalorder %s38, 2
      %s40 = scalar_select %p39, 0, %s38
      %s41 = ssub.s32 %s28, %s40
      %s42 = ssub.s32 %s29, %s36
      %s43 = sor.u32 %s41, %s42
      %p44 = scmp.eq.s32.totalorder %s43, 0
      %s46 = sadd.s32 %s45, 1
      %s47 = scalar_select %p44, %s45, %s46
      %p50 = pneg %p44
      %p51 = scmp.eq.s32.totalorder %s21, 3
      %p52 = por %p50, %p51
      %p53 = scmp.ne.s32.totalorder %s45, %s48
      %p54 = scmp.eq.s32.totalorder %s21, 0
      %p55 = por %p53, %p54
      %p56 = scmp.ne.s32.totalorder %s45, %s48
      %p57 = scmp.eq.s32.totalorder %s26, 3
      %p58 = por %p56, %p57
      %p59 = scmp.ne.s32.totalorder %s48, %s49
      %p60 = scmp.eq.s32.totalorder %s26, 0
      %p61 = por %p59, %p60
      %p62 = scmp.ne.s32.totalorder %s48, %s49
      %p63 = scmp.eq.s32.totalorder %s27, 3
      %p64 = por %p62, %p63
      %p66 = scmp.ne.s32.totalorder %s49, %s65
      %p67 = scmp.eq.s32.totalorder %s27, 0
      %p68 = por %p66, %p67
      %s69 = ssub.s32 %s28, %s40
      %p70 = scmp.eq.s32.totalorder %s69, 0
      %s72 = sadd.s32 %s71, 1
      %s73 = scalar_select %p70, %s71, %s72
      %p76 = pneg %p70
      %p77 = scmp.eq.s32.totalorder %s21, 3
      %p78 = por %p76, %p77
      %p79 = scmp.ne.s32.totalorder %s71, %s74
      %p80 = scmp.eq.s32.totalorder %s21, 0
      %p81 = por %p79, %p80
      %p82 = scmp.ne.s32.totalorder %s71, %s74
      %p83 = scmp.eq.s32.totalorder %s26, 3
      %p84 = por %p82, %p83
      %p85 = scmp.ne.s32.totalorder %s74, %s75
      %p86 = scmp.eq.s32.totalorder %s26, 0
      %p87 = por %p85, %p86
      %p88 = scmp.ne.s32.totalorder %s74, %s75
      %p89 = scmp.eq.s32.totalorder %s27, 3
      %p90 = por %p88, %p89
      %p92 = scmp.ne.s32.totalorder %s75, %s91
      %p93 = scmp.eq.s32.totalorder %s27, 0
      %p94 = por %p92, %p93
      %s95 = ssub.s32 %s28, %s40
      %p96 = scmp.eq.s32.totalorder %s95, 0
      %s98 = sadd.s32 %s97, 1
      %s99 = scalar_select %p96, %s97, %s98
      %p102 = pneg %p96
      %p103 = scmp.eq.s32.totalorder %s21, 3
      %p104 = por %p102, %p103
      %p105 = scmp.ne.s32.totalorder %s97, %s100
      %p106 = scmp.eq.s32.totalorder %s21, 0
      %p107 = por %p105, %p106
      %p108 = scmp.ne.s32.totalorder %s97, %s100
      %p109 = scmp.eq.s32.totalorder %s26, 3
      %p110 = por %p108, %p109
      %p111 = scmp.ne.s32.totalorder %s100, %s101
      %p112 = scmp.eq.s32.totalorder %s26, 0
      %p113 = por %p111, %p112
      %p114 = scmp.ne.s32.totalorder %s100, %s101
      %p115 = scmp.eq.s32.totalorder %s27, 3
      %p116 = por %p114, %p115
      %p118 = scmp.ne.s32.totalorder %s101, %s117
      %p119 = scmp.eq.s32.totalorder %s27, 0
      %p120 = por %p118, %p119
      %s122 = sadd.s32 %s121, 1
      %p125 = scmp.eq.s32.totalorder %s21, 3
      %p126 = scmp.ne.s32.totalorder %s121, %s123
      %p127 = scmp.eq.s32.totalorder %s21, 0
      %p128 = por %p126, %p127
      %p129 = scmp.ne.s32.totalorder %s121, %s123
      %p130 = scmp.eq.s32.totalorder %s26, 3
      %p131 = por %p129, %p130
      %p132 = scmp.ne.s32.totalorder %s123, %s124
      %p133 = scmp.eq.s32.totalorder %s26, 0
      %p134 = por %p132, %p133
      %p135 = scmp.ne.s32.totalorder %s123, %s124
      %p136 = scmp.eq.s32.totalorder %s27, 3
      %p137 = por %p135, %p136
      %p139 = scmp.ne.s32.totalorder %s124, %s138
      %p140 = scmp.eq.s32.totalorder %s27, 0
      %p141 = por %p139, %p140
      %s143 = sadd.s32 %s142, 1
      %p146 = scmp.eq.s32.totalorder %s21, 3
      %p147 = scmp.ne.s32.totalorder %s142, %s144
      %p148 = scmp.eq.s32.totalorder %s21, 0
      %p149 = por %p147, %p148
      %p150 = scmp.ne.s32.totalorder %s142, %s144
      %p151 = scmp.eq.s32.totalorder %s26, 3
      %p152 = por %p150, %p151
      %p153 = scmp.ne.s32.totalorder %s144, %s145
      %p154 = scmp.eq.s32.totalorder %s26, 0
      %p155 = por %p153, %p154
      %p156 = scmp.ne.s32.totalorder %s144, %s145
      %p157 = scmp.eq.s32.totalorder %s27, 3
      %p158 = por %p156, %p157
      %p160 = scmp.ne.s32.totalorder %s145, %s159
      %p161 = scmp.eq.s32.totalorder %s27, 0
      %p162 = por %p160, %p161
      %s164 = sadd.s32 %s163, 1
      %p167 = scmp.eq.s32.totalorder %s21, 3
      %p168 = scmp.ne.s32.totalorder %s163, %s165
      %p169 = scmp.eq.s32.totalorder %s21, 0
      %p170 = por %p168, %p169
      %p171 = scmp.ne.s32.totalorder %s163, %s165
      %p172 = scmp.eq.s32.totalorder %s26, 3
      %p173 = por %p171, %p172
      %p174 = scmp.ne.s32.totalorder %s165, %s166
      %p175 = scmp.eq.s32.totalorder %s26, 0
      %p176 = por %p174, %p175
      %p177 = scmp.ne.s32.totalorder %s165, %s166
      %p178 = scmp.eq.s32.totalorder %s27, 3
      %p179 = por %p177, %p178
      %p181 = scmp.ne.s32.totalorder %s166, %s180
      %p182 = scmp.eq.s32.totalorder %s27, 0
      %p183 = por %p181, %p182
      %s185 = sadd.s32 %s184, 1
      %p188 = scmp.eq.s32.totalorder %s21, 3
      %p189 = scmp.ne.s32.totalorder %s184, %s186
      %p190 = scmp.eq.s32.totalorder %s21, 0
      %p191 = por %p189, %p190
      %p192 = scmp.ne.s32.totalorder %s184, %s186
      %p193 = scmp.eq.s32.totalorder %s26, 3
      %p194 = por %p192, %p193
      %p195 = scmp.ne.s32.totalorder %s186, %s187
      %p196 = scmp.eq.s32.totalorder %s26, 0
      %p197 = por %p195, %p196
      %p198 = scmp.ne.s32.totalorder %s186, %s187
      %p199 = scmp.eq.s32.totalorder %s27, 3
      %p200 = por %p198, %p199
      %p202 = scmp.ne.s32.totalorder %s187, %s201
      %p203 = scmp.eq.s32.totalorder %s27, 0
      %p204 = por %p202, %p203
      %s206 = sadd.s32 %s205, 1
      %p209 = scmp.eq.s32.totalorder %s21, 3
      %p210 = scmp.ne.s32.totalorder %s205, %s207
      %p211 = scmp.eq.s32.totalorder %s21, 0
      %p212 = por %p210, %p211
      %p213 = scmp.ne.s32.totalorder %s205, %s207
      %p214 = scmp.eq.s32.totalorder %s26, 3
      %p215 = por %p213, %p214
      %p216 = scmp.ne.s32.totalorder %s207, %s208
      %p217 = scmp.eq.s32.totalorder %s26, 0
      %p218 = por %p216, %p217
      %p219 = scmp.ne.s32.totalorder %s207, %s208
      %p220 = scmp.eq.s32.totalorder %s27, 3
      %p221 = por %p219, %p220
      %p223 = scmp.ne.s32.totalorder %s208, %s222
      %p224 = scmp.eq.s32.totalorder %s27, 0
      %p225 = por %p223, %p224
      %s227 = sadd.s32 %s226, 1
      %p230 = scmp.eq.s32.totalorder %s21, 3
      %p231 = scmp.ne.s32.totalorder %s226, %s228
      %p232 = scmp.eq.s32.totalorder %s21, 0
      %p233 = por %p231, %p232
      %p234 = scmp.ne.s32.totalorder %s226, %s228
      %p235 = scmp.eq.s32.totalorder %s26, 3
      %p236 = por %p234, %p235
      %p237 = scmp.ne.s32.totalorder %s228, %s229
      %p238 = scmp.eq.s32.totalorder %s26, 0
      %p239 = por %p237, %p238
      %p240 = scmp.ne.s32.totalorder %s228, %s229
      %p241 = scmp.eq.s32.totalorder %s27, 3
      %p242 = por %p240, %p241
      %p244 = scmp.ne.s32.totalorder %s229, %s243
      %p245 = scmp.eq.s32.totalorder %s27, 0
      %p246 = por %p244, %p245
      %s248 = sadd.s32 %s247, 1
      %p251 = scmp.eq.s32.totalorder %s21, 3
      %p252 = scmp.ne.s32.totalorder %s247, %s249
      %p253 = scmp.eq.s32.totalorder %s21, 0
      %p254 = por %p252, %p253
      %p255 = scmp.ne.s32.totalorder %s247, %s249
      %p256 = scmp.eq.s32.totalorder %s26, 3
      %p257 = por %p255, %p256
      %p258 = scmp.ne.s32.totalorder %s249, %s250
      %p259 = scmp.eq.s32.totalorder %s26, 0
      %p260 = por %p258, %p259
      %p261 = scmp.ne.s32.totalorder %s249, %s250
      %p262 = scmp.eq.s32.totalorder %s27, 3
      %p263 = por %p261, %p262
      %p265 = scmp.ne.s32.totalorder %s250, %s264
      %p266 = scmp.eq.s32.totalorder %s27, 0
      %p267 = por %p265, %p266
      %s269 = sadd.s32 %s268, 1
      %p272 = scmp.eq.s32.totalorder %s21, 3
      %p273 = scmp.ne.s32.totalorder %s268, %s270
      %p274 = scmp.eq.s32.totalorder %s21, 0
      %p275 = por %p273, %p274
      %p276 = scmp.ne.s32.totalorder %s268, %s270
      %p277 = scmp.eq.s32.totalorder %s26, 3
      %p278 = por %p276, %p277
      %p279 = scmp.ne.s32.totalorder %s270, %s271
      %p280 = scmp.eq.s32.totalorder %s26, 0
      %p281 = por %p279, %p280
      %p282 = scmp.ne.s32.totalorder %s270, %s271
      %p283 = scmp.eq.s32.totalorder %s27, 3
      %p284 = por %p282, %p283
      %p286 = scmp.ne.s32.totalorder %s271, %s285
      %p287 = scmp.eq.s32.totalorder %s27, 0
      %p288 = por %p286, %p287
      %s290 = sadd.s32 %s289, 1
      %p293 = scmp.eq.s32.totalorder %s21, 3
      %p294 = scmp.ne.s32.totalorder %s289, %s291
      %p295 = scmp.eq.s32.totalorder %s21, 0
      %p296 = por %p294, %p295
      %p297 = scmp.ne.s32.totalorder %s289, %s291
      %p298 = scmp.eq.s32.totalorder %s26, 3
      %p299 = por %p297, %p298
      %p300 = scmp.ne.s32.totalorder %s291, %s292
      %p301 = scmp.eq.s32.totalorder %s26, 0
      %p302 = por %p300, %p301
      %p303 = scmp.ne.s32.totalorder %s291, %s292
      %p304 = scmp.eq.s32.totalorder %s27, 3
      %p305 = por %p303, %p304
      %p307 = scmp.ne.s32.totalorder %s292, %s306
      %p308 = scmp.eq.s32.totalorder %s27, 0
      %p309 = por %p307, %p308
      %s310 = ssub.s32 %s28, %s40
      %s311 = ssub.s32 %s29, %s36
      %s312 = sor.u32 %s310, %s311
      %p313 = scmp.eq.s32.totalorder %s312, 0
      %s315 = sadd.s32 %s314, 1
      %s316 = scalar_select %p313, %s314, %s315
      %p319 = pneg %p313
      %p320 = scmp.eq.s32.totalorder %s21, 3
      %p321 = por %p319, %p320
      %p322 = scmp.ne.s32.totalorder %s314, %s317
      %p323 = scmp.eq.s32.totalorder %s21, 0
      %p324 = por %p322, %p323
      %p325 = scmp.ne.s32.totalorder %s314, %s317
      %p326 = scmp.eq.s32.totalorder %s26, 3
      %p327 = por %p325, %p326
      %p328 = scmp.ne.s32.totalorder %s317, %s318
      %p329 = scmp.eq.s32.totalorder %s26, 0
      %p330 = por %p328, %p329
      %p331 = scmp.ne.s32.totalorder %s317, %s318
      %p332 = scmp.eq.s32.totalorder %s27, 3
      %p333 = por %p331, %p332
      %p335 = scmp.ne.s32.totalorder %s318, %s334
      %p336 = scmp.eq.s32.totalorder %s27, 0
      %p337 = por %p335, %p336
      %p338 = scmp.le.s32.totalorder 1, %s21
      %p339 = scmp.lt.s32.totalorder %s21, 5
      %p340 = pnand %p338, %p339
      %p341 = pneg %p340
      // Predicated region
      $region9: #{hgd_forward.3} parent=5 // pred_check
        _
      $region10: #{hgd_forward.3} parent=5 // pred_check_branch
        %343 = sbr.rel (%p340) target = $region12
      $region11: #{hgd_forward.3} parent=5 // pred_region
        %s344 = ssub.s32 %s21, 1
        // Predicated region
        $region13: #{hgd_forward.3} parent=11 // pred_check
          %p345 = pneg %p134
        $region14: #{hgd_forward.3} parent=11 // pred_check_branch
          %347 = sbr.rel (%p345) target = $region16
        $region15: #{hgd_forward.3} parent=11 // pred_region
          _
        $region16: #{hgd_forward.3} parent=11 // pred_fallthru
          _
        // Predicated region
        $region17: #{hgd_forward.3} parent=11 // pred_check
          %p348 = pneg %p155
        $region18: #{hgd_forward.3} parent=11 // pred_check_branch
          %350 = sbr.rel (%p348) target = $region20
        $region19: #{hgd_forward.3} parent=11 // pred_region
          _
        $region20: #{hgd_forward.3} parent=11 // pred_fallthru
          _
        // Predicated region
        $region21: #{hgd_forward.3} parent=11 // pred_check
          %p351 = pneg %p176
        $region22: #{hgd_forward.3} parent=11 // pred_check_branch
          %353 = sbr.rel (%p351) target = $region24
        $region23: #{hgd_forward.3} parent=11 // pred_region
          _
        $region24: #{hgd_forward.3} parent=11 // pred_fallthru
          _
        // Predicated region
        $region25: #{hgd_forward.3} parent=11 // pred_check
          %p354 = pneg %p197
        $region26: #{hgd_forward.3} parent=11 // pred_check_branch
          %356 = sbr.rel (%p354) target = $region28
        $region27: #{hgd_forward.3} parent=11 // pred_region
          _
        $region28: #{hgd_forward.3} parent=11 // pred_fallthru
          _
        // Predicated region
        $region29: #{hgd_forward.3} parent=11 // pred_check
          %p357 = pneg %p218
        $region30: #{hgd_forward.3} parent=11 // pred_check_branch
          %359 = sbr.rel (%p357) target = $region32
        $region31: #{hgd_forward.3} parent=11 // pred_region
          _
        $region32: #{hgd_forward.3} parent=11 // pred_fallthru
          _
        // Predicated region
        $region33: #{hgd_forward.3} parent=11 // pred_check
          %p360 = pneg %p239
        $region34: #{hgd_forward.3} parent=11 // pred_check_branch
          %362 = sbr.rel (%p360) target = $region36
        $region35: #{hgd_forward.3} parent=11 // pred_region
          _
        $region36: #{hgd_forward.3} parent=11 // pred_fallthru
          _
        // Predicated region
        $region37: #{hgd_forward.3} parent=11 // pred_check
          %p363 = pneg %p260
        $region38: #{hgd_forward.3} parent=11 // pred_check_branch
          %365 = sbr.rel (%p363) target = $region40
        $region39: #{hgd_forward.3} parent=11 // pred_region
          _
        $region40: #{hgd_forward.3} parent=11 // pred_fallthru
          _
        // Predicated region
        $region41: #{hgd_forward.3} parent=11 // pred_check
          %p366 = pneg %p281
        $region42: #{hgd_forward.3} parent=11 // pred_check_branch
          %368 = sbr.rel (%p366) target = $region44
        $region43: #{hgd_forward.3} parent=11 // pred_region
          _
        $region44: #{hgd_forward.3} parent=11 // pred_fallthru
          _
        // Predicated region
        $region45: #{hgd_forward.3} parent=11 // pred_check
          %p369 = pneg %p302
        $region46: #{hgd_forward.3} parent=11 // pred_check_branch
          %371 = sbr.rel (%p369) target = $region48
        $region47: #{hgd_forward.3} parent=11 // pred_region
          _
        $region48: #{hgd_forward.3} parent=11 // pred_fallthru
          _
      $region12: #{hgd_forward.3} parent=5 // pred_fallthru
        _
      %p372 = scmp.lt.s32.totalorder %s21, 4
      // Predicated region
      $region49: #{hgd_forward.3} parent=5 // pred_check
        %p373 = pneg %p372
      $region50: #{hgd_forward.3} parent=5 // pred_check_branch
        %375 = sbr.rel (%p373) target = $region52
      $region51: #{hgd_forward.3} parent=5 // pred_region
        // Predicated region
        $region53: #{hgd_forward.3} parent=51 // pred_check
          %p376 = pneg %p55
        $region54: #{hgd_forward.3} parent=51 // pred_check_branch
          %378 = sbr.rel (%p376) target = $region56
        $region55: #{hgd_forward.3} parent=51 // pred_region
          %s379 = smul.u32 64, %s29
          %p380 = scmp.lt.s32.totalorder %s28, 1
          %s381 = scalar_select %p380, %s28, 1
          %p382 = scmp.lt.s32.totalorder %s379, 127
          %s383 = scalar_select %p382, %s379, 127
          %s384 = smul.addr %s383, 2
          %s385 = smul.addr %s381, 256
          %s386 = sadd.s32 %s384, %s385
          %s387 = smul.addr %s386, 4
          %s388 = scalar_lea.vmem %s0, %s387
          %s389 = smul.u32 64, %s29
        $region56: #{hgd_forward.3} parent=51 // pred_fallthru
          _
        // Predicated region
        $region57: #{hgd_forward.3} parent=51 // pred_check
          %p390 = pneg %p81
        $region58: #{hgd_forward.3} parent=51 // pred_check_branch
          %392 = sbr.rel (%p390) target = $region60
        $region59: #{hgd_forward.3} parent=51 // pred_region
          %p393 = scmp.lt.s32.totalorder %s28, 1
          %s394 = scalar_select %p393, %s28, 1
          %s395 = scalar_lea.vmem %s1, %s394
        $region60: #{hgd_forward.3} parent=51 // pred_fallthru
          _
        // Predicated region
        $region61: #{hgd_forward.3} parent=51 // pred_check
          %p396 = pneg %p107
        $region62: #{hgd_forward.3} parent=51 // pred_check_branch
          %398 = sbr.rel (%p396) target = $region64
        $region63: #{hgd_forward.3} parent=51 // pred_region
          %p399 = scmp.lt.s32.totalorder %s28, 1
          %s400 = scalar_select %p399, %s28, 1
          %s401 = smul.addr %s400, 4
          %s402 = smul.addr %s401, 4
          %s403 = scalar_lea.vmem %s2, %s402
        $region64: #{hgd_forward.3} parent=51 // pred_fallthru
          _
      $region52: #{hgd_forward.3} parent=5 // pred_fallthru
        _
      %p404 = scmp.le.s32.totalorder 1, %s21
      %p405 = scmp.lt.s32.totalorder %s21, 5
      %p406 = pnand %p404, %p405
      %p407 = pneg %p406
      // Predicated region
      $region65: #{hgd_forward.3} parent=5 // pred_check
        _
      $region66: #{hgd_forward.3} parent=5 // pred_check_branch
        %409 = sbr.rel (%p406) target = $region68
      $region67: #{hgd_forward.3} parent=5 // pred_region
        %s410 = ssub.s32 %s21, 1
        %s411 = smul.u32 64, %s31
        %p412 = scmp.lt.s32.totalorder %s30, 1
        %s413 = scalar_select %p412, %s30, 1
        %p414 = scmp.lt.s32.totalorder %s411, 127
        %s415 = scalar_select %p414, %s411, 127
        %s416 = smul.addr %s415, 2
        %s417 = smul.addr %s413, 256
        %s418 = sadd.s32 %s416, %s417
        %s419 = smul.addr %s418, 4
        %s420 = scalar_lea.vmem %s0, %s419
        %p421 = pneg %p61
        %p422 = pneg %p58
        %p423 = scmp.lt.s32.totalorder %s30, 1
        %s424 = scalar_select %p423, %s30, 1
        %s425 = scalar_lea.vmem %s1, %s424
        %p426 = pneg %p87
        %p427 = pneg %p84
        %p428 = scmp.lt.s32.totalorder %s30, 1
        %s429 = scalar_select %p428, %s30, 1
        %s430 = smul.addr %s429, 4
        %s431 = smul.addr %s430, 4
        %s432 = scalar_lea.vmem %s2, %s431
        %p433 = pneg %p113
        %p434 = pneg %p110
        %p435 = pneg %p134
        %p436 = pneg %p131
        %p437 = pneg %p155
        %p438 = pneg %p152
        %p439 = pneg %p176
        %p440 = pneg %p173
        %p441 = pneg %p197
        %p442 = pneg %p194
        %p443 = pneg %p218
        %p444 = pneg %p215
        %p445 = pneg %p239
        %p446 = pneg %p236
        %p447 = pneg %p260
        %p448 = pneg %p257
        %p449 = pneg %p281
        %p450 = pneg %p278
        %p451 = pneg %p302
        %p452 = pneg %p299
        %p453 = pneg %p330
        %p454 = pneg %p327
        %s455 = sand.u32 %s317, 1
        %s456 = scalar_lea.sflag [#allocation3], %s455
        %s457 = sand.u32 %s317, 1
        %s458 = smul.addr %s457, 512
        %s459 = scalar_lea.vmem [#allocation2], %s458
        %s460 = smul.u32 64, %s31
        %p461 = scmp.lt.s32.totalorder %s30, 1
        %s462 = scalar_select %p461, %s30, 1
        %p463 = scmp.lt.s32.totalorder %s460, 127
        %s464 = scalar_select %p463, %s460, 127
        %s465 = smul.addr %s464, 2
        %s466 = smul.addr %s462, 256
        %s467 = sadd.s32 %s465, %s466
        %s468 = smul.addr %s467, 4
        %s469 = scalar_lea.vmem %s0, %s468
        %s470 = smul.u32 64, %s31
        %p471 = scmp.lt.s32.totalorder %s30, 1
        %s472 = scalar_select %p471, %s30, 1
        %s473 = scalar_lea.vmem %s1, %s472
        %p474 = scmp.lt.s32.totalorder %s30, 1
        %s475 = scalar_select %p474, %s30, 1
        %s476 = smul.addr %s475, 4
        %s477 = smul.addr %s476, 4
        %s478 = scalar_lea.vmem %s2, %s477
        %s479 = smul.u32 64, %s31
        %v481 = vld [vmem:[%s469] sm:$0xff]
        %v482 = vld [vmem:[%s469 + $0x8] sm:$0xff]
        %v483 = vld [vmem:[%s469 + $0x10] sm:$0xff]
        %v484 = vld [vmem:[%s469 + $0x18] sm:$0xff]
        %v485 = vld [vmem:[%s469 + $0x20] sm:$0xff]
        %v486 = vld [vmem:[%s469 + $0x28] sm:$0xff]
        %v487 = vld [vmem:[%s469 + $0x30] sm:$0xff]
        %v488 = vld [vmem:[%s469 + $0x38] sm:$0xff]
        %v489 = vld [vmem:[%s469 + $0x40] sm:$0xff]
        %v490 = vld [vmem:[%s469 + $0x48] sm:$0xff]
        %v491 = vld [vmem:[%s469 + $0x50] sm:$0xff]
        %v492 = vld [vmem:[%s469 + $0x58] sm:$0xff]
        %v493 = vld [vmem:[%s469 + $0x60] sm:$0xff]
        %v494 = vld [vmem:[%s469 + $0x68] sm:$0xff]
        %v495 = vld [vmem:[%s469 + $0x70] sm:$0xff]
        %v496 = vld [vmem:[%s469 + $0x78] sm:$0xff]
        %v497 = vld [vmem:[%s469 + $0x80] sm:$0xff]
        %v498 = vld [vmem:[%s469 + $0x88] sm:$0xff]
        %v499 = vld [vmem:[%s469 + $0x90] sm:$0xff]
        %v500 = vld [vmem:[%s469 + $0x98] sm:$0xff]
        %v501 = vld [vmem:[%s469 + $0xa0] sm:$0xff]
        %v502 = vld [vmem:[%s469 + $0xa8] sm:$0xff]
        %v503 = vld [vmem:[%s469 + $0xb0] sm:$0xff]
        %v504 = vld [vmem:[%s469 + $0xb8] sm:$0xff]
        %v505 = vld [vmem:[%s469 + $0xc0] sm:$0xff]
        %v506 = vld [vmem:[%s469 + $0xc8] sm:$0xff]
        %v507 = vld [vmem:[%s469 + $0xd0] sm:$0xff]
        %v508 = vld [vmem:[%s469 + $0xd8] sm:$0xff]
        %v509 = vld [vmem:[%s469 + $0xe0] sm:$0xff]
        %v510 = vld [vmem:[%s469 + $0xe8] sm:$0xff]
        %v511 = vld [vmem:[%s469 + $0xf0] sm:$0xff]
        %v512 = vld [vmem:[%s469 + $0xf8] sm:$0xff]
        %v513 = vld [vmem:[%s469 + $0x100] sm:$0xff]
        %v514 = vld [vmem:[%s469 + $0x108] sm:$0xff]
        %v515 = vld [vmem:[%s469 + $0x110] sm:$0xff]
        %v516 = vld [vmem:[%s469 + $0x118] sm:$0xff]
        %v517 = vld [vmem:[%s469 + $0x120] sm:$0xff]
        %v518 = vld [vmem:[%s469 + $0x128] sm:$0xff]
        %v519 = vld [vmem:[%s469 + $0x130] sm:$0xff]
        %v520 = vld [vmem:[%s469 + $0x138] sm:$0xff]
        %v521 = vld [vmem:[%s469 + $0x140] sm:$0xff]
        %v522 = vld [vmem:[%s469 + $0x148] sm:$0xff]
        %v523 = vld [vmem:[%s469 + $0x150] sm:$0xff]
        %v524 = vld [vmem:[%s469 + $0x158] sm:$0xff]
        %v525 = vld [vmem:[%s469 + $0x160] sm:$0xff]
        %v526 = vld [vmem:[%s469 + $0x168] sm:$0xff]
        %v527 = vld [vmem:[%s469 + $0x170] sm:$0xff]
        %v528 = vld [vmem:[%s469 + $0x178] sm:$0xff]
        %v529 = vld [vmem:[%s469 + $0x180] sm:$0xff]
        %v530 = vld [vmem:[%s469 + $0x188] sm:$0xff]
        %v531 = vld [vmem:[%s469 + $0x190] sm:$0xff]
        %v532 = vld [vmem:[%s469 + $0x198] sm:$0xff]
        %v533 = vld [vmem:[%s469 + $0x1a0] sm:$0xff]
        %v534 = vld [vmem:[%s469 + $0x1a8] sm:$0xff]
        %v535 = vld [vmem:[%s469 + $0x1b0] sm:$0xff]
        %v536 = vld [vmem:[%s469 + $0x1b8] sm:$0xff]
        %v537 = vld [vmem:[%s469 + $0x1c0] sm:$0xff]
        %v538 = vld [vmem:[%s469 + $0x1c8] sm:$0xff]
        %v539 = vld [vmem:[%s469 + $0x1d0] sm:$0xff]
        %v540 = vld [vmem:[%s469 + $0x1d8] sm:$0xff]
        %v541 = vld [vmem:[%s469 + $0x1e0] sm:$0xff]
        %v542 = vld [vmem:[%s469 + $0x1e8] sm:$0xff]
        %v543 = vld [vmem:[%s469 + $0x1f0] sm:$0xff]
        %v544 = vld [vmem:[%s469 + $0x1f8] sm:$0xff]
        %v545 = vld [vmem:[%s3] sm:$0xf]
        %v546 = vld [vmem:[%s3 + $0x4] sm:$0xf]
        %v547 = vld [vmem:[%s3 + $0x8] sm:$0xf]
        %v548 = vld [vmem:[%s3 + $0xc] sm:$0xf]
        %v549 = vld [vmem:[%s3 + $0x10] sm:$0xf]
        %v550 = vld [vmem:[%s3 + $0x14] sm:$0xf]
        %v551 = vld [vmem:[%s3 + $0x18] sm:$0xf]
        %v552 = vld [vmem:[%s3 + $0x1c] sm:$0xf]
        %v553 = vld [vmem:[%s3 + $0x20] sm:$0xf]
        %v554 = vld [vmem:[%s3 + $0x24] sm:$0xf]
        %v555 = vld [vmem:[%s3 + $0x28] sm:$0xf]
        %v556 = vld [vmem:[%s3 + $0x2c] sm:$0xf]
        %v557 = vld [vmem:[%s3 + $0x30] sm:$0xf]
        %v558 = vld [vmem:[%s3 + $0x34] sm:$0xf]
        %v559 = vld [vmem:[%s3 + $0x38] sm:$0xf]
        %v560 = vld [vmem:[%s3 + $0x3c] sm:$0xf]
        %v561 = vld [vmem:[%s3 + $0x40] sm:$0xf]
        %v562 = vld [vmem:[%s3 + $0x44] sm:$0xf]
        %v563 = vld [vmem:[%s3 + $0x48] sm:$0xf]
        %v564 = vld [vmem:[%s3 + $0x4c] sm:$0xf]
        %v565 = vld [vmem:[%s3 + $0x50] sm:$0xf]
        %v566 = vld [vmem:[%s3 + $0x54] sm:$0xf]
        %v567 = vld [vmem:[%s3 + $0x58] sm:$0xf]
        %v568 = vld [vmem:[%s3 + $0x5c] sm:$0xf]
        %v569 = vld [vmem:[%s4] sm:$0x1]
        %v571 = vperm.slane %v569, 0
        %v637 = vunpack.c.l.b16 %v481
        %v638 = vunpack.c.h.b16 %v481
        %v639 = vunpack.c.l.b16 %v482
        %v640 = vunpack.c.h.b16 %v482
        %v641 = vunpack.c.l.b16 %v483
        %v642 = vunpack.c.h.b16 %v483
        %v643 = vunpack.c.l.b16 %v484
        %v644 = vunpack.c.h.b16 %v484
        %v645 = vunpack.c.l.b16 %v485
        %v646 = vunpack.c.h.b16 %v485
        %v647 = vunpack.c.l.b16 %v486
        %v648 = vunpack.c.h.b16 %v486
        %v649 = vunpack.c.l.b16 %v487
        %v650 = vunpack.c.h.b16 %v487
        %v651 = vunpack.c.l.b16 %v488
        %v652 = vunpack.c.h.b16 %v488
        %v653 = vunpack.c.l.b16 %v489
        %v654 = vunpack.c.h.b16 %v489
        %v655 = vunpack.c.l.b16 %v490
        %v656 = vunpack.c.h.b16 %v490
        %v657 = vunpack.c.l.b16 %v491
        %v658 = vunpack.c.h.b16 %v491
        %v659 = vunpack.c.l.b16 %v492
        %v660 = vunpack.c.h.b16 %v492
        %v661 = vunpack.c.l.b16 %v493
        %v662 = vunpack.c.h.b16 %v493
        %v663 = vunpack.c.l.b16 %v494
        %v664 = vunpack.c.h.b16 %v494
        %v665 = vunpack.c.l.b16 %v495
        %v666 = vunpack.c.h.b16 %v495
        %v667 = vunpack.c.l.b16 %v496
        %v668 = vunpack.c.h.b16 %v496
        %v669 = vunpack.c.l.b16 %v497
        %v670 = vunpack.c.h.b16 %v497
        %v671 = vunpack.c.l.b16 %v498
        %v672 = vunpack.c.h.b16 %v498
        %v673 = vunpack.c.l.b16 %v499
        %v674 = vunpack.c.h.b16 %v499
        %v675 = vunpack.c.l.b16 %v500
        %v676 = vunpack.c.h.b16 %v500
        %v677 = vunpack.c.l.b16 %v501
        %v678 = vunpack.c.h.b16 %v501
        %v679 = vunpack.c.l.b16 %v502
        %v680 = vunpack.c.h.b16 %v502
        %v681 = vunpack.c.l.b16 %v503
        %v682 = vunpack.c.h.b16 %v503
        %v683 = vunpack.c.l.b16 %v504
        %v684 = vunpack.c.h.b16 %v504
        %v685 = vunpack.c.l.b16 %v505
        %v686 = vunpack.c.h.b16 %v505
        %v687 = vunpack.c.l.b16 %v506
        %v688 = vunpack.c.h.b16 %v506
        %v689 = vunpack.c.l.b16 %v507
        %v690 = vunpack.c.h.b16 %v507
        %v691 = vunpack.c.l.b16 %v508
        %v692 = vunpack.c.h.b16 %v508
        %v693 = vunpack.c.l.b16 %v509
        %v694 = vunpack.c.h.b16 %v509
        %v695 = vunpack.c.l.b16 %v510
        %v696 = vunpack.c.h.b16 %v510
        %v697 = vunpack.c.l.b16 %v511
        %v698 = vunpack.c.h.b16 %v511
        %v699 = vunpack.c.l.b16 %v512
        %v700 = vunpack.c.h.b16 %v512
        %v701 = vunpack.c.l.b16 %v513
        %v702 = vunpack.c.h.b16 %v513
        %v703 = vunpack.c.l.b16 %v514
        %v704 = vunpack.c.h.b16 %v514
        %v705 = vunpack.c.l.b16 %v515
        %v706 = vunpack.c.h.b16 %v515
        %v707 = vunpack.c.l.b16 %v516
        %v708 = vunpack.c.h.b16 %v516
        %v709 = vunpack.c.l.b16 %v517
        %v710 = vunpack.c.h.b16 %v517
        %v711 = vunpack.c.l.b16 %v518
        %v712 = vunpack.c.h.b16 %v518
        %v713 = vunpack.c.l.b16 %v519
        %v714 = vunpack.c.h.b16 %v519
        %v715 = vunpack.c.l.b16 %v520
        %v716 = vunpack.c.h.b16 %v520
        %v717 = vunpack.c.l.b16 %v521
        %v718 = vunpack.c.h.b16 %v521
        %v719 = vunpack.c.l.b16 %v522
        %v720 = vunpack.c.h.b16 %v522
        %v721 = vunpack.c.l.b16 %v523
        %v722 = vunpack.c.h.b16 %v523
        %v723 = vunpack.c.l.b16 %v524
        %v724 = vunpack.c.h.b16 %v524
        %v725 = vunpack.c.l.b16 %v525
        %v726 = vunpack.c.h.b16 %v525
        %v727 = vunpack.c.l.b16 %v526
        %v728 = vunpack.c.h.b16 %v526
        %v729 = vunpack.c.l.b16 %v527
        %v730 = vunpack.c.h.b16 %v527
        %v731 = vunpack.c.l.b16 %v528
        %v732 = vunpack.c.h.b16 %v528
        %v733 = vunpack.c.l.b16 %v529
        %v734 = vunpack.c.h.b16 %v529
        %v735 = vunpack.c.l.b16 %v530
        %v736 = vunpack.c.h.b16 %v530
        %v737 = vunpack.c.l.b16 %v531
        %v738 = vunpack.c.h.b16 %v531
        %v739 = vunpack.c.l.b16 %v532
        %v740 = vunpack.c.h.b16 %v532
        %v741 = vunpack.c.l.b16 %v533
        %v742 = vunpack.c.h.b16 %v533
        %v743 = vunpack.c.l.b16 %v534
        %v744 = vunpack.c.h.b16 %v534
        %v745 = vunpack.c.l.b16 %v535
        %v746 = vunpack.c.h.b16 %v535
        %v747 = vunpack.c.l.b16 %v536
        %v748 = vunpack.c.h.b16 %v536
        %v749 = vunpack.c.l.b16 %v537
        %v750 = vunpack.c.h.b16 %v537
        %v751 = vunpack.c.l.b16 %v538
        %v752 = vunpack.c.h.b16 %v538
        %v753 = vunpack.c.l.b16 %v539
        %v754 = vunpack.c.h.b16 %v539
        %v755 = vunpack.c.l.b16 %v540
        %v756 = vunpack.c.h.b16 %v540
        %v757 = vunpack.c.l.b16 %v541
        %v758 = vunpack.c.h.b16 %v541
        %v759 = vunpack.c.l.b16 %v542
        %v760 = vunpack.c.h.b16 %v542
        %v761 = vunpack.c.l.b16 %v543
        %v762 = vunpack.c.h.b16 %v543
        %v763 = vunpack.c.l.b16 %v544
        %v764 = vunpack.c.h.b16 %v544
        %v765 = vpack.c.b16 %v639, %v637
        %v766 = vpack.c.b16 %v640, %v638
        %v767 = vpack.c.b16 %v643, %v641
        %v768 = vpack.c.b16 %v644, %v642
        %v769 = vpack.c.b16 %v647, %v645
        %v770 = vpack.c.b16 %v648, %v646
        %v771 = vpack.c.b16 %v651, %v649
        %v772 = vpack.c.b16 %v652, %v650
        %v773 = vpack.c.b16 %v655, %v653
        %v774 = vpack.c.b16 %v656, %v654
        %v775 = vpack.c.b16 %v659, %v657
        %v776 = vpack.c.b16 %v660, %v658
        %v777 = vpack.c.b16 %v663, %v661
        %v778 = vpack.c.b16 %v664, %v662
        %v779 = vpack.c.b16 %v667, %v665
        %v780 = vpack.c.b16 %v668, %v666
        %v781 = vpack.c.b16 %v671, %v669
        %v782 = vpack.c.b16 %v672, %v670
        %v783 = vpack.c.b16 %v675, %v673
        %v784 = vpack.c.b16 %v676, %v674
        %v785 = vpack.c.b16 %v679, %v677
        %v786 = vpack.c.b16 %v680, %v678
        %v787 = vpack.c.b16 %v683, %v681
        %v788 = vpack.c.b16 %v684, %v682
        %v789 = vpack.c.b16 %v687, %v685
        %v790 = vpack.c.b16 %v688, %v686
        %v791 = vpack.c.b16 %v691, %v689
        %v792 = vpack.c.b16 %v692, %v690
        %v793 = vpack.c.b16 %v695, %v693
        %v794 = vpack.c.b16 %v696, %v694
        %v795 = vpack.c.b16 %v699, %v697
        %v796 = vpack.c.b16 %v700, %v698
        %v797 = vpack.c.b16 %v703, %v701
        %v798 = vpack.c.b16 %v704, %v702
        %v799 = vpack.c.b16 %v707, %v705
        %v800 = vpack.c.b16 %v708, %v706
        %v801 = vpack.c.b16 %v711, %v709
        %v802 = vpack.c.b16 %v712, %v710
        %v803 = vpack.c.b16 %v715, %v713
        %v804 = vpack.c.b16 %v716, %v714
        %v805 = vpack.c.b16 %v719, %v717
        %v806 = vpack.c.b16 %v720, %v718
        %v807 = vpack.c.b16 %v723, %v721
        %v808 = vpack.c.b16 %v724, %v722
        %v809 = vpack.c.b16 %v727, %v725
        %v810 = vpack.c.b16 %v728, %v726
        %v811 = vpack.c.b16 %v731, %v729
        %v812 = vpack.c.b16 %v732, %v730
        %v813 = vpack.c.b16 %v735, %v733
        %v814 = vpack.c.b16 %v736, %v734
        %v815 = vpack.c.b16 %v739, %v737
        %v816 = vpack.c.b16 %v740, %v738
        %v817 = vpack.c.b16 %v743, %v741
        %v818 = vpack.c.b16 %v744, %v742
        %v819 = vpack.c.b16 %v747, %v745
        %v820 = vpack.c.b16 %v748, %v746
        %v821 = vpack.c.b16 %v751, %v749
        %v822 = vpack.c.b16 %v752, %v750
        %v823 = vpack.c.b16 %v755, %v753
        %v824 = vpack.c.b16 %v756, %v754
        %v825 = vpack.c.b16 %v759, %v757
        %v826 = vpack.c.b16 %v760, %v758
        %v827 = vpack.c.b16 %v763, %v761
        %v828 = vpack.c.b16 %v764, %v762
        %v885 = vunpack.c.l.b16 %v545
        %v886 = vunpack.c.l.b16 %v546
        %v887 = vunpack.c.l.b16 %v547
        %v888 = vunpack.c.l.b16 %v548
        %v889 = vunpack.c.l.b16 %v549
        %v890 = vunpack.c.l.b16 %v550
        %v891 = vunpack.c.l.b16 %v551
        %v892 = vunpack.c.l.b16 %v552
        %v893 = vunpack.c.l.b16 %v553
        %v894 = vunpack.c.l.b16 %v554
        %v895 = vunpack.c.l.b16 %v555
        %v896 = vunpack.c.l.b16 %v556
        %v897 = vunpack.c.l.b16 %v557
        %v898 = vunpack.c.l.b16 %v558
        %v899 = vunpack.c.l.b16 %v559
        %v900 = vunpack.c.l.b16 %v560
        %v901 = vunpack.c.l.b16 %v561
        %v902 = vunpack.c.l.b16 %v562
        %v903 = vunpack.c.l.b16 %v563
        %v904 = vunpack.c.l.b16 %v564
        %v905 = vunpack.c.l.b16 %v565
        %v906 = vunpack.c.l.b16 %v566
        %v907 = vunpack.c.l.b16 %v567
        %v908 = vunpack.c.l.b16 %v568
        %v909 = vpack.c.b16 %v886, %v885
        %v910 = vpack.c.b16 %v888, %v887
        %v911 = vpack.c.b16 %v890, %v889
        %v912 = vpack.c.b16 %v892, %v891
        %v913 = vpack.c.b16 %v894, %v893
        %v914 = vpack.c.b16 %v896, %v895
        %v915 = vpack.c.b16 %v898, %v897
        %v916 = vpack.c.b16 %v900, %v899
        %v917 = vpack.c.b16 %v902, %v901
        %v918 = vpack.c.b16 %v904, %v903
        %v919 = vpack.c.b16 %v906, %v905
        %v920 = vpack.c.b16 %v908, %v907
        %vm933 = vcmask 523264
        %v935 = vsel %vm933, %v766, 0
        %v938 = vsel %vm933, %v768, 0
        %v941 = vsel %vm933, %v770, 0
        %v944 = vsel %vm933, %v772, 0
        %v947 = vsel %vm933, %v774, 0
        %v950 = vsel %vm933, %v776, 0
        %v953 = vsel %vm933, %v778, 0
        %v956 = vsel %vm933, %v780, 0
        %v959 = vsel %vm933, %v782, 0
        %v962 = vsel %vm933, %v784, 0
        %v965 = vsel %vm933, %v786, 0
        %v968 = vsel %vm933, %v788, 0
        %v971 = vsel %vm933, %v790, 0
        %v974 = vsel %vm933, %v792, 0
        %v977 = vsel %vm933, %v794, 0
        %v980 = vsel %vm933, %v796, 0
        %v983 = vsel %vm933, %v798, 0
        %v986 = vsel %vm933, %v800, 0
        %v989 = vsel %vm933, %v802, 0
        %v992 = vsel %vm933, %v804, 0
        %v995 = vsel %vm933, %v806, 0
        %v998 = vsel %vm933, %v808, 0
        %v1001 = vsel %vm933, %v810, 0
        %v1004 = vsel %vm933, %v812, 0
        %v1007 = vsel %vm933, %v814, 0
        %v1010 = vsel %vm933, %v816, 0
        %v1013 = vsel %vm933, %v818, 0
        %v1016 = vsel %vm933, %v820, 0
        %v1019 = vsel %vm933, %v822, 0
        %v1022 = vsel %vm933, %v824, 0
        %v1025 = vsel %vm933, %v826, 0
        %v1028 = vsel %vm933, %v828, 0
        %1030 = vmatpush.bf16.msra.mxu0 %v916
        %1031 = vmatpush.bf16.msra.mxu0 %v915
        %1032 = vmatpush.bf16.msra.mxu0 %v914
        %1033 = vmatpush.bf16.msra.mxu0 %v913
        %1034 = vmatpush.bf16.msra.mxu0 %v912
        %1035 = vmatpush.bf16.msra.mxu0 %v911
        %1036 = vmatpush.bf16.msra.mxu0 %v910
        %1037 = vmatpush.bf16.msra.mxu0 %v909
        %1038 = vmatmul.bf16.gmra.mxu0 %v765
        %v1039 = vpop.f32.mrf.mxu0
        %v1040 = vadd.f32 %v571, %v1039
        %v1041 = vpop.f32.mrf.mxu0
        %v1042 = vadd.f32 %v571, %v1041
        %1043 = vmatmul.bf16.gmra.mxu0 %v767
        %v1044 = vpop.f32.mrf.mxu0
        %v1045 = vadd.f32 %v571, %v1044
        %v1046 = vpop.f32.mrf.mxu0
        %v1047 = vadd.f32 %v571, %v1046
        %1048 = vmatmul.bf16.gmra.mxu0 %v769
        %v1049 = vpop.f32.mrf.mxu0
        %v1050 = vadd.f32 %v571, %v1049
        %v1051 = vpop.f32.mrf.mxu0
        %v1052 = vadd.f32 %v571, %v1051
        %1053 = vmatmul.bf16.gmra.mxu0 %v771
        %v1054 = vpop.f32.mrf.mxu0
        %v1055 = vadd.f32 %v571, %v1054
        %v1056 = vpop.f32.mrf.mxu0
        %v1057 = vadd.f32 %v571, %v1056
        %1058 = vmatmul.bf16.gmra.mxu0 %v773
        %v1059 = vpop.f32.mrf.mxu0
        %v1060 = vadd.f32 %v571, %v1059
        %v1061 = vpop.f32.mrf.mxu0
        %v1062 = vadd.f32 %v571, %v1061
        %1063 = vmatmul.bf16.gmra.mxu0 %v775
        %v1064 = vpop.f32.mrf.mxu0
        %v1065 = vadd.f32 %v571, %v1064
        %v1066 = vpop.f32.mrf.mxu0
        %v1067 = vadd.f32 %v571, %v1066
        %1068 = vmatmul.bf16.gmra.mxu0 %v777
        %v1069 = vpop.f32.mrf.mxu0
        %v1070 = vadd.f32 %v571, %v1069
        %v1071 = vpop.f32.mrf.mxu0
        %v1072 = vadd.f32 %v571, %v1071
        %1073 = vmatmul.bf16.gmra.mxu0 %v779
        %v1074 = vpop.f32.mrf.mxu0
        %v1075 = vadd.f32 %v571, %v1074
        %v1076 = vpop.f32.mrf.mxu0
        %v1077 = vadd.f32 %v571, %v1076
        %1078 = vmatmul.bf16.gmra.mxu0 %v781
        %v1079 = vpop.f32.mrf.mxu0
        %v1080 = vadd.f32 %v571, %v1079
        %v1081 = vpop.f32.mrf.mxu0
        %v1082 = vadd.f32 %v571, %v1081
        %1083 = vmatmul.bf16.gmra.mxu0 %v783
        %v1084 = vpop.f32.mrf.mxu0
        %v1085 = vadd.f32 %v571, %v1084
        %v1086 = vpop.f32.mrf.mxu0
        %v1087 = vadd.f32 %v571, %v1086
        %1088 = vmatmul.bf16.gmra.mxu0 %v785
        %v1089 = vpop.f32.mrf.mxu0
        %v1090 = vadd.f32 %v571, %v1089
        %v1091 = vpop.f32.mrf.mxu0
        %v1092 = vadd.f32 %v571, %v1091
        %1093 = vmatmul.bf16.gmra.mxu0 %v787
        %v1094 = vpop.f32.mrf.mxu0
        %v1095 = vadd.f32 %v571, %v1094
        %v1096 = vpop.f32.mrf.mxu0
        %v1097 = vadd.f32 %v571, %v1096
        %1098 = vmatmul.bf16.gmra.mxu0 %v789
        %v1099 = vpop.f32.mrf.mxu0
        %v1100 = vadd.f32 %v571, %v1099
        %v1101 = vpop.f32.mrf.mxu0
        %v1102 = vadd.f32 %v571, %v1101
        %1103 = vmatmul.bf16.gmra.mxu0 %v791
        %v1104 = vpop.f32.mrf.mxu0
        %v1105 = vadd.f32 %v571, %v1104
        %v1106 = vpop.f32.mrf.mxu0
        %v1107 = vadd.f32 %v571, %v1106
        %1108 = vmatmul.bf16.gmra.mxu0 %v793
        %v1109 = vpop.f32.mrf.mxu0
        %v1110 = vadd.f32 %v571, %v1109
        %v1111 = vpop.f32.mrf.mxu0
        %v1112 = vadd.f32 %v571, %v1111
        %1113 = vmatmul.bf16.gmra.mxu0 %v795
        %v1114 = vpop.f32.mrf.mxu0
        %v1115 = vadd.f32 %v571, %v1114
        %v1116 = vpop.f32.mrf.mxu0
        %v1117 = vadd.f32 %v571, %v1116
        %1118 = vmatmul.bf16.gmra.mxu0 %v797
        %v1119 = vpop.f32.mrf.mxu0
        %v1120 = vadd.f32 %v571, %v1119
        %v1121 = vpop.f32.mrf.mxu0
        %v1122 = vadd.f32 %v571, %v1121
        %1123 = vmatmul.bf16.gmra.mxu0 %v799
        %v1124 = vpop.f32.mrf.mxu0
        %v1125 = vadd.f32 %v571, %v1124
        %v1126 = vpop.f32.mrf.mxu0
        %v1127 = vadd.f32 %v571, %v1126
        %1128 = vmatmul.bf16.gmra.mxu0 %v801
        %v1129 = vpop.f32.mrf.mxu0
        %v1130 = vadd.f32 %v571, %v1129
        %v1131 = vpop.f32.mrf.mxu0
        %v1132 = vadd.f32 %v571, %v1131
        %1133 = vmatmul.bf16.gmra.mxu0 %v803
        %v1134 = vpop.f32.mrf.mxu0
        %v1135 = vadd.f32 %v571, %v1134
        %v1136 = vpop.f32.mrf.mxu0
        %v1137 = vadd.f32 %v571, %v1136
        %1138 = vmatmul.bf16.gmra.mxu0 %v805
        %v1139 = vpop.f32.mrf.mxu0
        %v1140 = vadd.f32 %v571, %v1139
        %v1141 = vpop.f32.mrf.mxu0
        %v1142 = vadd.f32 %v571, %v1141
        %1143 = vmatmul.bf16.gmra.mxu0 %v807
        %v1144 = vpop.f32.mrf.mxu0
        %v1145 = vadd.f32 %v571, %v1144
        %v1146 = vpop.f32.mrf.mxu0
        %v1147 = vadd.f32 %v571, %v1146
        %1148 = vmatmul.bf16.gmra.mxu0 %v809
        %v1149 = vpop.f32.mrf.mxu0
        %v1150 = vadd.f32 %v571, %v1149
        %v1151 = vpop.f32.mrf.mxu0
        %v1152 = vadd.f32 %v571, %v1151
        %1153 = vmatmul.bf16.gmra.mxu0 %v811
        %v1154 = vpop.f32.mrf.mxu0
        %v1155 = vadd.f32 %v571, %v1154
        %v1156 = vpop.f32.mrf.mxu0
        %v1157 = vadd.f32 %v571, %v1156
        %1158 = vmatmul.bf16.gmra.mxu0 %v813
        %v1159 = vpop.f32.mrf.mxu0
        %v1160 = vadd.f32 %v571, %v1159
        %v1161 = vpop.f32.mrf.mxu0
        %v1162 = vadd.f32 %v571, %v1161
        %1163 = vmatmul.bf16.gmra.mxu0 %v815
        %v1164 = vpop.f32.mrf.mxu0
        %v1165 = vadd.f32 %v571, %v1164
        %v1166 = vpop.f32.mrf.mxu0
        %v1167 = vadd.f32 %v571, %v1166
        %1168 = vmatmul.bf16.gmra.mxu0 %v817
        %v1169 = vpop.f32.mrf.mxu0
        %v1170 = vadd.f32 %v571, %v1169
        %v1171 = vpop.f32.mrf.mxu0
        %v1172 = vadd.f32 %v571, %v1171
        %1173 = vmatmul.bf16.gmra.mxu0 %v819
        %v1174 = vpop.f32.mrf.mxu0
        %v1175 = vadd.f32 %v571, %v1174
        %v1176 = vpop.f32.mrf.mxu0
        %v1177 = vadd.f32 %v571, %v1176
        %1178 = vmatmul.bf16.gmra.mxu0 %v821
        %v1179 = vpop.f32.mrf.mxu0
        %v1180 = vadd.f32 %v571, %v1179
        %v1181 = vpop.f32.mrf.mxu0
        %v1182 = vadd.f32 %v571, %v1181
        %1183 = vmatmul.bf16.gmra.mxu0 %v823
        %v1184 = vpop.f32.mrf.mxu0
        %v1185 = vadd.f32 %v571, %v1184
        %v1186 = vpop.f32.mrf.mxu0
        %v1187 = vadd.f32 %v571, %v1186
        %1188 = vmatmul.bf16.gmra.mxu0 %v825
        %v1189 = vpop.f32.mrf.mxu0
        %v1190 = vadd.f32 %v571, %v1189
        %v1191 = vpop.f32.mrf.mxu0
        %v1192 = vadd.f32 %v571, %v1191
        %1193 = vmatmul.bf16.gmra.mxu0 %v827
        %v1194 = vpop.f32.mrf.mxu0
        %v1195 = vadd.f32 %v571, %v1194
        %v1196 = vpop.f32.mrf.mxu0
        %v1197 = vadd.f32 %v571, %v1196
        %1198 = vdwg.mxu0
        %1199 = vmatpush.bf16.msra.mxu0 0
        %1200 = vmatpush.bf16.msra.mxu0 0
        %1201 = vmatpush.bf16.msra.mxu0 0
        %1202 = vmatpush.bf16.msra.mxu0 0
        %1203 = vmatpush.bf16.msra.mxu0 %v920
        %1204 = vmatpush.bf16.msra.mxu0 %v919
        %1205 = vmatpush.bf16.msra.mxu0 %v918
        %1206 = vmatpush.bf16.msra.mxu0 %v917
        %1207 = vmatmul.bf16.gmra.mxu0 %v935
        %v1208 = vpop.f32.mrf.mxu0
        %v1209 = vadd.f32 %v1040, %v1208
        %v1210 = vpop.f32.mrf.mxu0
        %v1211 = vadd.f32 %v1042, %v1210
        %1212 = vmatmul.bf16.gmra.mxu0 %v938
        %v1213 = vpop.f32.mrf.mxu0
        %v1214 = vadd.f32 %v1045, %v1213
        %v1215 = vpop.f32.mrf.mxu0
        %v1216 = vadd.f32 %v1047, %v1215
        %1217 = vmatmul.bf16.gmra.mxu0 %v941
        %v1218 = vpop.f32.mrf.mxu0
        %v1219 = vadd.f32 %v1050, %v1218
        %v1220 = vpop.f32.mrf.mxu0
        %v1221 = vadd.f32 %v1052, %v1220
        %1222 = vmatmul.bf16.gmra.mxu0 %v944
        %v1223 = vpop.f32.mrf.mxu0
        %v1224 = vadd.f32 %v1055, %v1223
        %v1225 = vpop.f32.mrf.mxu0
        %v1226 = vadd.f32 %v1057, %v1225
        %1227 = vmatmul.bf16.gmra.mxu0 %v947
        %v1228 = vpop.f32.mrf.mxu0
        %v1229 = vadd.f32 %v1060, %v1228
        %v1230 = vpop.f32.mrf.mxu0
        %v1231 = vadd.f32 %v1062, %v1230
        %1232 = vmatmul.bf16.gmra.mxu0 %v950
        %v1233 = vpop.f32.mrf.mxu0
        %v1234 = vadd.f32 %v1065, %v1233
        %v1235 = vpop.f32.mrf.mxu0
        %v1236 = vadd.f32 %v1067, %v1235
        %1237 = vmatmul.bf16.gmra.mxu0 %v953
        %v1238 = vpop.f32.mrf.mxu0
        %v1239 = vadd.f32 %v1070, %v1238
        %v1240 = vpop.f32.mrf.mxu0
        %v1241 = vadd.f32 %v1072, %v1240
        %1242 = vmatmul.bf16.gmra.mxu0 %v956
        %v1243 = vpop.f32.mrf.mxu0
        %v1244 = vadd.f32 %v1075, %v1243
        %v1245 = vpop.f32.mrf.mxu0
        %v1246 = vadd.f32 %v1077, %v1245
        %1247 = vmatmul.bf16.gmra.mxu0 %v959
        %v1248 = vpop.f32.mrf.mxu0
        %v1249 = vadd.f32 %v1080, %v1248
        %v1250 = vpop.f32.mrf.mxu0
        %v1251 = vadd.f32 %v1082, %v1250
        %1252 = vmatmul.bf16.gmra.mxu0 %v962
        %v1253 = vpop.f32.mrf.mxu0
        %v1254 = vadd.f32 %v1085, %v1253
        %v1255 = vpop.f32.mrf.mxu0
        %v1256 = vadd.f32 %v1087, %v1255
        %1257 = vmatmul.bf16.gmra.mxu0 %v965
        %v1258 = vpop.f32.mrf.mxu0
        %v1259 = vadd.f32 %v1090, %v1258
        %v1260 = vpop.f32.mrf.mxu0
        %v1261 = vadd.f32 %v1092, %v1260
        %1262 = vmatmul.bf16.gmra.mxu0 %v968
        %v1263 = vpop.f32.mrf.mxu0
        %v1264 = vadd.f32 %v1095, %v1263
        %v1265 = vpop.f32.mrf.mxu0
        %v1266 = vadd.f32 %v1097, %v1265
        %1267 = vmatmul.bf16.gmra.mxu0 %v971
        %v1268 = vpop.f32.mrf.mxu0
        %v1269 = vadd.f32 %v1100, %v1268
        %v1270 = vpop.f32.mrf.mxu0
        %v1271 = vadd.f32 %v1102, %v1270
        %1272 = vmatmul.bf16.gmra.mxu0 %v974
        %v1273 = vpop.f32.mrf.mxu0
        %v1274 = vadd.f32 %v1105, %v1273
        %v1275 = vpop.f32.mrf.mxu0
        %v1276 = vadd.f32 %v1107, %v1275
        %1277 = vmatmul.bf16.gmra.mxu0 %v977
        %v1278 = vpop.f32.mrf.mxu0
        %v1279 = vadd.f32 %v1110, %v1278
        %v1280 = vpop.f32.mrf.mxu0
        %v1281 = vadd.f32 %v1112, %v1280
        %1282 = vmatmul.bf16.gmra.mxu0 %v980
        %v1283 = vpop.f32.mrf.mxu0
        %v1284 = vadd.f32 %v1115, %v1283
        %v1285 = vpop.f32.mrf.mxu0
        %v1286 = vadd.f32 %v1117, %v1285
        %1287 = vmatmul.bf16.gmra.mxu0 %v983
        %v1288 = vpop.f32.mrf.mxu0
        %v1289 = vadd.f32 %v1120, %v1288
        %v1290 = vpop.f32.mrf.mxu0
        %v1291 = vadd.f32 %v1122, %v1290
        %1292 = vmatmul.bf16.gmra.mxu0 %v986
        %v1293 = vpop.f32.mrf.mxu0
        %v1294 = vadd.f32 %v1125, %v1293
        %v1295 = vpop.f32.mrf.mxu0
        %v1296 = vadd.f32 %v1127, %v1295
        %1297 = vmatmul.bf16.gmra.mxu0 %v989
        %v1298 = vpop.f32.mrf.mxu0
        %v1299 = vadd.f32 %v1130, %v1298
        %v1300 = vpop.f32.mrf.mxu0
        %v1301 = vadd.f32 %v1132, %v1300
        %1302 = vmatmul.bf16.gmra.mxu0 %v992
        %v1303 = vpop.f32.mrf.mxu0
        %v1304 = vadd.f32 %v1135, %v1303
        %v1305 = vpop.f32.mrf.mxu0
        %v1306 = vadd.f32 %v1137, %v1305
        %1307 = vmatmul.bf16.gmra.mxu0 %v995
        %v1308 = vpop.f32.mrf.mxu0
        %v1309 = vadd.f32 %v1140, %v1308
        %v1310 = vpop.f32.mrf.mxu0
        %v1311 = vadd.f32 %v1142, %v1310
        %1312 = vmatmul.bf16.gmra.mxu0 %v998
        %v1313 = vpop.f32.mrf.mxu0
        %v1314 = vadd.f32 %v1145, %v1313
        %v1315 = vpop.f32.mrf.mxu0
        %v1316 = vadd.f32 %v1147, %v1315
        %1317 = vmatmul.bf16.gmra.mxu0 %v1001
        %v1318 = vpop.f32.mrf.mxu0
        %v1319 = vadd.f32 %v1150, %v1318
        %v1320 = vpop.f32.mrf.mxu0
        %v1321 = vadd.f32 %v1152, %v1320
        %1322 = vmatmul.bf16.gmra.mxu0 %v1004
        %v1323 = vpop.f32.mrf.mxu0
        %v1324 = vadd.f32 %v1155, %v1323
        %v1325 = vpop.f32.mrf.mxu0
        %v1326 = vadd.f32 %v1157, %v1325
        %1327 = vmatmul.bf16.gmra.mxu0 %v1007
        %v1328 = vpop.f32.mrf.mxu0
        %v1329 = vadd.f32 %v1160, %v1328
        %v1330 = vpop.f32.mrf.mxu0
        %v1331 = vadd.f32 %v1162, %v1330
        %1332 = vmatmul.bf16.gmra.mxu0 %v1010
        %v1333 = vpop.f32.mrf.mxu0
        %v1334 = vadd.f32 %v1165, %v1333
        %v1335 = vpop.f32.mrf.mxu0
        %v1336 = vadd.f32 %v1167, %v1335
        %1337 = vmatmul.bf16.gmra.mxu0 %v1013
        %v1338 = vpop.f32.mrf.mxu0
        %v1339 = vadd.f32 %v1170, %v1338
        %v1340 = vpop.f32.mrf.mxu0
        %v1341 = vadd.f32 %v1172, %v1340
        %1342 = vmatmul.bf16.gmra.mxu0 %v1016
        %v1343 = vpop.f32.mrf.mxu0
        %v1344 = vadd.f32 %v1175, %v1343
        %v1345 = vpop.f32.mrf.mxu0
        %v1346 = vadd.f32 %v1177, %v1345
        %1347 = vmatmul.bf16.gmra.mxu0 %v1019
        %v1348 = vpop.f32.mrf.mxu0
        %v1349 = vadd.f32 %v1180, %v1348
        %v1350 = vpop.f32.mrf.mxu0
        %v1351 = vadd.f32 %v1182, %v1350
        %1352 = vmatmul.bf16.gmra.mxu0 %v1022
        %v1353 = vpop.f32.mrf.mxu0
        %v1354 = vadd.f32 %v1185, %v1353
        %v1355 = vpop.f32.mrf.mxu0
        %v1356 = vadd.f32 %v1187, %v1355
        %1357 = vmatmul.bf16.gmra.mxu0 %v1025
        %v1358 = vpop.f32.mrf.mxu0
        %v1359 = vadd.f32 %v1190, %v1358
        %v1360 = vpop.f32.mrf.mxu0
        %v1361 = vadd.f32 %v1192, %v1360
        %1362 = vmatmul.bf16.gmra.mxu0 %v1028
        %v1363 = vpop.f32.mrf.mxu0
        %v1364 = vadd.f32 %v1195, %v1363
        %v1365 = vpop.f32.mrf.mxu0
        %v1366 = vadd.f32 %v1197, %v1365
        %1367 = vdwg.mxu0
        %v1368 = vmax.f32 %v1209, 0.0
        %v1369 = vmax.f32 %v1211, 0.0
        %v1370 = vmax.f32 %v1214, 0.0
        %v1371 = vmax.f32 %v1216, 0.0
        %v1372 = vmax.f32 %v1219, 0.0
        %v1373 = vmax.f32 %v1221, 0.0
        %v1374 = vmax.f32 %v1224, 0.0
        %v1375 = vmax.f32 %v1226, 0.0
        %v1376 = vmax.f32 %v1229, 0.0
        %v1377 = vmax.f32 %v1231, 0.0
        %v1378 = vmax.f32 %v1234, 0.0
        %v1379 = vmax.f32 %v1236, 0.0
        %v1380 = vmax.f32 %v1239, 0.0
        %v1381 = vmax.f32 %v1241, 0.0
        %v1382 = vmax.f32 %v1244, 0.0
        %v1383 = vmax.f32 %v1246, 0.0
        %v1384 = vmax.f32 %v1249, 0.0
        %v1385 = vmax.f32 %v1251, 0.0
        %v1386 = vmax.f32 %v1254, 0.0
        %v1387 = vmax.f32 %v1256, 0.0
        %v1388 = vmax.f32 %v1259, 0.0
        %v1389 = vmax.f32 %v1261, 0.0
        %v1390 = vmax.f32 %v1264, 0.0
        %v1391 = vmax.f32 %v1266, 0.0
        %v1392 = vmax.f32 %v1269, 0.0
        %v1393 = vmax.f32 %v1271, 0.0
        %v1394 = vmax.f32 %v1274, 0.0
        %v1395 = vmax.f32 %v1276, 0.0
        %v1396 = vmax.f32 %v1279, 0.0
        %v1397 = vmax.f32 %v1281, 0.0
        %v1398 = vmax.f32 %v1284, 0.0
        %v1399 = vmax.f32 %v1286, 0.0
        %v1400 = vmax.f32 %v1289, 0.0
        %v1401 = vmax.f32 %v1291, 0.0
        %v1402 = vmax.f32 %v1294, 0.0
        %v1403 = vmax.f32 %v1296, 0.0
        %v1404 = vmax.f32 %v1299, 0.0
        %v1405 = vmax.f32 %v1301, 0.0
        %v1406 = vmax.f32 %v1304, 0.0
        %v1407 = vmax.f32 %v1306, 0.0
        %v1408 = vmax.f32 %v1309, 0.0
        %v1409 = vmax.f32 %v1311, 0.0
        %v1410 = vmax.f32 %v1314, 0.0
        %v1411 = vmax.f32 %v1316, 0.0
        %v1412 = vmax.f32 %v1319, 0.0
        %v1413 = vmax.f32 %v1321, 0.0
        %v1414 = vmax.f32 %v1324, 0.0
        %v1415 = vmax.f32 %v1326, 0.0
        %v1416 = vmax.f32 %v1329, 0.0
        %v1417 = vmax.f32 %v1331, 0.0
        %v1418 = vmax.f32 %v1334, 0.0
        %v1419 = vmax.f32 %v1336, 0.0
        %v1420 = vmax.f32 %v1339, 0.0
        %v1421 = vmax.f32 %v1341, 0.0
        %v1422 = vmax.f32 %v1344, 0.0
        %v1423 = vmax.f32 %v1346, 0.0
        %v1424 = vmax.f32 %v1349, 0.0
        %v1425 = vmax.f32 %v1351, 0.0
        %v1426 = vmax.f32 %v1354, 0.0
        %v1427 = vmax.f32 %v1356, 0.0
        %v1428 = vmax.f32 %v1359, 0.0
        %v1429 = vmax.f32 %v1361, 0.0
        %v1430 = vmax.f32 %v1364, 0.0
        %v1431 = vmax.f32 %v1366, 0.0
        %v1432 = vld [vmem:[%s473] sm:$0x1]
        %v1434 = vperm.slane %v1432, 0
        %v1436 = vadd.f32 %v1368, %v1434
        %v1437 = vadd.f32 %v1369, %v1434
        %v1438 = vadd.f32 %v1370, %v1434
        %v1439 = vadd.f32 %v1371, %v1434
        %v1440 = vadd.f32 %v1372, %v1434
        %v1441 = vadd.f32 %v1373, %v1434
        %v1442 = vadd.f32 %v1374, %v1434
        %v1443 = vadd.f32 %v1375, %v1434
        %v1444 = vadd.f32 %v1376, %v1434
        %v1445 = vadd.f32 %v1377, %v1434
        %v1446 = vadd.f32 %v1378, %v1434
        %v1447 = vadd.f32 %v1379, %v1434
        %v1448 = vadd.f32 %v1380, %v1434
        %v1449 = vadd.f32 %v1381, %v1434
        %v1450 = vadd.f32 %v1382, %v1434
        %v1451 = vadd.f32 %v1383, %v1434
        %v1452 = vadd.f32 %v1384, %v1434
        %v1453 = vadd.f32 %v1385, %v1434
        %v1454 = vadd.f32 %v1386, %v1434
        %v1455 = vadd.f32 %v1387, %v1434
        %v1456 = vadd.f32 %v1388, %v1434
        %v1457 = vadd.f32 %v1389, %v1434
        %v1458 = vadd.f32 %v1390, %v1434
        %v1459 = vadd.f32 %v1391, %v1434
        %v1460 = vadd.f32 %v1392, %v1434
        %v1461 = vadd.f32 %v1393, %v1434
        %v1462 = vadd.f32 %v1394, %v1434
        %v1463 = vadd.f32 %v1395, %v1434
        %v1464 = vadd.f32 %v1396, %v1434
        %v1465 = vadd.f32 %v1397, %v1434
        %v1466 = vadd.f32 %v1398, %v1434
        %v1467 = vadd.f32 %v1399, %v1434
        %v1468 = vadd.f32 %v1400, %v1434
        %v1469 = vadd.f32 %v1401, %v1434
        %v1470 = vadd.f32 %v1402, %v1434
        %v1471 = vadd.f32 %v1403, %v1434
        %v1472 = vadd.f32 %v1404, %v1434
        %v1473 = vadd.f32 %v1405, %v1434
        %v1474 = vadd.f32 %v1406, %v1434
        %v1475 = vadd.f32 %v1407, %v1434
        %v1476 = vadd.f32 %v1408, %v1434
        %v1477 = vadd.f32 %v1409, %v1434
        %v1478 = vadd.f32 %v1410, %v1434
        %v1479 = vadd.f32 %v1411, %v1434
        %v1480 = vadd.f32 %v1412, %v1434
        %v1481 = vadd.f32 %v1413, %v1434
        %v1482 = vadd.f32 %v1414, %v1434
        %v1483 = vadd.f32 %v1415, %v1434
        %v1484 = vadd.f32 %v1416, %v1434
        %v1485 = vadd.f32 %v1417, %v1434
        %v1486 = vadd.f32 %v1418, %v1434
        %v1487 = vadd.f32 %v1419, %v1434
        %v1488 = vadd.f32 %v1420, %v1434
        %v1489 = vadd.f32 %v1421, %v1434
        %v1490 = vadd.f32 %v1422, %v1434
        %v1491 = vadd.f32 %v1423, %v1434
        %v1492 = vadd.f32 %v1424, %v1434
        %v1493 = vadd.f32 %v1425, %v1434
        %v1494 = vadd.f32 %v1426, %v1434
        %v1495 = vadd.f32 %v1427, %v1434
        %v1496 = vadd.f32 %v1428, %v1434
        %v1497 = vadd.f32 %v1429, %v1434
        %v1498 = vadd.f32 %v1430, %v1434
        %v1499 = vadd.f32 %v1431, %v1434
        %v1500 = vpack.c.bf16 %v1437, %v1436
        %v1501 = vpack.c.bf16 %v1439, %v1438
        %v1502 = vpack.c.bf16 %v1441, %v1440
        %v1503 = vpack.c.bf16 %v1443, %v1442
        %v1504 = vpack.c.bf16 %v1445, %v1444
        %v1505 = vpack.c.bf16 %v1447, %v1446
        %v1506 = vpack.c.bf16 %v1449, %v1448
        %v1507 = vpack.c.bf16 %v1451, %v1450
        %v1508 = vpack.c.bf16 %v1453, %v1452
        %v1509 = vpack.c.bf16 %v1455, %v1454
        %v1510 = vpack.c.bf16 %v1457, %v1456
        %v1511 = vpack.c.bf16 %v1459, %v1458
        %v1512 = vpack.c.bf16 %v1461, %v1460
        %v1513 = vpack.c.bf16 %v1463, %v1462
        %v1514 = vpack.c.bf16 %v1465, %v1464
        %v1515 = vpack.c.bf16 %v1467, %v1466
        %v1516 = vpack.c.bf16 %v1469, %v1468
        %v1517 = vpack.c.bf16 %v1471, %v1470
        %v1518 = vpack.c.bf16 %v1473, %v1472
        %v1519 = vpack.c.bf16 %v1475, %v1474
        %v1520 = vpack.c.bf16 %v1477, %v1476
        %v1521 = vpack.c.bf16 %v1479, %v1478
        %v1522 = vpack.c.bf16 %v1481, %v1480
        %v1523 = vpack.c.bf16 %v1483, %v1482
        %v1524 = vpack.c.bf16 %v1485, %v1484
        %v1525 = vpack.c.bf16 %v1487, %v1486
        %v1526 = vpack.c.bf16 %v1489, %v1488
        %v1527 = vpack.c.bf16 %v1491, %v1490
        %v1528 = vpack.c.bf16 %v1493, %v1492
        %v1529 = vpack.c.bf16 %v1495, %v1494
        %v1530 = vpack.c.bf16 %v1497, %v1496
        %v1531 = vpack.c.bf16 %v1499, %v1498
        %v1532 = vld [vmem:[%s5] sm:$0xf]
        %v1533 = vld [vmem:[%s5 + $0x4] sm:$0xf]
        %v1534 = vld [vmem:[%s5 + $0x8] sm:$0xf]
        %v1535 = vld [vmem:[%s5 + $0xc] sm:$0xf]
        %v1536 = vld [vmem:[%s5 + $0x10] sm:$0xf]
        %v1537 = vld [vmem:[%s5 + $0x14] sm:$0xf]
        %v1538 = vld [vmem:[%s5 + $0x18] sm:$0xf]
        %v1539 = vld [vmem:[%s5 + $0x1c] sm:$0xf]
        %v1540 = vld [vmem:[%s5 + $0x20] sm:$0xf]
        %v1541 = vld [vmem:[%s5 + $0x24] sm:$0xf]
        %v1542 = vld [vmem:[%s5 + $0x28] sm:$0xf]
        %v1543 = vld [vmem:[%s5 + $0x2c] sm:$0xf]
        %v1544 = vld [vmem:[%s5 + $0x30] sm:$0xf]
        %v1545 = vld [vmem:[%s5 + $0x34] sm:$0xf]
        %v1546 = vld [vmem:[%s5 + $0x38] sm:$0xf]
        %v1547 = vld [vmem:[%s5 + $0x3c] sm:$0xf]
        %v1548 = vld [vmem:[%s6] sm:$0x1]
        %v1550 = vperm.slane %v1548, 0
        %v1568 = vunpack.c.l.b16 %v1532
        %v1569 = vunpack.c.l.b16 %v1533
        %v1570 = vunpack.c.l.b16 %v1534
        %v1571 = vunpack.c.l.b16 %v1535
        %v1572 = vunpack.c.l.b16 %v1536
        %v1573 = vunpack.c.l.b16 %v1537
        %v1574 = vunpack.c.l.b16 %v1538
        %v1575 = vunpack.c.l.b16 %v1539
        %v1576 = vunpack.c.l.b16 %v1540
        %v1577 = vunpack.c.l.b16 %v1541
        %v1578 = vunpack.c.l.b16 %v1542
        %v1579 = vunpack.c.l.b16 %v1543
        %v1580 = vunpack.c.l.b16 %v1544
        %v1581 = vunpack.c.l.b16 %v1545
        %v1582 = vunpack.c.l.b16 %v1546
        %v1583 = vunpack.c.l.b16 %v1547
        %v1584 = vpack.c.b16 %v1569, %v1568
        %v1585 = vpack.c.b16 %v1571, %v1570
        %v1586 = vpack.c.b16 %v1573, %v1572
        %v1587 = vpack.c.b16 %v1575, %v1574
        %v1588 = vpack.c.b16 %v1577, %v1576
        %v1589 = vpack.c.b16 %v1579, %v1578
        %v1590 = vpack.c.b16 %v1581, %v1580
        %v1591 = vpack.c.b16 %v1583, %v1582
        %1600 = vmatpush.bf16.msra.mxu0 %v1591
        %1601 = vmatpush.bf16.msra.mxu0 %v1590
        %1602 = vmatpush.bf16.msra.mxu0 %v1589
        %1603 = vmatpush.bf16.msra.mxu0 %v1588
        %1604 = vmatpush.bf16.msra.mxu0 %v1587
        %1605 = vmatpush.bf16.msra.mxu0 %v1586
        %1606 = vmatpush.bf16.msra.mxu0 %v1585
        %1607 = vmatpush.bf16.msra.mxu0 %v1584
        %1608 = vmatmul.bf16.gmra.mxu0 %v1500
        %v1609 = vpop.f32.mrf.mxu0
        %v1610 = vadd.f32 %v1550, %v1609
        %v1611 = vpop.f32.mrf.mxu0
        %v1612 = vadd.f32 %v1550, %v1611
        %1613 = vmatmul.bf16.gmra.mxu0 %v1501
        %v1614 = vpop.f32.mrf.mxu0
        %v1615 = vadd.f32 %v1550, %v1614
        %v1616 = vpop.f32.mrf.mxu0
        %v1617 = vadd.f32 %v1550, %v1616
        %1618 = vmatmul.bf16.gmra.mxu0 %v1502
        %v1619 = vpop.f32.mrf.mxu0
        %v1620 = vadd.f32 %v1550, %v1619
        %v1621 = vpop.f32.mrf.mxu0
        %v1622 = vadd.f32 %v1550, %v1621
        %1623 = vmatmul.bf16.gmra.mxu0 %v1503
        %v1624 = vpop.f32.mrf.mxu0
        %v1625 = vadd.f32 %v1550, %v1624
        %v1626 = vpop.f32.mrf.mxu0
        %v1627 = vadd.f32 %v1550, %v1626
        %1628 = vmatmul.bf16.gmra.mxu0 %v1504
        %v1629 = vpop.f32.mrf.mxu0
        %v1630 = vadd.f32 %v1550, %v1629
        %v1631 = vpop.f32.mrf.mxu0
        %v1632 = vadd.f32 %v1550, %v1631
        %1633 = vmatmul.bf16.gmra.mxu0 %v1505
        %v1634 = vpop.f32.mrf.mxu0
        %v1635 = vadd.f32 %v1550, %v1634
        %v1636 = vpop.f32.mrf.mxu0
        %v1637 = vadd.f32 %v1550, %v1636
        %1638 = vmatmul.bf16.gmra.mxu0 %v1506
        %v1639 = vpop.f32.mrf.mxu0
        %v1640 = vadd.f32 %v1550, %v1639
        %v1641 = vpop.f32.mrf.mxu0
        %v1642 = vadd.f32 %v1550, %v1641
        %1643 = vmatmul.bf16.gmra.mxu0 %v1507
        %v1644 = vpop.f32.mrf.mxu0
        %v1645 = vadd.f32 %v1550, %v1644
        %v1646 = vpop.f32.mrf.mxu0
        %v1647 = vadd.f32 %v1550, %v1646
        %1648 = vmatmul.bf16.gmra.mxu0 %v1508
        %v1649 = vpop.f32.mrf.mxu0
        %v1650 = vadd.f32 %v1550, %v1649
        %v1651 = vpop.f32.mrf.mxu0
        %v1652 = vadd.f32 %v1550, %v1651
        %1653 = vmatmul.bf16.gmra.mxu0 %v1509
        %v1654 = vpop.f32.mrf.mxu0
        %v1655 = vadd.f32 %v1550, %v1654
        %v1656 = vpop.f32.mrf.mxu0
        %v1657 = vadd.f32 %v1550, %v1656
        %1658 = vmatmul.bf16.gmra.mxu0 %v1510
        %v1659 = vpop.f32.mrf.mxu0
        %v1660 = vadd.f32 %v1550, %v1659
        %v1661 = vpop.f32.mrf.mxu0
        %v1662 = vadd.f32 %v1550, %v1661
        %1663 = vmatmul.bf16.gmra.mxu0 %v1511
        %v1664 = vpop.f32.mrf.mxu0
        %v1665 = vadd.f32 %v1550, %v1664
        %v1666 = vpop.f32.mrf.mxu0
        %v1667 = vadd.f32 %v1550, %v1666
        %1668 = vmatmul.bf16.gmra.mxu0 %v1512
        %v1669 = vpop.f32.mrf.mxu0
        %v1670 = vadd.f32 %v1550, %v1669
        %v1671 = vpop.f32.mrf.mxu0
        %v1672 = vadd.f32 %v1550, %v1671
        %1673 = vmatmul.bf16.gmra.mxu0 %v1513
        %v1674 = vpop.f32.mrf.mxu0
        %v1675 = vadd.f32 %v1550, %v1674
        %v1676 = vpop.f32.mrf.mxu0
        %v1677 = vadd.f32 %v1550, %v1676
        %1678 = vmatmul.bf16.gmra.mxu0 %v1514
        %v1679 = vpop.f32.mrf.mxu0
        %v1680 = vadd.f32 %v1550, %v1679
        %v1681 = vpop.f32.mrf.mxu0
        %v1682 = vadd.f32 %v1550, %v1681
        %1683 = vmatmul.bf16.gmra.mxu0 %v1515
        %v1684 = vpop.f32.mrf.mxu0
        %v1685 = vadd.f32 %v1550, %v1684
        %v1686 = vpop.f32.mrf.mxu0
        %v1687 = vadd.f32 %v1550, %v1686
        %1688 = vmatmul.bf16.gmra.mxu0 %v1516
        %v1689 = vpop.f32.mrf.mxu0
        %v1690 = vadd.f32 %v1550, %v1689
        %v1691 = vpop.f32.mrf.mxu0
        %v1692 = vadd.f32 %v1550, %v1691
        %1693 = vmatmul.bf16.gmra.mxu0 %v1517
        %v1694 = vpop.f32.mrf.mxu0
        %v1695 = vadd.f32 %v1550, %v1694
        %v1696 = vpop.f32.mrf.mxu0
        %v1697 = vadd.f32 %v1550, %v1696
        %1698 = vmatmul.bf16.gmra.mxu0 %v1518
        %v1699 = vpop.f32.mrf.mxu0
        %v1700 = vadd.f32 %v1550, %v1699
        %v1701 = vpop.f32.mrf.mxu0
        %v1702 = vadd.f32 %v1550, %v1701
        %1703 = vmatmul.bf16.gmra.mxu0 %v1519
        %v1704 = vpop.f32.mrf.mxu0
        %v1705 = vadd.f32 %v1550, %v1704
        %v1706 = vpop.f32.mrf.mxu0
        %v1707 = vadd.f32 %v1550, %v1706
        %1708 = vmatmul.bf16.gmra.mxu0 %v1520
        %v1709 = vpop.f32.mrf.mxu0
        %v1710 = vadd.f32 %v1550, %v1709
        %v1711 = vpop.f32.mrf.mxu0
        %v1712 = vadd.f32 %v1550, %v1711
        %1713 = vmatmul.bf16.gmra.mxu0 %v1521
        %v1714 = vpop.f32.mrf.mxu0
        %v1715 = vadd.f32 %v1550, %v1714
        %v1716 = vpop.f32.mrf.mxu0
        %v1717 = vadd.f32 %v1550, %v1716
        %1718 = vmatmul.bf16.gmra.mxu0 %v1522
        %v1719 = vpop.f32.mrf.mxu0
        %v1720 = vadd.f32 %v1550, %v1719
        %v1721 = vpop.f32.mrf.mxu0
        %v1722 = vadd.f32 %v1550, %v1721
        %1723 = vmatmul.bf16.gmra.mxu0 %v1523
        %v1724 = vpop.f32.mrf.mxu0
        %v1725 = vadd.f32 %v1550, %v1724
        %v1726 = vpop.f32.mrf.mxu0
        %v1727 = vadd.f32 %v1550, %v1726
        %1728 = vmatmul.bf16.gmra.mxu0 %v1524
        %v1729 = vpop.f32.mrf.mxu0
        %v1730 = vadd.f32 %v1550, %v1729
        %v1731 = vpop.f32.mrf.mxu0
        %v1732 = vadd.f32 %v1550, %v1731
        %1733 = vmatmul.bf16.gmra.mxu0 %v1525
        %v1734 = vpop.f32.mrf.mxu0
        %v1735 = vadd.f32 %v1550, %v1734
        %v1736 = vpop.f32.mrf.mxu0
        %v1737 = vadd.f32 %v1550, %v1736
        %1738 = vmatmul.bf16.gmra.mxu0 %v1526
        %v1739 = vpop.f32.mrf.mxu0
        %v1740 = vadd.f32 %v1550, %v1739
        %v1741 = vpop.f32.mrf.mxu0
        %v1742 = vadd.f32 %v1550, %v1741
        %1743 = vmatmul.bf16.gmra.mxu0 %v1527
        %v1744 = vpop.f32.mrf.mxu0
        %v1745 = vadd.f32 %v1550, %v1744
        %v1746 = vpop.f32.mrf.mxu0
        %v1747 = vadd.f32 %v1550, %v1746
        %1748 = vmatmul.bf16.gmra.mxu0 %v1528
        %v1749 = vpop.f32.mrf.mxu0
        %v1750 = vadd.f32 %v1550, %v1749
        %v1751 = vpop.f32.mrf.mxu0
        %v1752 = vadd.f32 %v1550, %v1751
        %1753 = vmatmul.bf16.gmra.mxu0 %v1529
        %v1754 = vpop.f32.mrf.mxu0
        %v1755 = vadd.f32 %v1550, %v1754
        %v1756 = vpop.f32.mrf.mxu0
        %v1757 = vadd.f32 %v1550, %v1756
        %1758 = vmatmul.bf16.gmra.mxu0 %v1530
        %v1759 = vpop.f32.mrf.mxu0
        %v1760 = vadd.f32 %v1550, %v1759
        %v1761 = vpop.f32.mrf.mxu0
        %v1762 = vadd.f32 %v1550, %v1761
        %1763 = vmatmul.bf16.gmra.mxu0 %v1531
        %v1764 = vpop.f32.mrf.mxu0
        %v1765 = vadd.f32 %v1550, %v1764
        %v1766 = vpop.f32.mrf.mxu0
        %v1767 = vadd.f32 %v1550, %v1766
        %1768 = vdwg.mxu0
        %v1769 = vmax.f32 %v1610, 0.0
        %v1770 = vmax.f32 %v1612, 0.0
        %v1771 = vmax.f32 %v1615, 0.0
        %v1772 = vmax.f32 %v1617, 0.0
        %v1773 = vmax.f32 %v1620, 0.0
        %v1774 = vmax.f32 %v1622, 0.0
        %v1775 = vmax.f32 %v1625, 0.0
        %v1776 = vmax.f32 %v1627, 0.0
        %v1777 = vmax.f32 %v1630, 0.0
        %v1778 = vmax.f32 %v1632, 0.0
        %v1779 = vmax.f32 %v1635, 0.0
        %v1780 = vmax.f32 %v1637, 0.0
        %v1781 = vmax.f32 %v1640, 0.0
        %v1782 = vmax.f32 %v1642, 0.0
        %v1783 = vmax.f32 %v1645, 0.0
        %v1784 = vmax.f32 %v1647, 0.0
        %v1785 = vmax.f32 %v1650, 0.0
        %v1786 = vmax.f32 %v1652, 0.0
        %v1787 = vmax.f32 %v1655, 0.0
        %v1788 = vmax.f32 %v1657, 0.0
        %v1789 = vmax.f32 %v1660, 0.0
        %v1790 = vmax.f32 %v1662, 0.0
        %v1791 = vmax.f32 %v1665, 0.0
        %v1792 = vmax.f32 %v1667, 0.0
        %v1793 = vmax.f32 %v1670, 0.0
        %v1794 = vmax.f32 %v1672, 0.0
        %v1795 = vmax.f32 %v1675, 0.0
        %v1796 = vmax.f32 %v1677, 0.0
        %v1797 = vmax.f32 %v1680, 0.0
        %v1798 = vmax.f32 %v1682, 0.0
        %v1799 = vmax.f32 %v1685, 0.0
        %v1800 = vmax.f32 %v1687, 0.0
        %v1801 = vmax.f32 %v1690, 0.0
        %v1802 = vmax.f32 %v1692, 0.0
        %v1803 = vmax.f32 %v1695, 0.0
        %v1804 = vmax.f32 %v1697, 0.0
        %v1805 = vmax.f32 %v1700, 0.0
        %v1806 = vmax.f32 %v1702, 0.0
        %v1807 = vmax.f32 %v1705, 0.0
        %v1808 = vmax.f32 %v1707, 0.0
        %v1809 = vmax.f32 %v1710, 0.0
        %v1810 = vmax.f32 %v1712, 0.0
        %v1811 = vmax.f32 %v1715, 0.0
        %v1812 = vmax.f32 %v1717, 0.0
        %v1813 = vmax.f32 %v1720, 0.0
        %v1814 = vmax.f32 %v1722, 0.0
        %v1815 = vmax.f32 %v1725, 0.0
        %v1816 = vmax.f32 %v1727, 0.0
        %v1817 = vmax.f32 %v1730, 0.0
        %v1818 = vmax.f32 %v1732, 0.0
        %v1819 = vmax.f32 %v1735, 0.0
        %v1820 = vmax.f32 %v1737, 0.0
        %v1821 = vmax.f32 %v1740, 0.0
        %v1822 = vmax.f32 %v1742, 0.0
        %v1823 = vmax.f32 %v1745, 0.0
        %v1824 = vmax.f32 %v1747, 0.0
        %v1825 = vmax.f32 %v1750, 0.0
        %v1826 = vmax.f32 %v1752, 0.0
        %v1827 = vmax.f32 %v1755, 0.0
        %v1828 = vmax.f32 %v1757, 0.0
        %v1829 = vmax.f32 %v1760, 0.0
        %v1830 = vmax.f32 %v1762, 0.0
        %v1831 = vmax.f32 %v1765, 0.0
        %v1832 = vmax.f32 %v1767, 0.0
        %v1833 = vpack.c.bf16 %v1770, %v1769
        %v1834 = vpack.c.bf16 %v1772, %v1771
        %v1835 = vpack.c.bf16 %v1774, %v1773
        %v1836 = vpack.c.bf16 %v1776, %v1775
        %v1837 = vpack.c.bf16 %v1778, %v1777
        %v1838 = vpack.c.bf16 %v1780, %v1779
        %v1839 = vpack.c.bf16 %v1782, %v1781
        %v1840 = vpack.c.bf16 %v1784, %v1783
        %v1841 = vpack.c.bf16 %v1786, %v1785
        %v1842 = vpack.c.bf16 %v1788, %v1787
        %v1843 = vpack.c.bf16 %v1790, %v1789
        %v1844 = vpack.c.bf16 %v1792, %v1791
        %v1845 = vpack.c.bf16 %v1794, %v1793
        %v1846 = vpack.c.bf16 %v1796, %v1795
        %v1847 = vpack.c.bf16 %v1798, %v1797
        %v1848 = vpack.c.bf16 %v1800, %v1799
        %v1849 = vpack.c.bf16 %v1802, %v1801
        %v1850 = vpack.c.bf16 %v1804, %v1803
        %v1851 = vpack.c.bf16 %v1806, %v1805
        %v1852 = vpack.c.bf16 %v1808, %v1807
        %v1853 = vpack.c.bf16 %v1810, %v1809
        %v1854 = vpack.c.bf16 %v1812, %v1811
        %v1855 = vpack.c.bf16 %v1814, %v1813
        %v1856 = vpack.c.bf16 %v1816, %v1815
        %v1857 = vpack.c.bf16 %v1818, %v1817
        %v1858 = vpack.c.bf16 %v1820, %v1819
        %v1859 = vpack.c.bf16 %v1822, %v1821
        %v1860 = vpack.c.bf16 %v1824, %v1823
        %v1861 = vpack.c.bf16 %v1826, %v1825
        %v1862 = vpack.c.bf16 %v1828, %v1827
        %v1863 = vpack.c.bf16 %v1830, %v1829
        %v1864 = vpack.c.bf16 %v1832, %v1831
        %v1865 = vld [vmem:[%s7] sm:$0xf]
        %v1866 = vld [vmem:[%s7 + $0x4] sm:$0xf]
        %v1867 = vld [vmem:[%s7 + $0x8] sm:$0xf]
        %v1868 = vld [vmem:[%s7 + $0xc] sm:$0xf]
        %v1869 = vld [vmem:[%s8] sm:$0x1]
        %v1871 = vperm.slane %v1869, 0
        %v1877 = vunpack.c.l.b16 %v1865
        %v1878 = vunpack.c.l.b16 %v1866
        %v1879 = vunpack.c.l.b16 %v1867
        %v1880 = vunpack.c.l.b16 %v1868
        %v1881 = vpack.c.b16 %v1878, %v1877
        %v1882 = vpack.c.b16 %v1880, %v1879
        %vm1885 = vcmask 261120
        %v1887 = vsel %vm1885, %v1833, 0
        %v1890 = vsel %vm1885, %v1834, 0
        %v1893 = vsel %vm1885, %v1835, 0
        %v1896 = vsel %vm1885, %v1836, 0
        %v1899 = vsel %vm1885, %v1837, 0
        %v1902 = vsel %vm1885, %v1838, 0
        %v1905 = vsel %vm1885, %v1839, 0
        %v1908 = vsel %vm1885, %v1840, 0
        %v1911 = vsel %vm1885, %v1841, 0
        %v1914 = vsel %vm1885, %v1842, 0
        %v1917 = vsel %vm1885, %v1843, 0
        %v1920 = vsel %vm1885, %v1844, 0
        %v1923 = vsel %vm1885, %v1845, 0
        %v1926 = vsel %vm1885, %v1846, 0
        %v1929 = vsel %vm1885, %v1847, 0
        %v1932 = vsel %vm1885, %v1848, 0
        %v1935 = vsel %vm1885, %v1849, 0
        %v1938 = vsel %vm1885, %v1850, 0
        %v1941 = vsel %vm1885, %v1851, 0
        %v1944 = vsel %vm1885, %v1852, 0
        %v1947 = vsel %vm1885, %v1853, 0
        %v1950 = vsel %vm1885, %v1854, 0
        %v1953 = vsel %vm1885, %v1855, 0
        %v1956 = vsel %vm1885, %v1856, 0
        %v1959 = vsel %vm1885, %v1857, 0
        %v1962 = vsel %vm1885, %v1858, 0
        %v1965 = vsel %vm1885, %v1859, 0
        %v1968 = vsel %vm1885, %v1860, 0
        %v1971 = vsel %vm1885, %v1861, 0
        %v1974 = vsel %vm1885, %v1862, 0
        %v1977 = vsel %vm1885, %v1863, 0
        %v1980 = vsel %vm1885, %v1864, 0
        %1982 = vmatpush.bf16.msra.mxu0 0
        %1983 = vmatpush.bf16.msra.mxu0 0
        %1984 = vmatpush.bf16.msra.mxu0 0
        %1985 = vmatpush.bf16.msra.mxu0 0
        %1986 = vmatpush.bf16.msra.mxu0 0
        %1987 = vmatpush.bf16.msra.mxu0 0
        %1988 = vmatpush.bf16.msra.mxu0 %v1882
        %1989 = vmatpush.bf16.msra.mxu0 %v1881
        %1990 = vmatmul.bf16.gmra.mxu0 %v1887
        %v1991 = vpop.f32.mrf.mxu0
        %v1992 = vadd.f32 %v1871, %v1991
        %v1993 = vpop.f32.mrf.mxu0
        %v1994 = vadd.f32 %v1871, %v1993
        %1995 = vmatmul.bf16.gmra.mxu0 %v1890
        %v1996 = vpop.f32.mrf.mxu0
        %v1997 = vadd.f32 %v1871, %v1996
        %v1998 = vpop.f32.mrf.mxu0
        %v1999 = vadd.f32 %v1871, %v1998
        %2000 = vmatmul.bf16.gmra.mxu0 %v1893
        %v2001 = vpop.f32.mrf.mxu0
        %v2002 = vadd.f32 %v1871, %v2001
        %v2003 = vpop.f32.mrf.mxu0
        %v2004 = vadd.f32 %v1871, %v2003
        %2005 = vmatmul.bf16.gmra.mxu0 %v1896
        %v2006 = vpop.f32.mrf.mxu0
        %v2007 = vadd.f32 %v1871, %v2006
        %v2008 = vpop.f32.mrf.mxu0
        %v2009 = vadd.f32 %v1871, %v2008
        %2010 = vmatmul.bf16.gmra.mxu0 %v1899
        %v2011 = vpop.f32.mrf.mxu0
        %v2012 = vadd.f32 %v1871, %v2011
        %v2013 = vpop.f32.mrf.mxu0
        %v2014 = vadd.f32 %v1871, %v2013
        %2015 = vmatmul.bf16.gmra.mxu0 %v1902
        %v2016 = vpop.f32.mrf.mxu0
        %v2017 = vadd.f32 %v1871, %v2016
        %v2018 = vpop.f32.mrf.mxu0
        %v2019 = vadd.f32 %v1871, %v2018
        %2020 = vmatmul.bf16.gmra.mxu0 %v1905
        %v2021 = vpop.f32.mrf.mxu0
        %v2022 = vadd.f32 %v1871, %v2021
        %v2023 = vpop.f32.mrf.mxu0
        %v2024 = vadd.f32 %v1871, %v2023
        %2025 = vmatmul.bf16.gmra.mxu0 %v1908
        %v2026 = vpop.f32.mrf.mxu0
        %v2027 = vadd.f32 %v1871, %v2026
        %v2028 = vpop.f32.mrf.mxu0
        %v2029 = vadd.f32 %v1871, %v2028
        %2030 = vmatmul.bf16.gmra.mxu0 %v1911
        %v2031 = vpop.f32.mrf.mxu0
        %v2032 = vadd.f32 %v1871, %v2031
        %v2033 = vpop.f32.mrf.mxu0
        %v2034 = vadd.f32 %v1871, %v2033
        %2035 = vmatmul.bf16.gmra.mxu0 %v1914
        %v2036 = vpop.f32.mrf.mxu0
        %v2037 = vadd.f32 %v1871, %v2036
        %v2038 = vpop.f32.mrf.mxu0
        %v2039 = vadd.f32 %v1871, %v2038
        %2040 = vmatmul.bf16.gmra.mxu0 %v1917
        %v2041 = vpop.f32.mrf.mxu0
        %v2042 = vadd.f32 %v1871, %v2041
        %v2043 = vpop.f32.mrf.mxu0
        %v2044 = vadd.f32 %v1871, %v2043
        %2045 = vmatmul.bf16.gmra.mxu0 %v1920
        %v2046 = vpop.f32.mrf.mxu0
        %v2047 = vadd.f32 %v1871, %v2046
        %v2048 = vpop.f32.mrf.mxu0
        %v2049 = vadd.f32 %v1871, %v2048
        %2050 = vmatmul.bf16.gmra.mxu0 %v1923
        %v2051 = vpop.f32.mrf.mxu0
        %v2052 = vadd.f32 %v1871, %v2051
        %v2053 = vpop.f32.mrf.mxu0
        %v2054 = vadd.f32 %v1871, %v2053
        %2055 = vmatmul.bf16.gmra.mxu0 %v1926
        %v2056 = vpop.f32.mrf.mxu0
        %v2057 = vadd.f32 %v1871, %v2056
        %v2058 = vpop.f32.mrf.mxu0
        %v2059 = vadd.f32 %v1871, %v2058
        %2060 = vmatmul.bf16.gmra.mxu0 %v1929
        %v2061 = vpop.f32.mrf.mxu0
        %v2062 = vadd.f32 %v1871, %v2061
        %v2063 = vpop.f32.mrf.mxu0
        %v2064 = vadd.f32 %v1871, %v2063
        %2065 = vmatmul.bf16.gmra.mxu0 %v1932
        %v2066 = vpop.f32.mrf.mxu0
        %v2067 = vadd.f32 %v1871, %v2066
        %v2068 = vpop.f32.mrf.mxu0
        %v2069 = vadd.f32 %v1871, %v2068
        %2070 = vmatmul.bf16.gmra.mxu0 %v1935
        %v2071 = vpop.f32.mrf.mxu0
        %v2072 = vadd.f32 %v1871, %v2071
        %v2073 = vpop.f32.mrf.mxu0
        %v2074 = vadd.f32 %v1871, %v2073
        %2075 = vmatmul.bf16.gmra.mxu0 %v1938
        %v2076 = vpop.f32.mrf.mxu0
        %v2077 = vadd.f32 %v1871, %v2076
        %v2078 = vpop.f32.mrf.mxu0
        %v2079 = vadd.f32 %v1871, %v2078
        %2080 = vmatmul.bf16.gmra.mxu0 %v1941
        %v2081 = vpop.f32.mrf.mxu0
        %v2082 = vadd.f32 %v1871, %v2081
        %v2083 = vpop.f32.mrf.mxu0
        %v2084 = vadd.f32 %v1871, %v2083
        %2085 = vmatmul.bf16.gmra.mxu0 %v1944
        %v2086 = vpop.f32.mrf.mxu0
        %v2087 = vadd.f32 %v1871, %v2086
        %v2088 = vpop.f32.mrf.mxu0
        %v2089 = vadd.f32 %v1871, %v2088
        %2090 = vmatmul.bf16.gmra.mxu0 %v1947
        %v2091 = vpop.f32.mrf.mxu0
        %v2092 = vadd.f32 %v1871, %v2091
        %v2093 = vpop.f32.mrf.mxu0
        %v2094 = vadd.f32 %v1871, %v2093
        %2095 = vmatmul.bf16.gmra.mxu0 %v1950
        %v2096 = vpop.f32.mrf.mxu0
        %v2097 = vadd.f32 %v1871, %v2096
        %v2098 = vpop.f32.mrf.mxu0
        %v2099 = vadd.f32 %v1871, %v2098
        %2100 = vmatmul.bf16.gmra.mxu0 %v1953
        %v2101 = vpop.f32.mrf.mxu0
        %v2102 = vadd.f32 %v1871, %v2101
        %v2103 = vpop.f32.mrf.mxu0
        %v2104 = vadd.f32 %v1871, %v2103
        %2105 = vmatmul.bf16.gmra.mxu0 %v1956
        %v2106 = vpop.f32.mrf.mxu0
        %v2107 = vadd.f32 %v1871, %v2106
        %v2108 = vpop.f32.mrf.mxu0
        %v2109 = vadd.f32 %v1871, %v2108
        %2110 = vmatmul.bf16.gmra.mxu0 %v1959
        %v2111 = vpop.f32.mrf.mxu0
        %v2112 = vadd.f32 %v1871, %v2111
        %v2113 = vpop.f32.mrf.mxu0
        %v2114 = vadd.f32 %v1871, %v2113
        %2115 = vmatmul.bf16.gmra.mxu0 %v1962
        %v2116 = vpop.f32.mrf.mxu0
        %v2117 = vadd.f32 %v1871, %v2116
        %v2118 = vpop.f32.mrf.mxu0
        %v2119 = vadd.f32 %v1871, %v2118
        %2120 = vmatmul.bf16.gmra.mxu0 %v1965
        %v2121 = vpop.f32.mrf.mxu0
        %v2122 = vadd.f32 %v1871, %v2121
        %v2123 = vpop.f32.mrf.mxu0
        %v2124 = vadd.f32 %v1871, %v2123
        %2125 = vmatmul.bf16.gmra.mxu0 %v1968
        %v2126 = vpop.f32.mrf.mxu0
        %v2127 = vadd.f32 %v1871, %v2126
        %v2128 = vpop.f32.mrf.mxu0
        %v2129 = vadd.f32 %v1871, %v2128
        %2130 = vmatmul.bf16.gmra.mxu0 %v1971
        %v2131 = vpop.f32.mrf.mxu0
        %v2132 = vadd.f32 %v1871, %v2131
        %v2133 = vpop.f32.mrf.mxu0
        %v2134 = vadd.f32 %v1871, %v2133
        %2135 = vmatmul.bf16.gmra.mxu0 %v1974
        %v2136 = vpop.f32.mrf.mxu0
        %v2137 = vadd.f32 %v1871, %v2136
        %v2138 = vpop.f32.mrf.mxu0
        %v2139 = vadd.f32 %v1871, %v2138
        %2140 = vmatmul.bf16.gmra.mxu0 %v1977
        %v2141 = vpop.f32.mrf.mxu0
        %v2142 = vadd.f32 %v1871, %v2141
        %v2143 = vpop.f32.mrf.mxu0
        %v2144 = vadd.f32 %v1871, %v2143
        %2145 = vmatmul.bf16.gmra.mxu0 %v1980
        %v2146 = vpop.f32.mrf.mxu0
        %v2147 = vadd.f32 %v1871, %v2146
        %v2148 = vpop.f32.mrf.mxu0
        %v2149 = vadd.f32 %v1871, %v2148
        %2150 = vdwg.mxu0
        %v2151 = vmax.f32 %v1992, 0.0
        %v2152 = vmax.f32 %v1994, 0.0
        %v2153 = vmax.f32 %v1997, 0.0
        %v2154 = vmax.f32 %v1999, 0.0
        %v2155 = vmax.f32 %v2002, 0.0
        %v2156 = vmax.f32 %v2004, 0.0
        %v2157 = vmax.f32 %v2007, 0.0
        %v2158 = vmax.f32 %v2009, 0.0
        %v2159 = vmax.f32 %v2012, 0.0
        %v2160 = vmax.f32 %v2014, 0.0
        %v2161 = vmax.f32 %v2017, 0.0
        %v2162 = vmax.f32 %v2019, 0.0
        %v2163 = vmax.f32 %v2022, 0.0
        %v2164 = vmax.f32 %v2024, 0.0
        %v2165 = vmax.f32 %v2027, 0.0
        %v2166 = vmax.f32 %v2029, 0.0
        %v2167 = vmax.f32 %v2032, 0.0
        %v2168 = vmax.f32 %v2034, 0.0
        %v2169 = vmax.f32 %v2037, 0.0
        %v2170 = vmax.f32 %v2039, 0.0
        %v2171 = vmax.f32 %v2042, 0.0
        %v2172 = vmax.f32 %v2044, 0.0
        %v2173 = vmax.f32 %v2047, 0.0
        %v2174 = vmax.f32 %v2049, 0.0
        %v2175 = vmax.f32 %v2052, 0.0
        %v2176 = vmax.f32 %v2054, 0.0
        %v2177 = vmax.f32 %v2057, 0.0
        %v2178 = vmax.f32 %v2059, 0.0
        %v2179 = vmax.f32 %v2062, 0.0
        %v2180 = vmax.f32 %v2064, 0.0
        %v2181 = vmax.f32 %v2067, 0.0
        %v2182 = vmax.f32 %v2069, 0.0
        %v2183 = vmax.f32 %v2072, 0.0
        %v2184 = vmax.f32 %v2074, 0.0
        %v2185 = vmax.f32 %v2077, 0.0
        %v2186 = vmax.f32 %v2079, 0.0
        %v2187 = vmax.f32 %v2082, 0.0
        %v2188 = vmax.f32 %v2084, 0.0
        %v2189 = vmax.f32 %v2087, 0.0
        %v2190 = vmax.f32 %v2089, 0.0
        %v2191 = vmax.f32 %v2092, 0.0
        %v2192 = vmax.f32 %v2094, 0.0
        %v2193 = vmax.f32 %v2097, 0.0
        %v2194 = vmax.f32 %v2099, 0.0
        %v2195 = vmax.f32 %v2102, 0.0
        %v2196 = vmax.f32 %v2104, 0.0
        %v2197 = vmax.f32 %v2107, 0.0
        %v2198 = vmax.f32 %v2109, 0.0
        %v2199 = vmax.f32 %v2112, 0.0
        %v2200 = vmax.f32 %v2114, 0.0
        %v2201 = vmax.f32 %v2117, 0.0
        %v2202 = vmax.f32 %v2119, 0.0
        %v2203 = vmax.f32 %v2122, 0.0
        %v2204 = vmax.f32 %v2124, 0.0
        %v2205 = vmax.f32 %v2127, 0.0
        %v2206 = vmax.f32 %v2129, 0.0
        %v2207 = vmax.f32 %v2132, 0.0
        %v2208 = vmax.f32 %v2134, 0.0
        %v2209 = vmax.f32 %v2137, 0.0
        %v2210 = vmax.f32 %v2139, 0.0
        %v2211 = vmax.f32 %v2142, 0.0
        %v2212 = vmax.f32 %v2144, 0.0
        %v2213 = vmax.f32 %v2147, 0.0
        %v2214 = vmax.f32 %v2149, 0.0
        %v2215 = vpack.c.bf16 %v2152, %v2151
        %v2216 = vpack.c.bf16 %v2154, %v2153
        %v2217 = vpack.c.bf16 %v2156, %v2155
        %v2218 = vpack.c.bf16 %v2158, %v2157
        %v2219 = vpack.c.bf16 %v2160, %v2159
        %v2220 = vpack.c.bf16 %v2162, %v2161
        %v2221 = vpack.c.bf16 %v2164, %v2163
        %v2222 = vpack.c.bf16 %v2166, %v2165
        %v2223 = vpack.c.bf16 %v2168, %v2167
        %v2224 = vpack.c.bf16 %v2170, %v2169
        %v2225 = vpack.c.bf16 %v2172, %v2171
        %v2226 = vpack.c.bf16 %v2174, %v2173
        %v2227 = vpack.c.bf16 %v2176, %v2175
        %v2228 = vpack.c.bf16 %v2178, %v2177
        %v2229 = vpack.c.bf16 %v2180, %v2179
        %v2230 = vpack.c.bf16 %v2182, %v2181
        %v2231 = vpack.c.bf16 %v2184, %v2183
        %v2232 = vpack.c.bf16 %v2186, %v2185
        %v2233 = vpack.c.bf16 %v2188, %v2187
        %v2234 = vpack.c.bf16 %v2190, %v2189
        %v2235 = vpack.c.bf16 %v2192, %v2191
        %v2236 = vpack.c.bf16 %v2194, %v2193
        %v2237 = vpack.c.bf16 %v2196, %v2195
        %v2238 = vpack.c.bf16 %v2198, %v2197
        %v2239 = vpack.c.bf16 %v2200, %v2199
        %v2240 = vpack.c.bf16 %v2202, %v2201
        %v2241 = vpack.c.bf16 %v2204, %v2203
        %v2242 = vpack.c.bf16 %v2206, %v2205
        %v2243 = vpack.c.bf16 %v2208, %v2207
        %v2244 = vpack.c.bf16 %v2210, %v2209
        %v2245 = vpack.c.bf16 %v2212, %v2211
        %v2246 = vpack.c.bf16 %v2214, %v2213
        %v2247 = vld [vmem:[%s478] sm:$0xf]
        %v2248 = vld [vmem:[%s478 + $0x4] sm:$0xf]
        %v2249 = vld [vmem:[%s478 + $0x8] sm:$0xf]
        %v2250 = vld [vmem:[%s478 + $0xc] sm:$0xf]
        %v2255 = vunpack.c.l.b16 %v2247
        %v2256 = vunpack.c.l.b16 %v2248
        %v2257 = vunpack.c.l.b16 %v2249
        %v2258 = vunpack.c.l.b16 %v2250
        %v2259 = vpack.c.b16 %v2256, %v2255
        %v2260 = vpack.c.b16 %v2258, %v2257
        %v2264 = vsel %vm1885, %v2215, 0
        %v2267 = vsel %vm1885, %v2216, 0
        %v2270 = vsel %vm1885, %v2217, 0
        %v2273 = vsel %vm1885, %v2218, 0
        %v2276 = vsel %vm1885, %v2219, 0
        %v2279 = vsel %vm1885, %v2220, 0
        %v2282 = vsel %vm1885, %v2221, 0
        %v2285 = vsel %vm1885, %v2222, 0
        %v2288 = vsel %vm1885, %v2223, 0
        %v2291 = vsel %vm1885, %v2224, 0
        %v2294 = vsel %vm1885, %v2225, 0
        %v2297 = vsel %vm1885, %v2226, 0
        %v2300 = vsel %vm1885, %v2227, 0
        %v2303 = vsel %vm1885, %v2228, 0
        %v2306 = vsel %vm1885, %v2229, 0
        %v2309 = vsel %vm1885, %v2230, 0
        %v2312 = vsel %vm1885, %v2231, 0
        %v2315 = vsel %vm1885, %v2232, 0
        %v2318 = vsel %vm1885, %v2233, 0
        %v2321 = vsel %vm1885, %v2234, 0
        %v2324 = vsel %vm1885, %v2235, 0
        %v2327 = vsel %vm1885, %v2236, 0
        %v2330 = vsel %vm1885, %v2237, 0
        %v2333 = vsel %vm1885, %v2238, 0
        %v2336 = vsel %vm1885, %v2239, 0
        %v2339 = vsel %vm1885, %v2240, 0
        %v2342 = vsel %vm1885, %v2241, 0
        %v2345 = vsel %vm1885, %v2242, 0
        %v2348 = vsel %vm1885, %v2243, 0
        %v2351 = vsel %vm1885, %v2244, 0
        %v2354 = vsel %vm1885, %v2245, 0
        %v2357 = vsel %vm1885, %v2246, 0
        %2359 = vmatpush.bf16.msra.mxu0 0
        %2360 = vmatpush.bf16.msra.mxu0 0
        %2361 = vmatpush.bf16.msra.mxu0 0
        %2362 = vmatpush.bf16.msra.mxu0 0
        %2363 = vmatpush.bf16.msra.mxu0 0
        %2364 = vmatpush.bf16.msra.mxu0 0
        %2365 = vmatpush.bf16.msra.mxu0 %v2260
        %2366 = vmatpush.bf16.msra.mxu0 %v2259
        %2367 = vmatmul.bf16.gmra.mxu0 %v2264
        %v2368 = vpop.f32.mrf.mxu0
        %v2369 = vadd.f32 0.0, %v2368
        %v2370 = vpop.f32.mrf.mxu0
        %v2371 = vadd.f32 0.0, %v2370
        %2372 = vmatmul.bf16.gmra.mxu0 %v2267
        %v2373 = vpop.f32.mrf.mxu0
        %v2374 = vadd.f32 0.0, %v2373
        %v2375 = vpop.f32.mrf.mxu0
        %v2376 = vadd.f32 0.0, %v2375
        %2377 = vmatmul.bf16.gmra.mxu0 %v2270
        %v2378 = vpop.f32.mrf.mxu0
        %v2379 = vadd.f32 0.0, %v2378
        %v2380 = vpop.f32.mrf.mxu0
        %v2381 = vadd.f32 0.0, %v2380
        %2382 = vmatmul.bf16.gmra.mxu0 %v2273
        %v2383 = vpop.f32.mrf.mxu0
        %v2384 = vadd.f32 0.0, %v2383
        %v2385 = vpop.f32.mrf.mxu0
        %v2386 = vadd.f32 0.0, %v2385
        %2387 = vmatmul.bf16.gmra.mxu0 %v2276
        %v2388 = vpop.f32.mrf.mxu0
        %v2389 = vadd.f32 0.0, %v2388
        %v2390 = vpop.f32.mrf.mxu0
        %v2391 = vadd.f32 0.0, %v2390
        %2392 = vmatmul.bf16.gmra.mxu0 %v2279
        %v2393 = vpop.f32.mrf.mxu0
        %v2394 = vadd.f32 0.0, %v2393
        %v2395 = vpop.f32.mrf.mxu0
        %v2396 = vadd.f32 0.0, %v2395
        %2397 = vmatmul.bf16.gmra.mxu0 %v2282
        %v2398 = vpop.f32.mrf.mxu0
        %v2399 = vadd.f32 0.0, %v2398
        %v2400 = vpop.f32.mrf.mxu0
        %v2401 = vadd.f32 0.0, %v2400
        %2402 = vmatmul.bf16.gmra.mxu0 %v2285
        %v2403 = vpop.f32.mrf.mxu0
        %v2404 = vadd.f32 0.0, %v2403
        %v2405 = vpop.f32.mrf.mxu0
        %v2406 = vadd.f32 0.0, %v2405
        %2407 = vmatmul.bf16.gmra.mxu0 %v2288
        %v2408 = vpop.f32.mrf.mxu0
        %v2409 = vadd.f32 0.0, %v2408
        %v2410 = vpop.f32.mrf.mxu0
        %v2411 = vadd.f32 0.0, %v2410
        %2412 = vmatmul.bf16.gmra.mxu0 %v2291
        %v2413 = vpop.f32.mrf.mxu0
        %v2414 = vadd.f32 0.0, %v2413
        %v2415 = vpop.f32.mrf.mxu0
        %v2416 = vadd.f32 0.0, %v2415
        %2417 = vmatmul.bf16.gmra.mxu0 %v2294
        %v2418 = vpop.f32.mrf.mxu0
        %v2419 = vadd.f32 0.0, %v2418
        %v2420 = vpop.f32.mrf.mxu0
        %v2421 = vadd.f32 0.0, %v2420
        %2422 = vmatmul.bf16.gmra.mxu0 %v2297
        %v2423 = vpop.f32.mrf.mxu0
        %v2424 = vadd.f32 0.0, %v2423
        %v2425 = vpop.f32.mrf.mxu0
        %v2426 = vadd.f32 0.0, %v2425
        %2427 = vmatmul.bf16.gmra.mxu0 %v2300
        %v2428 = vpop.f32.mrf.mxu0
        %v2429 = vadd.f32 0.0, %v2428
        %v2430 = vpop.f32.mrf.mxu0
        %v2431 = vadd.f32 0.0, %v2430
        %2432 = vmatmul.bf16.gmra.mxu0 %v2303
        %v2433 = vpop.f32.mrf.mxu0
        %v2434 = vadd.f32 0.0, %v2433
        %v2435 = vpop.f32.mrf.mxu0
        %v2436 = vadd.f32 0.0, %v2435
        %2437 = vmatmul.bf16.gmra.mxu0 %v2306
        %v2438 = vpop.f32.mrf.mxu0
        %v2439 = vadd.f32 0.0, %v2438
        %v2440 = vpop.f32.mrf.mxu0
        %v2441 = vadd.f32 0.0, %v2440
        %2442 = vmatmul.bf16.gmra.mxu0 %v2309
        %v2443 = vpop.f32.mrf.mxu0
        %v2444 = vadd.f32 0.0, %v2443
        %v2445 = vpop.f32.mrf.mxu0
        %v2446 = vadd.f32 0.0, %v2445
        %2447 = vmatmul.bf16.gmra.mxu0 %v2312
        %v2448 = vpop.f32.mrf.mxu0
        %v2449 = vadd.f32 0.0, %v2448
        %v2450 = vpop.f32.mrf.mxu0
        %v2451 = vadd.f32 0.0, %v2450
        %2452 = vmatmul.bf16.gmra.mxu0 %v2315
        %v2453 = vpop.f32.mrf.mxu0
        %v2454 = vadd.f32 0.0, %v2453
        %v2455 = vpop.f32.mrf.mxu0
        %v2456 = vadd.f32 0.0, %v2455
        %2457 = vmatmul.bf16.gmra.mxu0 %v2318
        %v2458 = vpop.f32.mrf.mxu0
        %v2459 = vadd.f32 0.0, %v2458
        %v2460 = vpop.f32.mrf.mxu0
        %v2461 = vadd.f32 0.0, %v2460
        %2462 = vmatmul.bf16.gmra.mxu0 %v2321
        %v2463 = vpop.f32.mrf.mxu0
        %v2464 = vadd.f32 0.0, %v2463
        %v2465 = vpop.f32.mrf.mxu0
        %v2466 = vadd.f32 0.0, %v2465
        %2467 = vmatmul.bf16.gmra.mxu0 %v2324
        %v2468 = vpop.f32.mrf.mxu0
        %v2469 = vadd.f32 0.0, %v2468
        %v2470 = vpop.f32.mrf.mxu0
        %v2471 = vadd.f32 0.0, %v2470
        %2472 = vmatmul.bf16.gmra.mxu0 %v2327
        %v2473 = vpop.f32.mrf.mxu0
        %v2474 = vadd.f32 0.0, %v2473
        %v2475 = vpop.f32.mrf.mxu0
        %v2476 = vadd.f32 0.0, %v2475
        %2477 = vmatmul.bf16.gmra.mxu0 %v2330
        %v2478 = vpop.f32.mrf.mxu0
        %v2479 = vadd.f32 0.0, %v2478
        %v2480 = vpop.f32.mrf.mxu0
        %v2481 = vadd.f32 0.0, %v2480
        %2482 = vmatmul.bf16.gmra.mxu0 %v2333
        %v2483 = vpop.f32.mrf.mxu0
        %v2484 = vadd.f32 0.0, %v2483
        %v2485 = vpop.f32.mrf.mxu0
        %v2486 = vadd.f32 0.0, %v2485
        %2487 = vmatmul.bf16.gmra.mxu0 %v2336
        %v2488 = vpop.f32.mrf.mxu0
        %v2489 = vadd.f32 0.0, %v2488
        %v2490 = vpop.f32.mrf.mxu0
        %v2491 = vadd.f32 0.0, %v2490
        %2492 = vmatmul.bf16.gmra.mxu0 %v2339
        %v2493 = vpop.f32.mrf.mxu0
        %v2494 = vadd.f32 0.0, %v2493
        %v2495 = vpop.f32.mrf.mxu0
        %v2496 = vadd.f32 0.0, %v2495
        %2497 = vmatmul.bf16.gmra.mxu0 %v2342
        %v2498 = vpop.f32.mrf.mxu0
        %v2499 = vadd.f32 0.0, %v2498
        %v2500 = vpop.f32.mrf.mxu0
        %v2501 = vadd.f32 0.0, %v2500
        %2502 = vmatmul.bf16.gmra.mxu0 %v2345
        %v2503 = vpop.f32.mrf.mxu0
        %v2504 = vadd.f32 0.0, %v2503
        %v2505 = vpop.f32.mrf.mxu0
        %v2506 = vadd.f32 0.0, %v2505
        %2507 = vmatmul.bf16.gmra.mxu0 %v2348
        %v2508 = vpop.f32.mrf.mxu0
        %v2509 = vadd.f32 0.0, %v2508
        %v2510 = vpop.f32.mrf.mxu0
        %v2511 = vadd.f32 0.0, %v2510
        %2512 = vmatmul.bf16.gmra.mxu0 %v2351
        %v2513 = vpop.f32.mrf.mxu0
        %v2514 = vadd.f32 0.0, %v2513
        %v2515 = vpop.f32.mrf.mxu0
        %v2516 = vadd.f32 0.0, %v2515
        %2517 = vmatmul.bf16.gmra.mxu0 %v2354
        %v2518 = vpop.f32.mrf.mxu0
        %v2519 = vadd.f32 0.0, %v2518
        %v2520 = vpop.f32.mrf.mxu0
        %v2521 = vadd.f32 0.0, %v2520
        %2522 = vmatmul.bf16.gmra.mxu0 %v2357
        %v2523 = vpop.f32.mrf.mxu0
        %v2524 = vadd.f32 0.0, %v2523
        %v2525 = vpop.f32.mrf.mxu0
        %v2526 = vadd.f32 0.0, %v2525
        %2527 = vdwg.mxu0
        %v2528 = vpack.c.bf16 %v2371, %v2369
        %v2529 = vpack.c.bf16 %v2376, %v2374
        %v2530 = vpack.c.bf16 %v2381, %v2379
        %v2531 = vpack.c.bf16 %v2386, %v2384
        %v2532 = vpack.c.bf16 %v2391, %v2389
        %v2533 = vpack.c.bf16 %v2396, %v2394
        %v2534 = vpack.c.bf16 %v2401, %v2399
        %v2535 = vpack.c.bf16 %v2406, %v2404
        %v2536 = vpack.c.bf16 %v2411, %v2409
        %v2537 = vpack.c.bf16 %v2416, %v2414
        %v2538 = vpack.c.bf16 %v2421, %v2419
        %v2539 = vpack.c.bf16 %v2426, %v2424
        %v2540 = vpack.c.bf16 %v2431, %v2429
        %v2541 = vpack.c.bf16 %v2436, %v2434
        %v2542 = vpack.c.bf16 %v2441, %v2439
        %v2543 = vpack.c.bf16 %v2446, %v2444
        %v2544 = vpack.c.bf16 %v2451, %v2449
        %v2545 = vpack.c.bf16 %v2456, %v2454
        %v2546 = vpack.c.bf16 %v2461, %v2459
        %v2547 = vpack.c.bf16 %v2466, %v2464
        %v2548 = vpack.c.bf16 %v2471, %v2469
        %v2549 = vpack.c.bf16 %v2476, %v2474
        %v2550 = vpack.c.bf16 %v2481, %v2479
        %v2551 = vpack.c.bf16 %v2486, %v2484
        %v2552 = vpack.c.bf16 %v2491, %v2489
        %v2553 = vpack.c.bf16 %v2496, %v2494
        %v2554 = vpack.c.bf16 %v2501, %v2499
        %v2555 = vpack.c.bf16 %v2506, %v2504
        %v2556 = vpack.c.bf16 %v2511, %v2509
        %v2557 = vpack.c.bf16 %v2516, %v2514
        %v2558 = vpack.c.bf16 %v2521, %v2519
        %v2559 = vpack.c.bf16 %v2526, %v2524
        %v2560 = vld [vmem:[%s9] sm:$0xf]
        %v2561 = vld [vmem:[%s9 + $0x4] sm:$0xf]
        %v2562 = vld [vmem:[%s9 + $0x8] sm:$0xf]
        %v2563 = vld [vmem:[%s9 + $0xc] sm:$0xf]
        %v2564 = vld [vmem:[%s9 + $0x10] sm:$0xf]
        %v2565 = vld [vmem:[%s9 + $0x14] sm:$0xf]
        %v2566 = vld [vmem:[%s9 + $0x18] sm:$0xf]
        %v2567 = vld [vmem:[%s9 + $0x1c] sm:$0xf]
        %v2568 = vld [vmem:[%s9 + $0x20] sm:$0xf]
        %v2569 = vld [vmem:[%s9 + $0x24] sm:$0xf]
        %v2570 = vld [vmem:[%s9 + $0x28] sm:$0xf]
        %v2571 = vld [vmem:[%s9 + $0x2c] sm:$0xf]
        %v2572 = vld [vmem:[%s9 + $0x30] sm:$0xf]
        %v2573 = vld [vmem:[%s9 + $0x34] sm:$0xf]
        %v2574 = vld [vmem:[%s9 + $0x38] sm:$0xf]
        %v2575 = vld [vmem:[%s9 + $0x3c] sm:$0xf]
        %v2576 = vpack.c.bf16 %v1369, %v1368
        %v2577 = vpack.c.bf16 %v1371, %v1370
        %v2578 = vpack.c.bf16 %v1373, %v1372
        %v2579 = vpack.c.bf16 %v1375, %v1374
        %v2580 = vpack.c.bf16 %v1377, %v1376
        %v2581 = vpack.c.bf16 %v1379, %v1378
        %v2582 = vpack.c.bf16 %v1381, %v1380
        %v2583 = vpack.c.bf16 %v1383, %v1382
        %v2584 = vpack.c.bf16 %v1385, %v1384
        %v2585 = vpack.c.bf16 %v1387, %v1386
        %v2586 = vpack.c.bf16 %v1389, %v1388
        %v2587 = vpack.c.bf16 %v1391, %v1390
        %v2588 = vpack.c.bf16 %v1393, %v1392
        %v2589 = vpack.c.bf16 %v1395, %v1394
        %v2590 = vpack.c.bf16 %v1397, %v1396
        %v2591 = vpack.c.bf16 %v1399, %v1398
        %v2592 = vpack.c.bf16 %v1401, %v1400
        %v2593 = vpack.c.bf16 %v1403, %v1402
        %v2594 = vpack.c.bf16 %v1405, %v1404
        %v2595 = vpack.c.bf16 %v1407, %v1406
        %v2596 = vpack.c.bf16 %v1409, %v1408
        %v2597 = vpack.c.bf16 %v1411, %v1410
        %v2598 = vpack.c.bf16 %v1413, %v1412
        %v2599 = vpack.c.bf16 %v1415, %v1414
        %v2600 = vpack.c.bf16 %v1417, %v1416
        %v2601 = vpack.c.bf16 %v1419, %v1418
        %v2602 = vpack.c.bf16 %v1421, %v1420
        %v2603 = vpack.c.bf16 %v1423, %v1422
        %v2604 = vpack.c.bf16 %v1425, %v1424
        %v2605 = vpack.c.bf16 %v1427, %v1426
        %v2606 = vpack.c.bf16 %v1429, %v1428
        %v2607 = vpack.c.bf16 %v1431, %v1430
        %v2608 = vld [vmem:[%s10] sm:$0xf]
        %v2609 = vld [vmem:[%s10 + $0x4] sm:$0xf]
        %v2610 = vld [vmem:[%s10 + $0x8] sm:$0xf]
        %v2611 = vld [vmem:[%s10 + $0xc] sm:$0xf]
        %v2612 = vld [vmem:[%s10 + $0x10] sm:$0xf]
        %v2613 = vld [vmem:[%s10 + $0x14] sm:$0xf]
        %v2614 = vld [vmem:[%s10 + $0x18] sm:$0xf]
        %v2615 = vld [vmem:[%s10 + $0x1c] sm:$0xf]
        %v2616 = vld [vmem:[%s10 + $0x20] sm:$0xf]
        %v2617 = vld [vmem:[%s10 + $0x24] sm:$0xf]
        %v2618 = vld [vmem:[%s10 + $0x28] sm:$0xf]
        %v2619 = vld [vmem:[%s10 + $0x2c] sm:$0xf]
        %v2620 = vld [vmem:[%s10 + $0x30] sm:$0xf]
        %v2621 = vld [vmem:[%s10 + $0x34] sm:$0xf]
        %v2622 = vld [vmem:[%s10 + $0x38] sm:$0xf]
        %v2623 = vld [vmem:[%s10 + $0x3c] sm:$0xf]
        %v2640 = vunpack.c.l.b16 %v2608
        %v2641 = vunpack.c.l.b16 %v2609
        %v2642 = vunpack.c.l.b16 %v2610
        %v2643 = vunpack.c.l.b16 %v2611
        %v2644 = vunpack.c.l.b16 %v2612
        %v2645 = vunpack.c.l.b16 %v2613
        %v2646 = vunpack.c.l.b16 %v2614
        %v2647 = vunpack.c.l.b16 %v2615
        %v2648 = vunpack.c.l.b16 %v2616
        %v2649 = vunpack.c.l.b16 %v2617
        %v2650 = vunpack.c.l.b16 %v2618
        %v2651 = vunpack.c.l.b16 %v2619
        %v2652 = vunpack.c.l.b16 %v2620
        %v2653 = vunpack.c.l.b16 %v2621
        %v2654 = vunpack.c.l.b16 %v2622
        %v2655 = vunpack.c.l.b16 %v2623
        %v2656 = vpack.c.b16 %v2641, %v2640
        %v2657 = vpack.c.b16 %v2643, %v2642
        %v2658 = vpack.c.b16 %v2645, %v2644
        %v2659 = vpack.c.b16 %v2647, %v2646
        %v2660 = vpack.c.b16 %v2649, %v2648
        %v2661 = vpack.c.b16 %v2651, %v2650
        %v2662 = vpack.c.b16 %v2653, %v2652
        %v2663 = vpack.c.b16 %v2655, %v2654
        %2672 = vmatpush.bf16.msra.mxu0 %v2663
        %2673 = vmatpush.bf16.msra.mxu0 %v2662
        %2674 = vmatpush.bf16.msra.mxu0 %v2661
        %2675 = vmatpush.bf16.msra.mxu0 %v2660
        %2676 = vmatpush.bf16.msra.mxu0 %v2659
        %2677 = vmatpush.bf16.msra.mxu0 %v2658
        %2678 = vmatpush.bf16.msra.mxu0 %v2657
        %2679 = vmatpush.bf16.msra.mxu0 %v2656
        %2680 = vmatmul.bf16.gmra.mxu0 %v2576
        %v2681 = vpop.f32.mrf.mxu0
        %v2682 = vadd.f32 0.0, %v2681
        %v2683 = vpop.f32.mrf.mxu0
        %v2684 = vadd.f32 0.0, %v2683
        %2685 = vmatmul.bf16.gmra.mxu0 %v2577
        %v2686 = vpop.f32.mrf.mxu0
        %v2687 = vadd.f32 0.0, %v2686
        %v2688 = vpop.f32.mrf.mxu0
        %v2689 = vadd.f32 0.0, %v2688
        %2690 = vmatmul.bf16.gmra.mxu0 %v2578
        %v2691 = vpop.f32.mrf.mxu0
        %v2692 = vadd.f32 0.0, %v2691
        %v2693 = vpop.f32.mrf.mxu0
        %v2694 = vadd.f32 0.0, %v2693
        %2695 = vmatmul.bf16.gmra.mxu0 %v2579
        %v2696 = vpop.f32.mrf.mxu0
        %v2697 = vadd.f32 0.0, %v2696
        %v2698 = vpop.f32.mrf.mxu0
        %v2699 = vadd.f32 0.0, %v2698
        %2700 = vmatmul.bf16.gmra.mxu0 %v2580
        %v2701 = vpop.f32.mrf.mxu0
        %v2702 = vadd.f32 0.0, %v2701
        %v2703 = vpop.f32.mrf.mxu0
        %v2704 = vadd.f32 0.0, %v2703
        %2705 = vmatmul.bf16.gmra.mxu0 %v2581
        %v2706 = vpop.f32.mrf.mxu0
        %v2707 = vadd.f32 0.0, %v2706
        %v2708 = vpop.f32.mrf.mxu0
        %v2709 = vadd.f32 0.0, %v2708
        %2710 = vmatmul.bf16.gmra.mxu0 %v2582
        %v2711 = vpop.f32.mrf.mxu0
        %v2712 = vadd.f32 0.0, %v2711
        %v2713 = vpop.f32.mrf.mxu0
        %v2714 = vadd.f32 0.0, %v2713
        %2715 = vmatmul.bf16.gmra.mxu0 %v2583
        %v2716 = vpop.f32.mrf.mxu0
        %v2717 = vadd.f32 0.0, %v2716
        %v2718 = vpop.f32.mrf.mxu0
        %v2719 = vadd.f32 0.0, %v2718
        %2720 = vmatmul.bf16.gmra.mxu0 %v2584
        %v2721 = vpop.f32.mrf.mxu0
        %v2722 = vadd.f32 0.0, %v2721
        %v2723 = vpop.f32.mrf.mxu0
        %v2724 = vadd.f32 0.0, %v2723
        %2725 = vmatmul.bf16.gmra.mxu0 %v2585
        %v2726 = vpop.f32.mrf.mxu0
        %v2727 = vadd.f32 0.0, %v2726
        %v2728 = vpop.f32.mrf.mxu0
        %v2729 = vadd.f32 0.0, %v2728
        %2730 = vmatmul.bf16.gmra.mxu0 %v2586
        %v2731 = vpop.f32.mrf.mxu0
        %v2732 = vadd.f32 0.0, %v2731
        %v2733 = vpop.f32.mrf.mxu0
        %v2734 = vadd.f32 0.0, %v2733
        %2735 = vmatmul.bf16.gmra.mxu0 %v2587
        %v2736 = vpop.f32.mrf.mxu0
        %v2737 = vadd.f32 0.0, %v2736
        %v2738 = vpop.f32.mrf.mxu0
        %v2739 = vadd.f32 0.0, %v2738
        %2740 = vmatmul.bf16.gmra.mxu0 %v2588
        %v2741 = vpop.f32.mrf.mxu0
        %v2742 = vadd.f32 0.0, %v2741
        %v2743 = vpop.f32.mrf.mxu0
        %v2744 = vadd.f32 0.0, %v2743
        %2745 = vmatmul.bf16.gmra.mxu0 %v2589
        %v2746 = vpop.f32.mrf.mxu0
        %v2747 = vadd.f32 0.0, %v2746
        %v2748 = vpop.f32.mrf.mxu0
        %v2749 = vadd.f32 0.0, %v2748
        %2750 = vmatmul.bf16.gmra.mxu0 %v2590
        %v2751 = vpop.f32.mrf.mxu0
        %v2752 = vadd.f32 0.0, %v2751
        %v2753 = vpop.f32.mrf.mxu0
        %v2754 = vadd.f32 0.0, %v2753
        %2755 = vmatmul.bf16.gmra.mxu0 %v2591
        %v2756 = vpop.f32.mrf.mxu0
        %v2757 = vadd.f32 0.0, %v2756
        %v2758 = vpop.f32.mrf.mxu0
        %v2759 = vadd.f32 0.0, %v2758
        %2760 = vmatmul.bf16.gmra.mxu0 %v2592
        %v2761 = vpop.f32.mrf.mxu0
        %v2762 = vadd.f32 0.0, %v2761
        %v2763 = vpop.f32.mrf.mxu0
        %v2764 = vadd.f32 0.0, %v2763
        %2765 = vmatmul.bf16.gmra.mxu0 %v2593
        %v2766 = vpop.f32.mrf.mxu0
        %v2767 = vadd.f32 0.0, %v2766
        %v2768 = vpop.f32.mrf.mxu0
        %v2769 = vadd.f32 0.0, %v2768
        %2770 = vmatmul.bf16.gmra.mxu0 %v2594
        %v2771 = vpop.f32.mrf.mxu0
        %v2772 = vadd.f32 0.0, %v2771
        %v2773 = vpop.f32.mrf.mxu0
        %v2774 = vadd.f32 0.0, %v2773
        %2775 = vmatmul.bf16.gmra.mxu0 %v2595
        %v2776 = vpop.f32.mrf.mxu0
        %v2777 = vadd.f32 0.0, %v2776
        %v2778 = vpop.f32.mrf.mxu0
        %v2779 = vadd.f32 0.0, %v2778
        %2780 = vmatmul.bf16.gmra.mxu0 %v2596
        %v2781 = vpop.f32.mrf.mxu0
        %v2782 = vadd.f32 0.0, %v2781
        %v2783 = vpop.f32.mrf.mxu0
        %v2784 = vadd.f32 0.0, %v2783
        %2785 = vmatmul.bf16.gmra.mxu0 %v2597
        %v2786 = vpop.f32.mrf.mxu0
        %v2787 = vadd.f32 0.0, %v2786
        %v2788 = vpop.f32.mrf.mxu0
        %v2789 = vadd.f32 0.0, %v2788
        %2790 = vmatmul.bf16.gmra.mxu0 %v2598
        %v2791 = vpop.f32.mrf.mxu0
        %v2792 = vadd.f32 0.0, %v2791
        %v2793 = vpop.f32.mrf.mxu0
        %v2794 = vadd.f32 0.0, %v2793
        %2795 = vmatmul.bf16.gmra.mxu0 %v2599
        %v2796 = vpop.f32.mrf.mxu0
        %v2797 = vadd.f32 0.0, %v2796
        %v2798 = vpop.f32.mrf.mxu0
        %v2799 = vadd.f32 0.0, %v2798
        %2800 = vmatmul.bf16.gmra.mxu0 %v2600
        %v2801 = vpop.f32.mrf.mxu0
        %v2802 = vadd.f32 0.0, %v2801
        %v2803 = vpop.f32.mrf.mxu0
        %v2804 = vadd.f32 0.0, %v2803
        %2805 = vmatmul.bf16.gmra.mxu0 %v2601
        %v2806 = vpop.f32.mrf.mxu0
        %v2807 = vadd.f32 0.0, %v2806
        %v2808 = vpop.f32.mrf.mxu0
        %v2809 = vadd.f32 0.0, %v2808
        %2810 = vmatmul.bf16.gmra.mxu0 %v2602
        %v2811 = vpop.f32.mrf.mxu0
        %v2812 = vadd.f32 0.0, %v2811
        %v2813 = vpop.f32.mrf.mxu0
        %v2814 = vadd.f32 0.0, %v2813
        %2815 = vmatmul.bf16.gmra.mxu0 %v2603
        %v2816 = vpop.f32.mrf.mxu0
        %v2817 = vadd.f32 0.0, %v2816
        %v2818 = vpop.f32.mrf.mxu0
        %v2819 = vadd.f32 0.0, %v2818
        %2820 = vmatmul.bf16.gmra.mxu0 %v2604
        %v2821 = vpop.f32.mrf.mxu0
        %v2822 = vadd.f32 0.0, %v2821
        %v2823 = vpop.f32.mrf.mxu0
        %v2824 = vadd.f32 0.0, %v2823
        %2825 = vmatmul.bf16.gmra.mxu0 %v2605
        %v2826 = vpop.f32.mrf.mxu0
        %v2827 = vadd.f32 0.0, %v2826
        %v2828 = vpop.f32.mrf.mxu0
        %v2829 = vadd.f32 0.0, %v2828
        %2830 = vmatmul.bf16.gmra.mxu0 %v2606
        %v2831 = vpop.f32.mrf.mxu0
        %v2832 = vadd.f32 0.0, %v2831
        %v2833 = vpop.f32.mrf.mxu0
        %v2834 = vadd.f32 0.0, %v2833
        %2835 = vmatmul.bf16.gmra.mxu0 %v2607
        %v2836 = vpop.f32.mrf.mxu0
        %v2837 = vadd.f32 0.0, %v2836
        %v2838 = vpop.f32.mrf.mxu0
        %v2839 = vadd.f32 0.0, %v2838
        %2840 = vdwg.mxu0
        %v2857 = vunpack.c.l.b16 %v2560
        %v2858 = vunpack.c.l.b16 %v2561
        %v2859 = vunpack.c.l.b16 %v2562
        %v2860 = vunpack.c.l.b16 %v2563
        %v2861 = vunpack.c.l.b16 %v2564
        %v2862 = vunpack.c.l.b16 %v2565
        %v2863 = vunpack.c.l.b16 %v2566
        %v2864 = vunpack.c.l.b16 %v2567
        %v2865 = vunpack.c.l.b16 %v2568
        %v2866 = vunpack.c.l.b16 %v2569
        %v2867 = vunpack.c.l.b16 %v2570
        %v2868 = vunpack.c.l.b16 %v2571
        %v2869 = vunpack.c.l.b16 %v2572
        %v2870 = vunpack.c.l.b16 %v2573
        %v2871 = vunpack.c.l.b16 %v2574
        %v2872 = vunpack.c.l.b16 %v2575
        %v2873 = vpack.c.b16 %v2858, %v2857
        %v2874 = vpack.c.b16 %v2860, %v2859
        %v2875 = vpack.c.b16 %v2862, %v2861
        %v2876 = vpack.c.b16 %v2864, %v2863
        %v2877 = vpack.c.b16 %v2866, %v2865
        %v2878 = vpack.c.b16 %v2868, %v2867
        %v2879 = vpack.c.b16 %v2870, %v2869
        %v2880 = vpack.c.b16 %v2872, %v2871
        %2889 = vmatpush.bf16.msra.mxu0 %v2880
        %2890 = vmatpush.bf16.msra.mxu0 %v2879
        %2891 = vmatpush.bf16.msra.mxu0 %v2878
        %2892 = vmatpush.bf16.msra.mxu0 %v2877
        %2893 = vmatpush.bf16.msra.mxu0 %v2876
        %2894 = vmatpush.bf16.msra.mxu0 %v2875
        %2895 = vmatpush.bf16.msra.mxu0 %v2874
        %2896 = vmatpush.bf16.msra.mxu0 %v2873
        %2897 = vmatmul.bf16.gmra.mxu0 %v2528
        %v2898 = vpop.f32.mrf.mxu0
        %v2899 = vadd.f32 %v2682, %v2898
        %v2900 = vpop.f32.mrf.mxu0
        %v2901 = vadd.f32 %v2684, %v2900
        %2902 = vmatmul.bf16.gmra.mxu0 %v2529
        %v2903 = vpop.f32.mrf.mxu0
        %v2904 = vadd.f32 %v2687, %v2903
        %v2905 = vpop.f32.mrf.mxu0
        %v2906 = vadd.f32 %v2689, %v2905
        %2907 = vmatmul.bf16.gmra.mxu0 %v2530
        %v2908 = vpop.f32.mrf.mxu0
        %v2909 = vadd.f32 %v2692, %v2908
        %v2910 = vpop.f32.mrf.mxu0
        %v2911 = vadd.f32 %v2694, %v2910
        %2912 = vmatmul.bf16.gmra.mxu0 %v2531
        %v2913 = vpop.f32.mrf.mxu0
        %v2914 = vadd.f32 %v2697, %v2913
        %v2915 = vpop.f32.mrf.mxu0
        %v2916 = vadd.f32 %v2699, %v2915
        %2917 = vmatmul.bf16.gmra.mxu0 %v2532
        %v2918 = vpop.f32.mrf.mxu0
        %v2919 = vadd.f32 %v2702, %v2918
        %v2920 = vpop.f32.mrf.mxu0
        %v2921 = vadd.f32 %v2704, %v2920
        %2922 = vmatmul.bf16.gmra.mxu0 %v2533
        %v2923 = vpop.f32.mrf.mxu0
        %v2924 = vadd.f32 %v2707, %v2923
        %v2925 = vpop.f32.mrf.mxu0
        %v2926 = vadd.f32 %v2709, %v2925
        %2927 = vmatmul.bf16.gmra.mxu0 %v2534
        %v2928 = vpop.f32.mrf.mxu0
        %v2929 = vadd.f32 %v2712, %v2928
        %v2930 = vpop.f32.mrf.mxu0
        %v2931 = vadd.f32 %v2714, %v2930
        %2932 = vmatmul.bf16.gmra.mxu0 %v2535
        %v2933 = vpop.f32.mrf.mxu0
        %v2934 = vadd.f32 %v2717, %v2933
        %v2935 = vpop.f32.mrf.mxu0
        %v2936 = vadd.f32 %v2719, %v2935
        %2937 = vmatmul.bf16.gmra.mxu0 %v2536
        %v2938 = vpop.f32.mrf.mxu0
        %v2939 = vadd.f32 %v2722, %v2938
        %v2940 = vpop.f32.mrf.mxu0
        %v2941 = vadd.f32 %v2724, %v2940
        %2942 = vmatmul.bf16.gmra.mxu0 %v2537
        %v2943 = vpop.f32.mrf.mxu0
        %v2944 = vadd.f32 %v2727, %v2943
        %v2945 = vpop.f32.mrf.mxu0
        %v2946 = vadd.f32 %v2729, %v2945
        %2947 = vmatmul.bf16.gmra.mxu0 %v2538
        %v2948 = vpop.f32.mrf.mxu0
        %v2949 = vadd.f32 %v2732, %v2948
        %v2950 = vpop.f32.mrf.mxu0
        %v2951 = vadd.f32 %v2734, %v2950
        %2952 = vmatmul.bf16.gmra.mxu0 %v2539
        %v2953 = vpop.f32.mrf.mxu0
        %v2954 = vadd.f32 %v2737, %v2953
        %v2955 = vpop.f32.mrf.mxu0
        %v2956 = vadd.f32 %v2739, %v2955
        %2957 = vmatmul.bf16.gmra.mxu0 %v2540
        %v2958 = vpop.f32.mrf.mxu0
        %v2959 = vadd.f32 %v2742, %v2958
        %v2960 = vpop.f32.mrf.mxu0
        %v2961 = vadd.f32 %v2744, %v2960
        %2962 = vmatmul.bf16.gmra.mxu0 %v2541
        %v2963 = vpop.f32.mrf.mxu0
        %v2964 = vadd.f32 %v2747, %v2963
        %v2965 = vpop.f32.mrf.mxu0
        %v2966 = vadd.f32 %v2749, %v2965
        %2967 = vmatmul.bf16.gmra.mxu0 %v2542
        %v2968 = vpop.f32.mrf.mxu0
        %v2969 = vadd.f32 %v2752, %v2968
        %v2970 = vpop.f32.mrf.mxu0
        %v2971 = vadd.f32 %v2754, %v2970
        %2972 = vmatmul.bf16.gmra.mxu0 %v2543
        %v2973 = vpop.f32.mrf.mxu0
        %v2974 = vadd.f32 %v2757, %v2973
        %v2975 = vpop.f32.mrf.mxu0
        %v2976 = vadd.f32 %v2759, %v2975
        %2977 = vmatmul.bf16.gmra.mxu0 %v2544
        %v2978 = vpop.f32.mrf.mxu0
        %v2979 = vadd.f32 %v2762, %v2978
        %v2980 = vpop.f32.mrf.mxu0
        %v2981 = vadd.f32 %v2764, %v2980
        %2982 = vmatmul.bf16.gmra.mxu0 %v2545
        %v2983 = vpop.f32.mrf.mxu0
        %v2984 = vadd.f32 %v2767, %v2983
        %v2985 = vpop.f32.mrf.mxu0
        %v2986 = vadd.f32 %v2769, %v2985
        %2987 = vmatmul.bf16.gmra.mxu0 %v2546
        %v2988 = vpop.f32.mrf.mxu0
        %v2989 = vadd.f32 %v2772, %v2988
        %v2990 = vpop.f32.mrf.mxu0
        %v2991 = vadd.f32 %v2774, %v2990
        %2992 = vmatmul.bf16.gmra.mxu0 %v2547
        %v2993 = vpop.f32.mrf.mxu0
        %v2994 = vadd.f32 %v2777, %v2993
        %v2995 = vpop.f32.mrf.mxu0
        %v2996 = vadd.f32 %v2779, %v2995
        %2997 = vmatmul.bf16.gmra.mxu0 %v2548
        %v2998 = vpop.f32.mrf.mxu0
        %v2999 = vadd.f32 %v2782, %v2998
        %v3000 = vpop.f32.mrf.mxu0
        %v3001 = vadd.f32 %v2784, %v3000
        %3002 = vmatmul.bf16.gmra.mxu0 %v2549
        %v3003 = vpop.f32.mrf.mxu0
        %v3004 = vadd.f32 %v2787, %v3003
        %v3005 = vpop.f32.mrf.mxu0
        %v3006 = vadd.f32 %v2789, %v3005
        %3007 = vmatmul.bf16.gmra.mxu0 %v2550
        %v3008 = vpop.f32.mrf.mxu0
        %v3009 = vadd.f32 %v2792, %v3008
        %v3010 = vpop.f32.mrf.mxu0
        %v3011 = vadd.f32 %v2794, %v3010
        %3012 = vmatmul.bf16.gmra.mxu0 %v2551
        %v3013 = vpop.f32.mrf.mxu0
        %v3014 = vadd.f32 %v2797, %v3013
        %v3015 = vpop.f32.mrf.mxu0
        %v3016 = vadd.f32 %v2799, %v3015
        %3017 = vmatmul.bf16.gmra.mxu0 %v2552
        %v3018 = vpop.f32.mrf.mxu0
        %v3019 = vadd.f32 %v2802, %v3018
        %v3020 = vpop.f32.mrf.mxu0
        %v3021 = vadd.f32 %v2804, %v3020
        %3022 = vmatmul.bf16.gmra.mxu0 %v2553
        %v3023 = vpop.f32.mrf.mxu0
        %v3024 = vadd.f32 %v2807, %v3023
        %v3025 = vpop.f32.mrf.mxu0
        %v3026 = vadd.f32 %v2809, %v3025
        %3027 = vmatmul.bf16.gmra.mxu0 %v2554
        %v3028 = vpop.f32.mrf.mxu0
        %v3029 = vadd.f32 %v2812, %v3028
        %v3030 = vpop.f32.mrf.mxu0
        %v3031 = vadd.f32 %v2814, %v3030
        %3032 = vmatmul.bf16.gmra.mxu0 %v2555
        %v3033 = vpop.f32.mrf.mxu0
        %v3034 = vadd.f32 %v2817, %v3033
        %v3035 = vpop.f32.mrf.mxu0
        %v3036 = vadd.f32 %v2819, %v3035
        %3037 = vmatmul.bf16.gmra.mxu0 %v2556
        %v3038 = vpop.f32.mrf.mxu0
        %v3039 = vadd.f32 %v2822, %v3038
        %v3040 = vpop.f32.mrf.mxu0
        %v3041 = vadd.f32 %v2824, %v3040
        %3042 = vmatmul.bf16.gmra.mxu0 %v2557
        %v3043 = vpop.f32.mrf.mxu0
        %v3044 = vadd.f32 %v2827, %v3043
        %v3045 = vpop.f32.mrf.mxu0
        %v3046 = vadd.f32 %v2829, %v3045
        %3047 = vmatmul.bf16.gmra.mxu0 %v2558
        %v3048 = vpop.f32.mrf.mxu0
        %v3049 = vadd.f32 %v2832, %v3048
        %v3050 = vpop.f32.mrf.mxu0
        %v3051 = vadd.f32 %v2834, %v3050
        %3052 = vmatmul.bf16.gmra.mxu0 %v2559
        %v3053 = vpop.f32.mrf.mxu0
        %v3054 = vadd.f32 %v2837, %v3053
        %v3055 = vpop.f32.mrf.mxu0
        %v3056 = vadd.f32 %v2839, %v3055
        %3057 = vdwg.mxu0
        %v3058 = vld [vmem:[%s11] sm:$0x1]
        %v3060 = vperm.slane %v3058, 0
        %v3062 = vadd.f32 %v2899, %v3060
        %v3063 = vadd.f32 %v2901, %v3060
        %v3064 = vadd.f32 %v2904, %v3060
        %v3065 = vadd.f32 %v2906, %v3060
        %v3066 = vadd.f32 %v2909, %v3060
        %v3067 = vadd.f32 %v2911, %v3060
        %v3068 = vadd.f32 %v2914, %v3060
        %v3069 = vadd.f32 %v2916, %v3060
        %v3070 = vadd.f32 %v2919, %v3060
        %v3071 = vadd.f32 %v2921, %v3060
        %v3072 = vadd.f32 %v2924, %v3060
        %v3073 = vadd.f32 %v2926, %v3060
        %v3074 = vadd.f32 %v2929, %v3060
        %v3075 = vadd.f32 %v2931, %v3060
        %v3076 = vadd.f32 %v2934, %v3060
        %v3077 = vadd.f32 %v2936, %v3060
        %v3078 = vadd.f32 %v2939, %v3060
        %v3079 = vadd.f32 %v2941, %v3060
        %v3080 = vadd.f32 %v2944, %v3060
        %v3081 = vadd.f32 %v2946, %v3060
        %v3082 = vadd.f32 %v2949, %v3060
        %v3083 = vadd.f32 %v2951, %v3060
        %v3084 = vadd.f32 %v2954, %v3060
        %v3085 = vadd.f32 %v2956, %v3060
        %v3086 = vadd.f32 %v2959, %v3060
        %v3087 = vadd.f32 %v2961, %v3060
        %v3088 = vadd.f32 %v2964, %v3060
        %v3089 = vadd.f32 %v2966, %v3060
        %v3090 = vadd.f32 %v2969, %v3060
        %v3091 = vadd.f32 %v2971, %v3060
        %v3092 = vadd.f32 %v2974, %v3060
        %v3093 = vadd.f32 %v2976, %v3060
        %v3094 = vadd.f32 %v2979, %v3060
        %v3095 = vadd.f32 %v2981, %v3060
        %v3096 = vadd.f32 %v2984, %v3060
        %v3097 = vadd.f32 %v2986, %v3060
        %v3098 = vadd.f32 %v2989, %v3060
        %v3099 = vadd.f32 %v2991, %v3060
        %v3100 = vadd.f32 %v2994, %v3060
        %v3101 = vadd.f32 %v2996, %v3060
        %v3102 = vadd.f32 %v2999, %v3060
        %v3103 = vadd.f32 %v3001, %v3060
        %v3104 = vadd.f32 %v3004, %v3060
        %v3105 = vadd.f32 %v3006, %v3060
        %v3106 = vadd.f32 %v3009, %v3060
        %v3107 = vadd.f32 %v3011, %v3060
        %v3108 = vadd.f32 %v3014, %v3060
        %v3109 = vadd.f32 %v3016, %v3060
        %v3110 = vadd.f32 %v3019, %v3060
        %v3111 = vadd.f32 %v3021, %v3060
        %v3112 = vadd.f32 %v3024, %v3060
        %v3113 = vadd.f32 %v3026, %v3060
        %v3114 = vadd.f32 %v3029, %v3060
        %v3115 = vadd.f32 %v3031, %v3060
        %v3116 = vadd.f32 %v3034, %v3060
        %v3117 = vadd.f32 %v3036, %v3060
        %v3118 = vadd.f32 %v3039, %v3060
        %v3119 = vadd.f32 %v3041, %v3060
        %v3120 = vadd.f32 %v3044, %v3060
        %v3121 = vadd.f32 %v3046, %v3060
        %v3122 = vadd.f32 %v3049, %v3060
        %v3123 = vadd.f32 %v3051, %v3060
        %v3124 = vadd.f32 %v3054, %v3060
        %v3125 = vadd.f32 %v3056, %v3060
        %v3126 = vmax.f32 %v3062, 0.0
        %v3127 = vmax.f32 %v3063, 0.0
        %v3128 = vmax.f32 %v3064, 0.0
        %v3129 = vmax.f32 %v3065, 0.0
        %v3130 = vmax.f32 %v3066, 0.0
        %v3131 = vmax.f32 %v3067, 0.0
        %v3132 = vmax.f32 %v3068, 0.0
        %v3133 = vmax.f32 %v3069, 0.0
        %v3134 = vmax.f32 %v3070, 0.0
        %v3135 = vmax.f32 %v3071, 0.0
        %v3136 = vmax.f32 %v3072, 0.0
        %v3137 = vmax.f32 %v3073, 0.0
        %v3138 = vmax.f32 %v3074, 0.0
        %v3139 = vmax.f32 %v3075, 0.0
        %v3140 = vmax.f32 %v3076, 0.0
        %v3141 = vmax.f32 %v3077, 0.0
        %v3142 = vmax.f32 %v3078, 0.0
        %v3143 = vmax.f32 %v3079, 0.0
        %v3144 = vmax.f32 %v3080, 0.0
        %v3145 = vmax.f32 %v3081, 0.0
        %v3146 = vmax.f32 %v3082, 0.0
        %v3147 = vmax.f32 %v3083, 0.0
        %v3148 = vmax.f32 %v3084, 0.0
        %v3149 = vmax.f32 %v3085, 0.0
        %v3150 = vmax.f32 %v3086, 0.0
        %v3151 = vmax.f32 %v3087, 0.0
        %v3152 = vmax.f32 %v3088, 0.0
        %v3153 = vmax.f32 %v3089, 0.0
        %v3154 = vmax.f32 %v3090, 0.0
        %v3155 = vmax.f32 %v3091, 0.0
        %v3156 = vmax.f32 %v3092, 0.0
        %v3157 = vmax.f32 %v3093, 0.0
        %v3158 = vmax.f32 %v3094, 0.0
        %v3159 = vmax.f32 %v3095, 0.0
        %v3160 = vmax.f32 %v3096, 0.0
        %v3161 = vmax.f32 %v3097, 0.0
        %v3162 = vmax.f32 %v3098, 0.0
        %v3163 = vmax.f32 %v3099, 0.0
        %v3164 = vmax.f32 %v3100, 0.0
        %v3165 = vmax.f32 %v3101, 0.0
        %v3166 = vmax.f32 %v3102, 0.0
        %v3167 = vmax.f32 %v3103, 0.0
        %v3168 = vmax.f32 %v3104, 0.0
        %v3169 = vmax.f32 %v3105, 0.0
        %v3170 = vmax.f32 %v3106, 0.0
        %v3171 = vmax.f32 %v3107, 0.0
        %v3172 = vmax.f32 %v3108, 0.0
        %v3173 = vmax.f32 %v3109, 0.0
        %v3174 = vmax.f32 %v3110, 0.0
        %v3175 = vmax.f32 %v3111, 0.0
        %v3176 = vmax.f32 %v3112, 0.0
        %v3177 = vmax.f32 %v3113, 0.0
        %v3178 = vmax.f32 %v3114, 0.0
        %v3179 = vmax.f32 %v3115, 0.0
        %v3180 = vmax.f32 %v3116, 0.0
        %v3181 = vmax.f32 %v3117, 0.0
        %v3182 = vmax.f32 %v3118, 0.0
        %v3183 = vmax.f32 %v3119, 0.0
        %v3184 = vmax.f32 %v3120, 0.0
        %v3185 = vmax.f32 %v3121, 0.0
        %v3186 = vmax.f32 %v3122, 0.0
        %v3187 = vmax.f32 %v3123, 0.0
        %v3188 = vmax.f32 %v3124, 0.0
        %v3189 = vmax.f32 %v3125, 0.0
        %3190 = vst [vmem:[%s459] sm:$0xff] %v3126
        %3191 = vst [vmem:[%s459 + $0x8] sm:$0xff] %v3127
        %3192 = vst [vmem:[%s459 + $0x10] sm:$0xff] %v3128
        %3193 = vst [vmem:[%s459 + $0x18] sm:$0xff] %v3129
        %3194 = vst [vmem:[%s459 + $0x20] sm:$0xff] %v3130
        %3195 = vst [vmem:[%s459 + $0x28] sm:$0xff] %v3131
        %3196 = vst [vmem:[%s459 + $0x30] sm:$0xff] %v3132
        %3197 = vst [vmem:[%s459 + $0x38] sm:$0xff] %v3133
        %3198 = vst [vmem:[%s459 + $0x40] sm:$0xff] %v3134
        %3199 = vst [vmem:[%s459 + $0x48] sm:$0xff] %v3135
        %3200 = vst [vmem:[%s459 + $0x50] sm:$0xff] %v3136
        %3201 = vst [vmem:[%s459 + $0x58] sm:$0xff] %v3137
        %3202 = vst [vmem:[%s459 + $0x60] sm:$0xff] %v3138
        %3203 = vst [vmem:[%s459 + $0x68] sm:$0xff] %v3139
        %3204 = vst [vmem:[%s459 + $0x70] sm:$0xff] %v3140
        %3205 = vst [vmem:[%s459 + $0x78] sm:$0xff] %v3141
        %3206 = vst [vmem:[%s459 + $0x80] sm:$0xff] %v3142
        %3207 = vst [vmem:[%s459 + $0x88] sm:$0xff] %v3143
        %3208 = vst [vmem:[%s459 + $0x90] sm:$0xff] %v3144
        %3209 = vst [vmem:[%s459 + $0x98] sm:$0xff] %v3145
        %3210 = vst [vmem:[%s459 + $0xa0] sm:$0xff] %v3146
        %3211 = vst [vmem:[%s459 + $0xa8] sm:$0xff] %v3147
        %3212 = vst [vmem:[%s459 + $0xb0] sm:$0xff] %v3148
        %3213 = vst [vmem:[%s459 + $0xb8] sm:$0xff] %v3149
        %3214 = vst [vmem:[%s459 + $0xc0] sm:$0xff] %v3150
        %3215 = vst [vmem:[%s459 + $0xc8] sm:$0xff] %v3151
        %3216 = vst [vmem:[%s459 + $0xd0] sm:$0xff] %v3152
        %3217 = vst [vmem:[%s459 + $0xd8] sm:$0xff] %v3153
        %3218 = vst [vmem:[%s459 + $0xe0] sm:$0xff] %v3154
        %3219 = vst [vmem:[%s459 + $0xe8] sm:$0xff] %v3155
        %3220 = vst [vmem:[%s459 + $0xf0] sm:$0xff] %v3156
        %3221 = vst [vmem:[%s459 + $0xf8] sm:$0xff] %v3157
        %3222 = vst [vmem:[%s459 + $0x100] sm:$0xff] %v3158
        %3223 = vst [vmem:[%s459 + $0x108] sm:$0xff] %v3159
        %3224 = vst [vmem:[%s459 + $0x110] sm:$0xff] %v3160
        %3225 = vst [vmem:[%s459 + $0x118] sm:$0xff] %v3161
        %3226 = vst [vmem:[%s459 + $0x120] sm:$0xff] %v3162
        %3227 = vst [vmem:[%s459 + $0x128] sm:$0xff] %v3163
        %3228 = vst [vmem:[%s459 + $0x130] sm:$0xff] %v3164
        %3229 = vst [vmem:[%s459 + $0x138] sm:$0xff] %v3165
        %3230 = vst [vmem:[%s459 + $0x140] sm:$0xff] %v3166
        %3231 = vst [vmem:[%s459 + $0x148] sm:$0xff] %v3167
        %3232 = vst [vmem:[%s459 + $0x150] sm:$0xff] %v3168
        %3233 = vst [vmem:[%s459 + $0x158] sm:$0xff] %v3169
        %3234 = vst [vmem:[%s459 + $0x160] sm:$0xff] %v3170
        %3235 = vst [vmem:[%s459 + $0x168] sm:$0xff] %v3171
        %3236 = vst [vmem:[%s459 + $0x170] sm:$0xff] %v3172
        %3237 = vst [vmem:[%s459 + $0x178] sm:$0xff] %v3173
        %3238 = vst [vmem:[%s459 + $0x180] sm:$0xff] %v3174
        %3239 = vst [vmem:[%s459 + $0x188] sm:$0xff] %v3175
        %3240 = vst [vmem:[%s459 + $0x190] sm:$0xff] %v3176
        %3241 = vst [vmem:[%s459 + $0x198] sm:$0xff] %v3177
        %3242 = vst [vmem:[%s459 + $0x1a0] sm:$0xff] %v3178
        %3243 = vst [vmem:[%s459 + $0x1a8] sm:$0xff] %v3179
        %3244 = vst [vmem:[%s459 + $0x1b0] sm:$0xff] %v3180
        %3245 = vst [vmem:[%s459 + $0x1b8] sm:$0xff] %v3181
        %3246 = vst [vmem:[%s459 + $0x1c0] sm:$0xff] %v3182
        %3247 = vst [vmem:[%s459 + $0x1c8] sm:$0xff] %v3183
        %3248 = vst [vmem:[%s459 + $0x1d0] sm:$0xff] %v3184
        %3249 = vst [vmem:[%s459 + $0x1d8] sm:$0xff] %v3185
        %3250 = vst [vmem:[%s459 + $0x1e0] sm:$0xff] %v3186
        %3251 = vst [vmem:[%s459 + $0x1e8] sm:$0xff] %v3187
        %3252 = vst [vmem:[%s459 + $0x1f0] sm:$0xff] %v3188
        %3253 = vst [vmem:[%s459 + $0x1f8] sm:$0xff] %v3189
        %s3254 = sand.u32 %s317, 1
        %s3255 = scalar_lea.sflag [#allocation3], %s3254
        %s3256 = sand.u32 %s317, 1
        %s3257 = smul.addr %s3256, 512
        %s3258 = scalar_lea.vmem [#allocation2], %s3257
        // Predicated region
        $region69: #{hgd_forward.3} parent=67 // pred_check
          %p3259 = pneg %p327
        $region70: #{hgd_forward.3} parent=67 // pred_check_branch
          %3261 = sbr.rel (%p3259) target = $region72
        $region71: #{hgd_forward.3} parent=67 // pred_region
          %s3262 = smul.u32 64, %s31
          %3264 = vsyncadd %s3255, 0
          %s3265 = smul.addr %s30, 128
          %s3266 = sadd.s32 %s3262, %s3265
          %s3267 = smul.addr %s3266, 8
          %s3268 = scalar_lea.hbm %s12, %s3267
          %s3269 = sshll.u32 %s3258, 4
          %s3270 = int_to_ptr.vmem [resolvable:$true] %s3269
          %s3271 = sshll.u32 %s3268, 4
          %s3272 = int_to_ptr.hbm [resolvable:$true] %s3271
          %3277 = dma.vmem_to_hbm [thread:$0]  %s3270, 8192, %s3272, %s3255, 128, 128, 8
        $region72: #{hgd_forward.3} parent=67 // pred_fallthru
          _
      $region68: #{hgd_forward.3} parent=5 // pred_fallthru
        _
      %p3278 = scmp.le.s32.totalorder 2, %s21
      // Predicated region
      $region73: #{hgd_forward.3} parent=5 // pred_check
        %p3279 = pneg %p3278
      $region74: #{hgd_forward.3} parent=5 // pred_check_branch
        %3281 = sbr.rel (%p3279) target = $region76
      $region75: #{hgd_forward.3} parent=5 // pred_region
        %s3282 = ssub.s32 %s21, 2
        // Predicated region
        $region77: #{hgd_forward.3} parent=75 // pred_check
          %p3283 = pneg %p333
        $region78: #{hgd_forward.3} parent=75 // pred_check_branch
          %3285 = sbr.rel (%p3283) target = $region80
        $region79: #{hgd_forward.3} parent=75 // pred_region
          %s3286 = sand.u32 %s318, 1
          %s3287 = scalar_lea.sflag [#allocation3], %s3286
          %s3288 = sand.u32 %s318, 1
          %s3289 = smul.addr %s3288, 512
          %s3290 = scalar_lea.vmem [#allocation2], %s3289
          %3292 = dma.done %s3287, 8192
        $region80: #{hgd_forward.3} parent=75 // pred_fallthru
          _
      $region76: #{hgd_forward.3} parent=5 // pred_fallthru
        _
    $region6: #{hgd_forward.3} parent=1 // loop_footer
      %s25 = sadd.s32 1, %s21
    $region7: #{hgd_forward.3} parent=1 // loop_footer_branch
      %20 = sbr.rel target = $region3
    $region8: #{hgd_forward.3} parent=1 // loop_exit
      _
    %3293 = vsyncpa [#allocation3], 1
    %s3294 = scalar_lea.sflag [#allocation3], 1
    %3295 = vsyncpa %s3294, 1

</llo_original>
